<compile_context>
chip_gen: v5e
topology: v5e:2x2
jax: 0.10.0
libtpu: 0.0.40
codegen_flags: <defaults>
</compile_context>

<pallas_src>
import jax
import jax.numpy as jnp
from jax.experimental import pallas as pl
from jax.experimental.pallas import tpu as pltpu


def _silu(x):
    # x * sigmoid(x); tanh form is numerically stable and maps to the EUP.
    return x * (0.5 * jnp.tanh(0.5 * x) + 0.5)


def egcl_kernel(eslab_ref, rowl_ref,
                g_ref, h_ref, coord_ref, nattr_ref,
                w_rad_ref, w_ea_ref, be1_ref, we2_ref, be2_ref,
                wc1_ref, bc1_ref, wc2_ref,
                wn1h_ref, wn1a_ref, wn1n_ref, bn1_ref, wn2_ref, bn2_ref,
                out_ref, acc_ref):
    j = pl.program_id(0)
    n_nodes, hid = h_ref.shape
    tile_e = eslab_ref.shape[0]
    a_e = w_ea_ref.shape[0]
    p_out = out_ref.shape[1]

    @pl.when(j == 0)
    def _init():
        acc_ref[...] = jnp.zeros_like(acc_ref)

    # ---- in-kernel gather of [pre_hh | coord_diff] via one one-hot matmul against the
    #      resident G = [[hr, coord], [hc, -coord]]  ([2N, H+3]).
    row_col = eslab_ref[:, a_e:a_e + 1].astype(jnp.int32)        # [TE,1]
    col_col = eslab_ref[:, a_e + 1:a_e + 2].astype(jnp.int32)    # [TE,1]
    lane2 = jax.lax.broadcasted_iota(jnp.int32, (tile_e, 2 * n_nodes), 1)
    oh2 = jnp.logical_or(lane2 == row_col,
                         lane2 == (col_col + n_nodes)).astype(jnp.float32)  # [TE,2N]
    gathered = jnp.dot(oh2, g_ref[...], preferred_element_type=jnp.float32)  # [TE,H+3]
    pre_hh = gathered[:, :hid]                                   # (h@W_hr)[row]+(h@W_hc)[col]
    cdiff = gathered[:, hid:hid + 3]                             # coord[row]-coord[col]
    radial = jnp.sum(cdiff * cdiff, axis=-1, keepdims=True)      # [TE,1]

    # ---- edge MLP (first-layer h projections hoisted into G above)
    ea = eslab_ref[:, :a_e]
    pre1 = (pre_hh
            + radial * w_rad_ref[...]                            # [TE,1]*[1,H] outer (VPU)
            + jnp.dot(ea.astype(jnp.bfloat16), w_ea_ref[...],
                      preferred_element_type=jnp.float32)
            + be1_ref[...])
    m = _silu(pre1)
    edge_feat = _silu(jnp.dot(m.astype(jnp.bfloat16), we2_ref[...],
                              preferred_element_type=jnp.float32) + be2_ref[...])

    # ---- coord MLP: Linear -> SiLU -> Linear(H->1, no bias) as a VPU mul + lane reduce
    c = _silu(jnp.dot(edge_feat.astype(jnp.bfloat16), wc1_ref[...],
                      preferred_element_type=jnp.float32) + bc1_ref[...])
    scale = jnp.sum(c * wc2_ref[...], axis=-1, keepdims=True)    # [TE,1]
    trans = cdiff * scale                                        # [TE,3]

    # ---- fused segment reductions: one one-hot matmul (f32, exact 0/1 lhs) gives
    #      segment_sum(edge_feat), segment_sum(trans) and the per-node count.
    #      rhs is built in registers and padded to the full 128-lane acc width.
    ones = jnp.ones((tile_e, 1), jnp.float32)
    parts = [edge_feat, trans, ones]
    pad_w = p_out - (hid + 4)
    if pad_w > 0:
        parts.append(jnp.zeros((tile_e, pad_w), jnp.float32))
    rhs = jnp.concatenate(parts, axis=1)                         # [TE, p_out]
    seg_iota = jax.lax.broadcasted_iota(jnp.int32, (n_nodes, tile_e), 0)
    seg = (seg_iota == rowl_ref[...]).astype(jnp.float32)        # [N, TE] one-hot
    acc_ref[...] += jnp.dot(seg, rhs, preferred_element_type=jnp.float32)

    # ---- finalize on the last edge tile: coord update + node MLP + residual
    @pl.when(j == pl.num_programs(0) - 1)
    def _finalize():
        acc = acc_ref[...]
        agg_e = acc[:, :hid]
        agg_t = acc[:, hid:hid + 3]
        count = acc[:, hid + 3:hid + 4]
        coord_out = coord_ref[...] + agg_t / jnp.maximum(count, 1.0)   # coords_agg == 'mean'

        h = h_ref[...]
        # one-off node MLP (split matmuls of concat([h, agg, node_attr])); kept in f32.
        n1 = _silu(jnp.dot(h, wn1h_ref[...], preferred_element_type=jnp.float32)
                   + jnp.dot(agg_e, wn1a_ref[...], preferred_element_type=jnp.float32)
                   + jnp.dot(nattr_ref[...], wn1n_ref[...], preferred_element_type=jnp.float32)
                   + bn1_ref[...])
        n2 = jnp.dot(n1, wn2_ref[...], preferred_element_type=jnp.float32) + bn2_ref[...]

        # lane-dense packed output: single full-width unmasked store
        out_parts = [h + n2, coord_out]                          # residual=True
        out_pad = p_out - (hid + 3)
        if out_pad > 0:
            out_parts.append(jnp.zeros((n_nodes, out_pad), jnp.float32))
        out_ref[...] = jnp.concatenate(out_parts, axis=1)


def egcl_a2a_forward(params, h, edge_index, coord, edge_attr, node_attr, tile_e=512):
    """JAX wrapper mirroring EGCL_A2A.forward."""
    row, col = edge_index
    row = row.astype(jnp.int32)
    col = col.astype(jnp.int32)
    n = h.shape[0]
    hid = params["we2"].shape[0]
    a_e = edge_attr.shape[1]
    e = row.shape[0]

    # ---- hoisted per-node first-layer projections + fused gather matrix G ([2N, H+3])
    hr = h @ params["we1_hr"]                                    # [N,H]
    hc = h @ params["we1_hc"]                                    # [N,H]
    g = jnp.concatenate([jnp.concatenate([hr, coord], axis=1),
                         jnp.concatenate([hc, -coord], axis=1)], axis=0)

    # ---- consolidated per-edge slab [edge_attr | row | col | pad] -> one DMA stream / tile.
    # Padded edges only affect the gather (harmless finite garbage); the scatter one-hot uses
    # the separate lane-major row stream padded with id == n (matches no node).
    e_pad = ((e + tile_e - 1) // tile_e) * tile_e
    pad = e_pad - e
    slab_w = max(8, ((a_e + 2 + 7) // 8) * 8)
    ids = jnp.stack([row, col], axis=1).astype(jnp.float32)      # [E,2]
    slab = jnp.concatenate([edge_attr.astype(jnp.float32), ids], axis=1)
    slab = jnp.pad(slab, ((0, pad), (0, slab_w - (a_e + 2))))    # [E_pad, slab_w]
    row_lane = jnp.pad(row, (0, pad), constant_values=n)[None, :]  # [1, E_pad] lane-major

    # bf16 copies of the hot-path edge/coord MLP weights (activations cast at the dot sites).
    bf = lambda a: a.astype(jnp.bfloat16)
    p_out = ((hid + 3 + 127) // 128) * 128                       # lane-dense output width

    args = (slab, row_lane,
            g, h, coord, node_attr,
            params["we1_rad"], bf(params["we1_ea"]), params["be1"],
            bf(params["we2"]), params["be2"],
            bf(params["wc1"]), params["bc1"], params["wc2"].T,
            params["wn1_h"], params["wn1_a"], params["wn1_n"], params["bn1"],
            params["wn2"], params["bn2"])

    full_spec = lambda a: pl.BlockSpec(a.shape, lambda j: (0, 0))
    in_specs = [pl.BlockSpec((tile_e, slab_w), lambda j: (j, 0)),   # packed edge slab
                pl.BlockSpec((1, tile_e), lambda j: (0, j))] + \
               [full_spec(a) for a in args[2:]]                      # resident per-node/weights

    out = pl.pallas_call(
        egcl_kernel,
        out_shape=jax.ShapeDtypeStruct((n, p_out), jnp.float32),
        grid=(e_pad // tile_e,),
        in_specs=in_specs,
        out_specs=pl.BlockSpec((n, p_out), lambda j: (0, 0)),
        scratch_shapes=[pltpu.VMEM((n, p_out), jnp.float32)],       # lane-dense fused acc
        compiler_params=pltpu.CompilerParams(
            dimension_semantics=("arbitrary",),                     # reduction over edge tiles
            vmem_limit_bytes=32 * 1024 * 1024),                     # ample; usage is < few MiB
    )(*args)

    return out[:, :hid], out[:, hid:hid + 3]


def reference_forward(params, h, edge_index, coord, edge_attr, node_attr):
    """Pure-JAX f32 reference matching the PyTorch module semantics."""
    row, col = edge_index
    silu = lambda v: v * jax.nn.sigmoid(v)
    coord_diff = coord[row] - coord[col]
    radial = jnp.sum(coord_diff ** 2, axis=1, keepdims=True)
    we1 = jnp.concatenate([params["we1_hr"], params["we1_hc"],
                           params["we1_rad"], params["we1_ea"]], axis=0)
    x = jnp.concatenate([h[row], h[col], radial, edge_attr], axis=1)
    m = silu(x @ we1 + params["be1"])
    edge_feat = silu(m @ params["we2"] + params["be2"])
    c = silu(edge_feat @ params["wc1"] + params["bc1"])
    trans = coord_diff * (c @ params["wc2"])
    n = h.shape[0]
    agg_t = jnp.zeros((n, 3), jnp.float32).at[row].add(trans)
    count = jnp.zeros((n, 1), jnp.float32).at[row].add(1.0)
    coord_out = coord + agg_t / jnp.maximum(count, 1.0)
    agg_e = jnp.zeros((n, params["we2"].shape[1]), jnp.float32).at[row].add(edge_feat)
    wn1 = jnp.concatenate([params["wn1_h"], params["wn1_a"], params["wn1_n"]], axis=0)
    n_in = jnp.concatenate([h, agg_e, node_attr], axis=1)
    n1 = silu(n_in @ wn1 + params["bn1"])
    n2 = n1 @ params["wn2"] + params["bn2"]
    return h + n2, coord_out


def init_params(key, node_feat_nf, hidden_nf, node_attr_nf, edge_attr_nf):
    ks = jax.random.split(key, 13)

    def lin_w(k, fan_in, fan_out):
        b = 1.0 / jnp.sqrt(fan_in)
        return jax.random.uniform(k, (fan_in, fan_out), jnp.float32, -b, b)

    def lin_b(k, fan_in, fan_out):
        b = 1.0 / jnp.sqrt(fan_in)
        return jax.random.uniform(k, (1, fan_out), jnp.float32, -b, b)

    edge_in_nf = 2 * node_feat_nf + 1 + edge_attr_nf
    we1 = lin_w(ks[0], edge_in_nf, hidden_nf)
    # split along fan_in so h[row]/h[col] projections can be hoisted to per-node matmuls
    we1_hr = we1[:node_feat_nf]
    we1_hc = we1[node_feat_nf:2 * node_feat_nf]
    we1_rad = we1[2 * node_feat_nf:2 * node_feat_nf + 1]
    we1_ea = we1[2 * node_feat_nf + 1:]

    # xavier_uniform with gain 0.001 for the final coord layer (no bias)
    xav = 0.001 * jnp.sqrt(6.0 / (hidden_nf + 1))
    wc2 = jax.random.uniform(ks[12], (hidden_nf, 1), jnp.float32, -xav, xav)

    return dict(
        we1_hr=we1_hr, we1_hc=we1_hc, we1_rad=we1_rad, we1_ea=we1_ea,
        be1=lin_b(ks[1], edge_in_nf, hidden_nf),
        we2=lin_w(ks[2], hidden_nf, hidden_nf), be2=lin_b(ks[3], hidden_nf, hidden_nf),
        wc1=lin_w(ks[4], hidden_nf, hidden_nf), bc1=lin_b(ks[5], hidden_nf, hidden_nf),
        wc2=wc2,
        wn1_h=lin_w(ks[6], node_feat_nf, hidden_nf),
        wn1_a=lin_w(ks[7], hidden_nf, hidden_nf),
        wn1_n=lin_w(ks[8], node_attr_nf, hidden_nf),
        bn1=lin_b(ks[9], node_feat_nf + hidden_nf + node_attr_nf, hidden_nf),
        wn2=lin_w(ks[10], hidden_nf, hidden_nf), bn2=lin_b(ks[11], hidden_nf, hidden_nf),
    )


if __name__ == "__main__":
    key = jax.random.PRNGKey(0)
    N = 16
    node_feat_nf = hidden_nf = 32      # residual=True requires node_feat_nf == hidden_nf
    edge_attr_nf, node_attr_nf = 4, 8

    # all-to-all edge list (EGCL_A2A): E = N*(N-1) = 240 -> one 512-edge tile after padding
    idx = jnp.arange(N, dtype=jnp.int32)
    row_full = jnp.repeat(idx, N)
    col_full = jnp.tile(idx, N)
    mask = row_full != col_full
    row = row_full[mask]
    col = col_full[mask]
    E = row.shape[0]

    k_h, k_c, k_ea, k_na, k_p = jax.random.split(key, 5)
    h = jax.random.normal(k_h, (N, node_feat_nf), jnp.float32)
    coord = jax.random.normal(k_c, (N, 3), jnp.float32)
    edge_attr = jax.random.normal(k_ea, (E, edge_attr_nf), jnp.float32)
    node_attr = jax.random.normal(k_na, (N, node_attr_nf), jnp.float32)

    params = init_params(k_p, node_feat_nf, hidden_nf, node_attr_nf, edge_attr_nf)

    fwd = jax.jit(egcl_a2a_forward)
    h_out, coord_out = fwd(params, h, (row, col), coord, edge_attr, node_attr)
    jax.block_until_ready((h_out, coord_out))

    h_ref, coord_ref = reference_forward(params, h, (row, col), coord, edge_attr, node_attr)
    # edge/coord MLP matmuls use bf16 MXU operands (f32 accumulation) -> loosened h tolerance
    assert jnp.allclose(h_out, h_ref, atol=3e-2, rtol=3e-2), \
        f"h mismatch, max abs err {jnp.max(jnp.abs(h_out - h_ref))}"
    assert jnp.allclose(coord_out, coord_ref, atol=1e-3, rtol=1e-3), \
        f"coord mismatch, max abs err {jnp.max(jnp.abs(coord_out - coord_ref))}"

    print("KERNEL_OK")
</pallas_src>

<mosaic_0001>
module attributes {stable_mosaic.version = 11 : i64} {
  func.func @egcl_kernel(%arg0: i32, %arg1: memref<512x8xf32, #tpu.memory_space<vmem>>, %arg2: memref<1x512xi32, #tpu.memory_space<vmem>>, %arg3: memref<32x35xf32, #tpu.memory_space<vmem>>, %arg4: memref<16x32xf32, #tpu.memory_space<vmem>>, %arg5: memref<16x3xf32, #tpu.memory_space<vmem>>, %arg6: memref<16x8xf32, #tpu.memory_space<vmem>>, %arg7: memref<1x32xf32, #tpu.memory_space<vmem>>, %arg8: memref<4x32xbf16, #tpu.memory_space<vmem>>, %arg9: memref<1x32xf32, #tpu.memory_space<vmem>>, %arg10: memref<32x32xbf16, #tpu.memory_space<vmem>>, %arg11: memref<1x32xf32, #tpu.memory_space<vmem>>, %arg12: memref<32x32xbf16, #tpu.memory_space<vmem>>, %arg13: memref<1x32xf32, #tpu.memory_space<vmem>>, %arg14: memref<1x32xf32, #tpu.memory_space<vmem>>, %arg15: memref<32x32xf32, #tpu.memory_space<vmem>>, %arg16: memref<32x32xf32, #tpu.memory_space<vmem>>, %arg17: memref<8x32xf32, #tpu.memory_space<vmem>>, %arg18: memref<1x32xf32, #tpu.memory_space<vmem>>, %arg19: memref<32x32xf32, #tpu.memory_space<vmem>>, %arg20: memref<1x32xf32, #tpu.memory_space<vmem>>, %arg21: memref<16x128xf32, #tpu.memory_space<vmem>>, %arg22: memref<16x128xf32, #tpu.memory_space<vmem>>) attributes {dimension_semantics = [#tpu.dimension_semantics<arbitrary>], iteration_bounds = array<i64: 1>, scalar_prefetch = 0 : i64, scratch_operands = 1 : i64, tpu.core_type = #tpu.core_type<tc>, window_params = [{transform_indices = @transform_0, window_bounds = array<i64: 512, 8>}, {transform_indices = @transform_1, window_bounds = array<i64: 1, 512>}, {pipeline_mode = #tpu.pipeline_mode<synchronous>, transform_indices = @transform_2, window_bounds = array<i64: 32, 35>}, {pipeline_mode = #tpu.pipeline_mode<synchronous>, transform_indices = @transform_3, window_bounds = array<i64: 16, 32>}, {pipeline_mode = #tpu.pipeline_mode<synchronous>, transform_indices = @transform_4, window_bounds = array<i64: 16, 3>}, {pipeline_mode = #tpu.pipeline_mode<synchronous>, transform_indices = @transform_5, window_bounds = array<i64: 16, 8>}, {pipeline_mode = #tpu.pipeline_mode<synchronous>, transform_indices = @transform_6, window_bounds = array<i64: 1, 32>}, {pipeline_mode = #tpu.pipeline_mode<synchronous>, transform_indices = @transform_7, window_bounds = array<i64: 4, 32>}, {pipeline_mode = #tpu.pipeline_mode<synchronous>, transform_indices = @transform_8, window_bounds = array<i64: 1, 32>}, {pipeline_mode = #tpu.pipeline_mode<synchronous>, transform_indices = @transform_9, window_bounds = array<i64: 32, 32>}, {pipeline_mode = #tpu.pipeline_mode<synchronous>, transform_indices = @transform_10, window_bounds = array<i64: 1, 32>}, {pipeline_mode = #tpu.pipeline_mode<synchronous>, transform_indices = @transform_11, window_bounds = array<i64: 32, 32>}, {pipeline_mode = #tpu.pipeline_mode<synchronous>, transform_indices = @transform_12, window_bounds = array<i64: 1, 32>}, {pipeline_mode = #tpu.pipeline_mode<synchronous>, transform_indices = @transform_13, window_bounds = array<i64: 1, 32>}, {pipeline_mode = #tpu.pipeline_mode<synchronous>, transform_indices = @transform_14, window_bounds = array<i64: 32, 32>}, {pipeline_mode = #tpu.pipeline_mode<synchronous>, transform_indices = @transform_15, window_bounds = array<i64: 32, 32>}, {pipeline_mode = #tpu.pipeline_mode<synchronous>, transform_indices = @transform_16, window_bounds = array<i64: 8, 32>}, {pipeline_mode = #tpu.pipeline_mode<synchronous>, transform_indices = @transform_17, window_bounds = array<i64: 1, 32>}, {pipeline_mode = #tpu.pipeline_mode<synchronous>, transform_indices = @transform_18, window_bounds = array<i64: 32, 32>}, {pipeline_mode = #tpu.pipeline_mode<synchronous>, transform_indices = @transform_19, window_bounds = array<i64: 1, 32>}, {pipeline_mode = #tpu.pipeline_mode<synchronous>, transform_indices = @transform_20, window_bounds = array<i64: 16, 128>}]} {
    %c0_i32 = arith.constant 0 : i32
    %0 = arith.cmpi eq, %arg0, %c0_i32 : i32
    %1 = arith.extui %0 : i1 to i32
    %c0_i32_0 = arith.constant 0 : i32
    %2 = arith.cmpi ne, %1, %c0_i32_0 : i32
    scf.if %2 {
      %cst_47 = arith.constant 0.000000e+00 : f32
      %96 = vector.broadcast %cst_47 : f32 to vector<16x128xf32>
      %c0_48 = arith.constant 0 : index
      %c0_49 = arith.constant 0 : index
      %97 = vector.load %arg22[%c0_48, %c0_49] : memref<16x128xf32, #tpu.memory_space<vmem>>, vector<16x128xf32>
      tpu.vector_store %arg22[%c0_48, %c0_49], %96 {strides = array<i32>} : memref<16x128xf32, #tpu.memory_space<vmem>>, vector<16x128xf32>,
    } else {
    }
    %c0 = arith.constant 0 : index
    %c4 = arith.constant 4 : index
    %3 = vector.load %arg1[%c0, %c4] : memref<512x8xf32, #tpu.memory_space<vmem>>, vector<512x1xf32>
    %4 = arith.fptosi %3 : vector<512x1xf32> to vector<512x1xi32>
    %c0_1 = arith.constant 0 : index
    %c5 = arith.constant 5 : index
    %5 = vector.load %arg1[%c0_1, %c5] : memref<512x8xf32, #tpu.memory_space<vmem>>, vector<512x1xf32>
    %6 = arith.fptosi %5 : vector<512x1xf32> to vector<512x1xi32>
    %7 = tpu.iota {dimensions = array<i32: 1>} : vector<512x32xi32>
    %8 = vector.broadcast %4 : vector<512x1xi32> to vector<512x32xi32>
    %9 = arith.cmpi eq, %7, %8 : vector<512x32xi32>
    %c16_i32 = arith.constant 16 : i32
    %10 = vector.broadcast %c16_i32 : i32 to vector<512x1xi32>
    %11 = arith.addi %6, %10 : vector<512x1xi32>
    %12 = vector.broadcast %11 : vector<512x1xi32> to vector<512x32xi32>
    %13 = arith.cmpi eq, %7, %12 : vector<512x32xi32>
    %14 = arith.ori %9, %13 : vector<512x32xi1>
    %15 = arith.extui %14 : vector<512x32xi1> to vector<512x32xi32>
    %16 = arith.sitofp %15 : vector<512x32xi32> to vector<512x32xf32>
    %c0_2 = arith.constant 0 : index
    %c0_3 = arith.constant 0 : index
    %17 = vector.load %arg3[%c0_2, %c0_3] : memref<32x35xf32, #tpu.memory_space<vmem>>, vector<32x35xf32>
    %cst = arith.constant dense<0.000000e+00> : vector<512x35xf32>
    %18 = tpu.matmul %16, %17, %cst {dimension_numbers = #tpu.dot_dimension_numbers<[1], [0], [0], [1], [0, 0, 1, 1], [], []>} : vector<512x32xf32>, vector<32x35xf32>, vector<512x35xf32> -> vector<512x35xf32>
    %19 = vector.extract_strided_slice %18 {offsets = [0, 0], sizes = [512, 32], strides = [1, 1]} : vector<512x35xf32> to vector<512x32xf32>
    %20 = vector.extract_strided_slice %18 {offsets = [0, 32], sizes = [512, 3], strides = [1, 1]} : vector<512x35xf32> to vector<512x3xf32>
    %21 = arith.mulf %20, %20 : vector<512x3xf32>
    %cst_4 = arith.constant dense<0.000000e+00> : vector<512xf32>
    %22 = vector.multi_reduction <add>, %21, %cst_4 [1] : vector<512x3xf32> to vector<512xf32>
    %23 = vector.shape_cast %22 : vector<512xf32> to vector<512x1xf32>
    %c0_5 = arith.constant 0 : index
    %c0_6 = arith.constant 0 : index
    %24 = vector.load %arg1[%c0_5, %c0_6] : memref<512x8xf32, #tpu.memory_space<vmem>>, vector<512x4xf32>
    %c0_7 = arith.constant 0 : index
    %c0_8 = arith.constant 0 : index
    %25 = vector.load %arg7[%c0_7, %c0_8] : memref<1x32xf32, #tpu.memory_space<vmem>>, vector<1x32xf32>
    %26 = vector.broadcast %23 : vector<512x1xf32> to vector<512x32xf32>
    %27 = vector.broadcast %25 : vector<1x32xf32> to vector<512x32xf32>
    %28 = arith.mulf %26, %27 : vector<512x32xf32>
    %29 = arith.addf %19, %28 : vector<512x32xf32>
    %30 = arith.truncf %24 : vector<512x4xf32> to vector<512x4xbf16>
    %c0_9 = arith.constant 0 : index
    %c0_10 = arith.constant 0 : index
    %31 = vector.load %arg8[%c0_9, %c0_10] : memref<4x32xbf16, #tpu.memory_space<vmem>>, vector<4x32xbf16>
    %cst_11 = arith.constant dense<0.000000e+00> : vector<512x32xf32>
    %32 = tpu.matmul %30, %31, %cst_11 {dimension_numbers = #tpu.dot_dimension_numbers<[1], [0], [0], [1], [0, 0, 1, 1], [], []>} : vector<512x4xbf16>, vector<4x32xbf16>, vector<512x32xf32> -> vector<512x32xf32>
    %33 = arith.addf %29, %32 : vector<512x32xf32>
    %c0_12 = arith.constant 0 : index
    %c0_13 = arith.constant 0 : index
    %34 = vector.load %arg9[%c0_12, %c0_13] : memref<1x32xf32, #tpu.memory_space<vmem>>, vector<1x32xf32>
    %35 = vector.broadcast %34 : vector<1x32xf32> to vector<512x32xf32>
    %36 = arith.addf %33, %35 : vector<512x32xf32>
    %cst_14 = arith.constant 5.000000e-01 : f32
    %37 = vector.broadcast %cst_14 : f32 to vector<512x32xf32>
    %38 = arith.mulf %37, %36 : vector<512x32xf32>
    %39 = math.tanh %38 : vector<512x32xf32>
    %cst_15 = arith.constant 5.000000e-01 : f32
    %40 = vector.broadcast %cst_15 : f32 to vector<512x32xf32>
    %41 = arith.mulf %40, %39 : vector<512x32xf32>
    %cst_16 = arith.constant 5.000000e-01 : f32
    %42 = vector.broadcast %cst_16 : f32 to vector<512x32xf32>
    %43 = arith.addf %41, %42 : vector<512x32xf32>
    %44 = arith.mulf %36, %43 : vector<512x32xf32>
    %45 = arith.truncf %44 : vector<512x32xf32> to vector<512x32xbf16>
    %c0_17 = arith.constant 0 : index
    %c0_18 = arith.constant 0 : index
    %46 = vector.load %arg10[%c0_17, %c0_18] : memref<32x32xbf16, #tpu.memory_space<vmem>>, vector<32x32xbf16>
    %cst_19 = arith.constant dense<0.000000e+00> : vector<512x32xf32>
    %47 = tpu.matmul %45, %46, %cst_19 {dimension_numbers = #tpu.dot_dimension_numbers<[1], [0], [0], [1], [0, 0, 1, 1], [], []>} : vector<512x32xbf16>, vector<32x32xbf16>, vector<512x32xf32> -> vector<512x32xf32>
    %c0_20 = arith.constant 0 : index
    %c0_21 = arith.constant 0 : index
    %48 = vector.load %arg11[%c0_20, %c0_21] : memref<1x32xf32, #tpu.memory_space<vmem>>, vector<1x32xf32>
    %49 = vector.broadcast %48 : vector<1x32xf32> to vector<512x32xf32>
    %50 = arith.addf %47, %49 : vector<512x32xf32>
    %cst_22 = arith.constant 5.000000e-01 : f32
    %51 = vector.broadcast %cst_22 : f32 to vector<512x32xf32>
    %52 = arith.mulf %51, %50 : vector<512x32xf32>
    %53 = math.tanh %52 : vector<512x32xf32>
    %cst_23 = arith.constant 5.000000e-01 : f32
    %54 = vector.broadcast %cst_23 : f32 to vector<512x32xf32>
    %55 = arith.mulf %54, %53 : vector<512x32xf32>
    %cst_24 = arith.constant 5.000000e-01 : f32
    %56 = vector.broadcast %cst_24 : f32 to vector<512x32xf32>
    %57 = arith.addf %55, %56 : vector<512x32xf32>
    %58 = arith.mulf %50, %57 : vector<512x32xf32>
    %59 = arith.truncf %58 : vector<512x32xf32> to vector<512x32xbf16>
    %c0_25 = arith.constant 0 : index
    %c0_26 = arith.constant 0 : index
    %60 = vector.load %arg12[%c0_25, %c0_26] : memref<32x32xbf16, #tpu.memory_space<vmem>>, vector<32x32xbf16>
    %cst_27 = arith.constant dense<0.000000e+00> : vector<512x32xf32>
    %61 = tpu.matmul %59, %60, %cst_27 {dimension_numbers = #tpu.dot_dimension_numbers<[1], [0], [0], [1], [0, 0, 1, 1], [], []>} : vector<512x32xbf16>, vector<32x32xbf16>, vector<512x32xf32> -> vector<512x32xf32>
    %c0_28 = arith.constant 0 : index
    %c0_29 = arith.constant 0 : index
    %62 = vector.load %arg13[%c0_28, %c0_29] : memref<1x32xf32, #tpu.memory_space<vmem>>, vector<1x32xf32>
    %63 = vector.broadcast %62 : vector<1x32xf32> to vector<512x32xf32>
    %64 = arith.addf %61, %63 : vector<512x32xf32>
    %cst_30 = arith.constant 5.000000e-01 : f32
    %65 = vector.broadcast %cst_30 : f32 to vector<512x32xf32>
    %66 = arith.mulf %65, %64 : vector<512x32xf32>
    %67 = math.tanh %66 : vector<512x32xf32>
    %cst_31 = arith.constant 5.000000e-01 : f32
    %68 = vector.broadcast %cst_31 : f32 to vector<512x32xf32>
    %69 = arith.mulf %68, %67 : vector<512x32xf32>
    %cst_32 = arith.constant 5.000000e-01 : f32
    %70 = vector.broadcast %cst_32 : f32 to vector<512x32xf32>
    %71 = arith.addf %69, %70 : vector<512x32xf32>
    %72 = arith.mulf %64, %71 : vector<512x32xf32>
    %c0_33 = arith.constant 0 : index
    %c0_34 = arith.constant 0 : index
    %73 = vector.load %arg14[%c0_33, %c0_34] : memref<1x32xf32, #tpu.memory_space<vmem>>, vector<1x32xf32>
    %74 = vector.broadcast %73 : vector<1x32xf32> to vector<512x32xf32>
    %75 = arith.mulf %72, %74 : vector<512x32xf32>
    %cst_35 = arith.constant dense<0.000000e+00> : vector<512xf32>
    %76 = vector.multi_reduction <add>, %75, %cst_35 [1] : vector<512x32xf32> to vector<512xf32>
    %77 = vector.shape_cast %76 : vector<512xf32> to vector<512x1xf32>
    %78 = vector.broadcast %77 : vector<512x1xf32> to vector<512x3xf32>
    %79 = arith.mulf %20, %78 : vector<512x3xf32>
    %cst_36 = arith.constant 1.000000e+00 : f32
    %80 = vector.broadcast %cst_36 : f32 to vector<512x1xf32>
    %cst_37 = arith.constant 0.000000e+00 : f32
    %81 = vector.broadcast %cst_37 : f32 to vector<512x92xf32>
    %82 = tpu.concatenate %58, %79, %80, %81 in 1 : vector<512x32xf32>, vector<512x3xf32>, vector<512x1xf32>, vector<512x92xf32> -> vector<512x128xf32>
    %83 = tpu.iota {dimensions = array<i32: 0>} : vector<16x512xi32>
    %c0_38 = arith.constant 0 : index
    %c0_39 = arith.constant 0 : index
    %84 = vector.load %arg2[%c0_38, %c0_39] : memref<1x512xi32, #tpu.memory_space<vmem>>, vector<1x512xi32>
    %85 = vector.broadcast %84 : vector<1x512xi32> to vector<16x512xi32>
    %86 = arith.cmpi eq, %83, %85 : vector<16x512xi32>
    %87 = arith.extui %86 : vector<16x512xi1> to vector<16x512xi32>
    %88 = arith.sitofp %87 : vector<16x512xi32> to vector<16x512xf32>
    %c0_40 = arith.constant 0 : index
    %c0_41 = arith.constant 0 : index
    %89 = vector.load %arg22[%c0_40, %c0_41] : memref<16x128xf32, #tpu.memory_space<vmem>>, vector<16x128xf32>
    %cst_42 = arith.constant dense<0.000000e+00> : vector<16x128xf32>
    %90 = tpu.matmul %88, %82, %cst_42 {dimension_numbers = #tpu.dot_dimension_numbers<[1], [0], [0], [1], [0, 0, 1, 1], [], []>} : vector<16x512xf32>, vector<512x128xf32>, vector<16x128xf32> -> vector<16x128xf32>
    %91 = arith.addf %89, %90 : vector<16x128xf32>
    %c0_43 = arith.constant 0 : index
    %c0_44 = arith.constant 0 : index
    %92 = vector.load %arg22[%c0_43, %c0_44] : memref<16x128xf32, #tpu.memory_space<vmem>>, vector<16x128xf32>
    tpu.vector_store %arg22[%c0_43, %c0_44], %91 {strides = array<i32>} : memref<16x128xf32, #tpu.memory_space<vmem>>, vector<16x128xf32>,
    %c0_i32_45 = arith.constant 0 : i32
    %93 = arith.cmpi eq, %arg0, %c0_i32_45 : i32
    %94 = arith.extui %93 : i1 to i32
    %c0_i32_46 = arith.constant 0 : i32
    %95 = arith.cmpi ne, %94, %c0_i32_46 : i32
    scf.if %95 {
      %c0_47 = arith.constant 0 : index
      %c0_48 = arith.constant 0 : index
      %96 = vector.load %arg22[%c0_47, %c0_48] : memref<16x128xf32, #tpu.memory_space<vmem>>, vector<16x128xf32>
      %97 = vector.extract_strided_slice %96 {offsets = [0, 0], sizes = [16, 32], strides = [1, 1]} : vector<16x128xf32> to vector<16x32xf32>
      %98 = vector.extract_strided_slice %96 {offsets = [0, 32], sizes = [16, 3], strides = [1, 1]} : vector<16x128xf32> to vector<16x3xf32>
      %99 = vector.extract_strided_slice %96 {offsets = [0, 35], sizes = [16, 1], strides = [1, 1]} : vector<16x128xf32> to vector<16x1xf32>
      %c0_49 = arith.constant 0 : index
      %c0_50 = arith.constant 0 : index
      %100 = vector.load %arg5[%c0_49, %c0_50] : memref<16x3xf32, #tpu.memory_space<vmem>>, vector<16x3xf32>
      %cst_51 = arith.constant 1.000000e+00 : f32
      %101 = vector.broadcast %cst_51 : f32 to vector<16x1xf32>
      %102 = arith.maximumf %99, %101 : vector<16x1xf32>
      %103 = vector.broadcast %102 : vector<16x1xf32> to vector<16x3xf32>
      %104 = arith.divf %98, %103 : vector<16x3xf32>
      %105 = arith.addf %100, %104 : vector<16x3xf32>
      %c0_52 = arith.constant 0 : index
      %c0_53 = arith.constant 0 : index
      %106 = vector.load %arg4[%c0_52, %c0_53] : memref<16x32xf32, #tpu.memory_space<vmem>>, vector<16x32xf32>
      %c0_54 = arith.constant 0 : index
      %c0_55 = arith.constant 0 : index
      %107 = vector.load %arg15[%c0_54, %c0_55] : memref<32x32xf32, #tpu.memory_space<vmem>>, vector<32x32xf32>
      %cst_56 = arith.constant dense<0.000000e+00> : vector<16x32xf32>
      %108 = tpu.matmul %106, %107, %cst_56 {dimension_numbers = #tpu.dot_dimension_numbers<[1], [0], [0], [1], [0, 0, 1, 1], [], []>} : vector<16x32xf32>, vector<32x32xf32>, vector<16x32xf32> -> vector<16x32xf32>
      %c0_57 = arith.constant 0 : index
      %c0_58 = arith.constant 0 : index
      %109 = vector.load %arg16[%c0_57, %c0_58] : memref<32x32xf32, #tpu.memory_space<vmem>>, vector<32x32xf32>
      %cst_59 = arith.constant dense<0.000000e+00> : vector<16x32xf32>
      %110 = tpu.matmul %97, %109, %cst_59 {dimension_numbers = #tpu.dot_dimension_numbers<[1], [0], [0], [1], [0, 0, 1, 1], [], []>} : vector<16x32xf32>, vector<32x32xf32>, vector<16x32xf32> -> vector<16x32xf32>
      %111 = arith.addf %108, %110 : vector<16x32xf32>
      %c0_60 = arith.constant 0 : index
      %c0_61 = arith.constant 0 : index
      %112 = vector.load %arg6[%c0_60, %c0_61] : memref<16x8xf32, #tpu.memory_space<vmem>>, vector<16x8xf32>
      %c0_62 = arith.constant 0 : index
      %c0_63 = arith.constant 0 : index
      %113 = vector.load %arg17[%c0_62, %c0_63] : memref<8x32xf32, #tpu.memory_space<vmem>>, vector<8x32xf32>
      %cst_64 = arith.constant dense<0.000000e+00> : vector<16x32xf32>
      %114 = tpu.matmul %112, %113, %cst_64 {dimension_numbers = #tpu.dot_dimension_numbers<[1], [0], [0], [1], [0, 0, 1, 1], [], []>} : vector<16x8xf32>, vector<8x32xf32>, vector<16x32xf32> -> vector<16x32xf32>
      %115 = arith.addf %111, %114 : vector<16x32xf32>
      %c0_65 = arith.constant 0 : index
      %c0_66 = arith.constant 0 : index
      %116 = vector.load %arg18[%c0_65, %c0_66] : memref<1x32xf32, #tpu.memory_space<vmem>>, vector<1x32xf32>
      %117 = vector.broadcast %116 : vector<1x32xf32> to vector<16x32xf32>
      %118 = arith.addf %115, %117 : vector<16x32xf32>
      %cst_67 = arith.constant 5.000000e-01 : f32
      %119 = vector.broadcast %cst_67 : f32 to vector<16x32xf32>
      %120 = arith.mulf %119, %118 : vector<16x32xf32>
      %121 = math.tanh %120 : vector<16x32xf32>
      %cst_68 = arith.constant 5.000000e-01 : f32
      %122 = vector.broadcast %cst_68 : f32 to vector<16x32xf32>
      %123 = arith.mulf %122, %121 : vector<16x32xf32>
      %cst_69 = arith.constant 5.000000e-01 : f32
      %124 = vector.broadcast %cst_69 : f32 to vector<16x32xf32>
      %125 = arith.addf %123, %124 : vector<16x32xf32>
      %126 = arith.mulf %118, %125 : vector<16x32xf32>
      %c0_70 = arith.constant 0 : index
      %c0_71 = arith.constant 0 : index
      %127 = vector.load %arg19[%c0_70, %c0_71] : memref<32x32xf32, #tpu.memory_space<vmem>>, vector<32x32xf32>
      %cst_72 = arith.constant dense<0.000000e+00> : vector<16x32xf32>
      %128 = tpu.matmul %126, %127, %cst_72 {dimension_numbers = #tpu.dot_dimension_numbers<[1], [0], [0], [1], [0, 0, 1, 1], [], []>} : vector<16x32xf32>, vector<32x32xf32>, vector<16x32xf32> -> vector<16x32xf32>
      %c0_73 = arith.constant 0 : index
      %c0_74 = arith.constant 0 : index
      %129 = vector.load %arg20[%c0_73, %c0_74] : memref<1x32xf32, #tpu.memory_space<vmem>>, vector<1x32xf32>
      %130 = vector.broadcast %129 : vector<1x32xf32> to vector<16x32xf32>
      %131 = arith.addf %128, %130 : vector<16x32xf32>
      %132 = arith.addf %106, %131 : vector<16x32xf32>
      %cst_75 = arith.constant 0.000000e+00 : f32
      %133 = vector.broadcast %cst_75 : f32 to vector<16x93xf32>
      %134 = tpu.concatenate %132, %105, %133 in 1 : vector<16x32xf32>, vector<16x3xf32>, vector<16x93xf32> -> vector<16x128xf32>
      %c0_76 = arith.constant 0 : index
      %c0_77 = arith.constant 0 : index
      %135 = vector.load %arg21[%c0_76, %c0_77] : memref<16x128xf32, #tpu.memory_space<vmem>>, vector<16x128xf32>
      tpu.vector_store %arg21[%c0_76, %c0_77], %134 {strides = array<i32>} : memref<16x128xf32, #tpu.memory_space<vmem>>, vector<16x128xf32>,
    } else {
    }
    return
  }
  func.func @transform_0(%arg0: i32) -> (i32, i32) {
    %c0_i32 = arith.constant 0 : i32
    %c0_i32_0 = arith.constant 0 : i32
    return %arg0, %c0_i32 : i32, i32
  }
  func.func @transform_1(%arg0: i32) -> (i32, i32) {
    %c0_i32 = arith.constant 0 : i32
    %c0_i32_0 = arith.constant 0 : i32
    return %c0_i32, %arg0 : i32, i32
  }
  func.func @transform_2(%arg0: i32) -> (i32, i32) {
    %c0_i32 = arith.constant 0 : i32
    %c0_i32_0 = arith.constant 0 : i32
    %c0_i32_1 = arith.constant 0 : i32
    return %c0_i32, %c0_i32_0 : i32, i32
  }
  func.func @transform_3(%arg0: i32) -> (i32, i32) {
    %c0_i32 = arith.constant 0 : i32
    %c0_i32_0 = arith.constant 0 : i32
    %c0_i32_1 = arith.constant 0 : i32
    return %c0_i32, %c0_i32_0 : i32, i32
  }
  func.func @transform_4(%arg0: i32) -> (i32, i32) {
    %c0_i32 = arith.constant 0 : i32
    %c0_i32_0 = arith.constant 0 : i32
    %c0_i32_1 = arith.constant 0 : i32
    return %c0_i32, %c0_i32_0 : i32, i32
  }
  func.func @transform_5(%arg0: i32) -> (i32, i32) {
    %c0_i32 = arith.constant 0 : i32
    %c0_i32_0 = arith.constant 0 : i32
    %c0_i32_1 = arith.constant 0 : i32
    return %c0_i32, %c0_i32_0 : i32, i32
  }
  func.func @transform_6(%arg0: i32) -> (i32, i32) {
    %c0_i32 = arith.constant 0 : i32
    %c0_i32_0 = arith.constant 0 : i32
    %c0_i32_1 = arith.constant 0 : i32
    return %c0_i32, %c0_i32_0 : i32, i32
  }
  func.func @transform_7(%arg0: i32) -> (i32, i32) {
    %c0_i32 = arith.constant 0 : i32
    %c0_i32_0 = arith.constant 0 : i32
    %c0_i32_1 = arith.constant 0 : i32
    return %c0_i32, %c0_i32_0 : i32, i32
  }
  func.func @transform_8(%arg0: i32) -> (i32, i32) {
    %c0_i32 = arith.constant 0 : i32
    %c0_i32_0 = arith.constant 0 : i32
    %c0_i32_1 = arith.constant 0 : i32
    return %c0_i32, %c0_i32_0 : i32, i32
  }
  func.func @transform_9(%arg0: i32) -> (i32, i32) {
    %c0_i32 = arith.constant 0 : i32
    %c0_i32_0 = arith.constant 0 : i32
    %c0_i32_1 = arith.constant 0 : i32
    return %c0_i32, %c0_i32_0 : i32, i32
  }
  func.func @transform_10(%arg0: i32) -> (i32, i32) {
    %c0_i32 = arith.constant 0 : i32
    %c0_i32_0 = arith.constant 0 : i32
    %c0_i32_1 = arith.constant 0 : i32
    return %c0_i32, %c0_i32_0 : i32, i32
  }
  func.func @transform_11(%arg0: i32) -> (i32, i32) {
    %c0_i32 = arith.constant 0 : i32
    %c0_i32_0 = arith.constant 0 : i32
    %c0_i32_1 = arith.constant 0 : i32
    return %c0_i32, %c0_i32_0 : i32, i32
  }
  func.func @transform_12(%arg0: i32) -> (i32, i32) {
    %c0_i32 = arith.constant 0 : i32
    %c0_i32_0 = arith.constant 0 : i32
    %c0_i32_1 = arith.constant 0 : i32
    return %c0_i32, %c0_i32_0 : i32, i32
  }
  func.func @transform_13(%arg0: i32) -> (i32, i32) {
    %c0_i32 = arith.constant 0 : i32
    %c0_i32_0 = arith.constant 0 : i32
    %c0_i32_1 = arith.constant 0 : i32
    return %c0_i32, %c0_i32_0 : i32, i32
  }
  func.func @transform_14(%arg0: i32) -> (i32, i32) {
    %c0_i32 = arith.constant 0 : i32
    %c0_i32_0 = arith.constant 0 : i32
    %c0_i32_1 = arith.constant 0 : i32
    return %c0_i32, %c0_i32_0 : i32, i32
  }
  func.func @transform_15(%arg0: i32) -> (i32, i32) {
    %c0_i32 = arith.constant 0 : i32
    %c0_i32_0 = arith.constant 0 : i32
    %c0_i32_1 = arith.constant 0 : i32
    return %c0_i32, %c0_i32_0 : i32, i32
  }
  func.func @transform_16(%arg0: i32) -> (i32, i32) {
    %c0_i32 = arith.constant 0 : i32
    %c0_i32_0 = arith.constant 0 : i32
    %c0_i32_1 = arith.constant 0 : i32
    return %c0_i32, %c0_i32_0 : i32, i32
  }
  func.func @transform_17(%arg0: i32) -> (i32, i32) {
    %c0_i32 = arith.constant 0 : i32
    %c0_i32_0 = arith.constant 0 : i32
    %c0_i32_1 = arith.constant 0 : i32
    return %c0_i32, %c0_i32_0 : i32, i32
  }
  func.func @transform_18(%arg0: i32) -> (i32, i32) {
    %c0_i32 = arith.constant 0 : i32
    %c0_i32_0 = arith.constant 0 : i32
    %c0_i32_1 = arith.constant 0 : i32
    return %c0_i32, %c0_i32_0 : i32, i32
  }
  func.func @transform_19(%arg0: i32) -> (i32, i32) {
    %c0_i32 = arith.constant 0 : i32
    %c0_i32_0 = arith.constant 0 : i32
    %c0_i32_1 = arith.constant 0 : i32
    return %c0_i32, %c0_i32_0 : i32, i32
  }
  func.func @transform_20(%arg0: i32) -> (i32, i32) {
    %c0_i32 = arith.constant 0 : i32
    %c0_i32_0 = arith.constant 0 : i32
    %c0_i32_1 = arith.constant 0 : i32
    return %c0_i32, %c0_i32_0 : i32, i32
  }
}

</mosaic_0001>

<llo_original>
// kernel: neg.1
$region0: #{neg.1}
  #allocation0 [shape = 's32[1]{0}', space=sflag, size = 0x4, scoped, tag = 'scoped memory for neg.1']
  %s0 = inlined_call_operand.vmem [shape: f32[16,3], index: 0, kind: input, shape index: {}]
  %s1 = inlined_call_operand.vmem [shape: f32[16,3], index: 1, kind: output, shape index: {}]
  %v2 = vld [vmem:[%s0] sm:$0x7]
  %3 = xla_tuple %v2
  %4 = xla_tuple %3
  %v5 = vxor.u32 %v2, 2147483648
  %6 = xla_tuple %v5
  %7 = vst [vmem:[%s1] sm:$0xf] %v5

// kernel: egcl_a2a_forward.1
$region0: #{egcl_a2a_forward.1}
  #allocation0 [shape = 'u32[]', space=smem, size = 0x4, offset = 0x4, fixed_abs, tag = 'smem constant byte address 0x4 - core index']
  #allocation1 [shape = 'u32[72,128]{1,0:T(1,128)}', space=vmem, size = 0x9000, scoped, tag = 'internal scratch']
  #allocation2 [shape = 'f32[16,128]{1,0:T(8,128)}', space=vmem, size = 0x2000, scoped, tag = 'scratch operand']
  %s0 = inlined_call_operand.vmem [shape: f32[512,8], index: 0, kind: input, shape index: {}]
  %s1 = inlined_call_operand.vmem [shape: s32[1,512], index: 1, kind: input, shape index: {}]
  %s2 = inlined_call_operand.vmem [shape: f32[32,35], index: 2, kind: input, shape index: {}]
  %s3 = inlined_call_operand.vmem [shape: f32[16,32], index: 3, kind: input, shape index: {}]
  %s4 = inlined_call_operand.vmem [shape: f32[16,3], index: 4, kind: input, shape index: {}]
  %s5 = inlined_call_operand.vmem [shape: f32[16,8], index: 5, kind: input, shape index: {}]
  %s6 = inlined_call_operand.vmem [shape: f32[1,32], index: 6, kind: input, shape index: {}]
  %s7 = inlined_call_operand.vmem [shape: bf16[4,32], index: 7, kind: input, shape index: {}]
  %s8 = inlined_call_operand.vmem [shape: f32[1,32], index: 8, kind: input, shape index: {}]
  %s9 = inlined_call_operand.vmem [shape: bf16[32,32], index: 9, kind: input, shape index: {}]
  %s10 = inlined_call_operand.vmem [shape: f32[1,32], index: 10, kind: input, shape index: {}]
  %s11 = inlined_call_operand.vmem [shape: bf16[32,32], index: 11, kind: input, shape index: {}]
  %s12 = inlined_call_operand.vmem [shape: f32[1,32], index: 12, kind: input, shape index: {}]
  %s13 = inlined_call_operand.vmem [shape: f32[1,32], index: 13, kind: input, shape index: {}]
  %s14 = inlined_call_operand.vmem [shape: f32[32,32], index: 14, kind: input, shape index: {}]
  %s15 = inlined_call_operand.vmem [shape: f32[32,32], index: 15, kind: input, shape index: {}]
  %s16 = inlined_call_operand.vmem [shape: f32[8,32], index: 16, kind: input, shape index: {}]
  %s17 = inlined_call_operand.vmem [shape: f32[1,32], index: 17, kind: input, shape index: {}]
  %s18 = inlined_call_operand.vmem [shape: f32[32,32], index: 18, kind: input, shape index: {}]
  %s19 = inlined_call_operand.vmem [shape: f32[1,32], index: 19, kind: input, shape index: {}]
  %s20 = inlined_call_operand.vmem [shape: f32[16,128], index: 20, kind: output, shape index: {}]
  %s21 = sld [smem:[#allocation0]]
  $region98: #{egcl_a2a_forward.1} parent=0
    _
  %s23 = ssub.s32 1, %s21
  %s24 = scalar_select 0, %s23, %s21
  // Predicated region
  $region2: #{egcl_a2a_forward.1} parent=0 // pred_check
    _
  $region3: #{egcl_a2a_forward.1} parent=0 // pred_check_branch
    %26 = sbr.rel (0) target = $region5
  $region4: #{egcl_a2a_forward.1} parent=0 // pred_region
    _
  $region5: #{egcl_a2a_forward.1} parent=0 // pred_fallthru
    _
  // Predicated region
  $region6: #{egcl_a2a_forward.1} parent=0 // pred_check
    _
  $region7: #{egcl_a2a_forward.1} parent=0 // pred_check_branch
    %28 = sbr.rel (0) target = $region9
  $region8: #{egcl_a2a_forward.1} parent=0 // pred_region
    _
  $region9: #{egcl_a2a_forward.1} parent=0 // pred_fallthru
    _
  // Predicated region
  $region10: #{egcl_a2a_forward.1} parent=0 // pred_check
    _
  $region11: #{egcl_a2a_forward.1} parent=0 // pred_check_branch
    %30 = sbr.rel (0) target = $region13
  $region12: #{egcl_a2a_forward.1} parent=0 // pred_region
    _
  $region13: #{egcl_a2a_forward.1} parent=0 // pred_fallthru
    _
  // Predicated region
  $region14: #{egcl_a2a_forward.1} parent=0 // pred_check
    _
  $region15: #{egcl_a2a_forward.1} parent=0 // pred_check_branch
    %32 = sbr.rel (0) target = $region17
  $region16: #{egcl_a2a_forward.1} parent=0 // pred_region
    _
  $region17: #{egcl_a2a_forward.1} parent=0 // pred_fallthru
    _
  // Predicated region
  $region18: #{egcl_a2a_forward.1} parent=0 // pred_check
    _
  $region19: #{egcl_a2a_forward.1} parent=0 // pred_check_branch
    %34 = sbr.rel (0) target = $region21
  $region20: #{egcl_a2a_forward.1} parent=0 // pred_region
    _
  $region21: #{egcl_a2a_forward.1} parent=0 // pred_fallthru
    _
  // Predicated region
  $region22: #{egcl_a2a_forward.1} parent=0 // pred_check
    _
  $region23: #{egcl_a2a_forward.1} parent=0 // pred_check_branch
    %36 = sbr.rel (0) target = $region25
  $region24: #{egcl_a2a_forward.1} parent=0 // pred_region
    _
  $region25: #{egcl_a2a_forward.1} parent=0 // pred_fallthru
    _
  // Predicated region
  $region26: #{egcl_a2a_forward.1} parent=0 // pred_check
    _
  $region27: #{egcl_a2a_forward.1} parent=0 // pred_check_branch
    %38 = sbr.rel (0) target = $region29
  $region28: #{egcl_a2a_forward.1} parent=0 // pred_region
    _
  $region29: #{egcl_a2a_forward.1} parent=0 // pred_fallthru
    _
  // Predicated region
  $region30: #{egcl_a2a_forward.1} parent=0 // pred_check
    _
  $region31: #{egcl_a2a_forward.1} parent=0 // pred_check_branch
    %40 = sbr.rel (0) target = $region33
  $region32: #{egcl_a2a_forward.1} parent=0 // pred_region
    _
  $region33: #{egcl_a2a_forward.1} parent=0 // pred_fallthru
    _
  // Predicated region
  $region34: #{egcl_a2a_forward.1} parent=0 // pred_check
    _
  $region35: #{egcl_a2a_forward.1} parent=0 // pred_check_branch
    %42 = sbr.rel (0) target = $region37
  $region36: #{egcl_a2a_forward.1} parent=0 // pred_region
    _
  $region37: #{egcl_a2a_forward.1} parent=0 // pred_fallthru
    _
  // Predicated region
  $region38: #{egcl_a2a_forward.1} parent=0 // pred_check
    _
  $region39: #{egcl_a2a_forward.1} parent=0 // pred_check_branch
    %44 = sbr.rel (0) target = $region41
  $region40: #{egcl_a2a_forward.1} parent=0 // pred_region
    _
  $region41: #{egcl_a2a_forward.1} parent=0 // pred_fallthru
    _
  // Predicated region
  $region42: #{egcl_a2a_forward.1} parent=0 // pred_check
    _
  $region43: #{egcl_a2a_forward.1} parent=0 // pred_check_branch
    %46 = sbr.rel (0) target = $region45
  $region44: #{egcl_a2a_forward.1} parent=0 // pred_region
    _
  $region45: #{egcl_a2a_forward.1} parent=0 // pred_fallthru
    _
  // Predicated region
  $region46: #{egcl_a2a_forward.1} parent=0 // pred_check
    _
  $region47: #{egcl_a2a_forward.1} parent=0 // pred_check_branch
    %48 = sbr.rel (0) target = $region49
  $region48: #{egcl_a2a_forward.1} parent=0 // pred_region
    _
  $region49: #{egcl_a2a_forward.1} parent=0 // pred_fallthru
    _
  // Predicated region
  $region50: #{egcl_a2a_forward.1} parent=0 // pred_check
    _
  $region51: #{egcl_a2a_forward.1} parent=0 // pred_check_branch
    %50 = sbr.rel (0) target = $region53
  $region52: #{egcl_a2a_forward.1} parent=0 // pred_region
    _
  $region53: #{egcl_a2a_forward.1} parent=0 // pred_fallthru
    _
  // Predicated region
  $region54: #{egcl_a2a_forward.1} parent=0 // pred_check
    _
  $region55: #{egcl_a2a_forward.1} parent=0 // pred_check_branch
    %52 = sbr.rel (0) target = $region57
  $region56: #{egcl_a2a_forward.1} parent=0 // pred_region
    _
  $region57: #{egcl_a2a_forward.1} parent=0 // pred_fallthru
    _
  // Predicated region
  $region58: #{egcl_a2a_forward.1} parent=0 // pred_check
    _
  $region59: #{egcl_a2a_forward.1} parent=0 // pred_check_branch
    %54 = sbr.rel (0) target = $region61
  $region60: #{egcl_a2a_forward.1} parent=0 // pred_region
    _
  $region61: #{egcl_a2a_forward.1} parent=0 // pred_fallthru
    _
  // Predicated region
  $region62: #{egcl_a2a_forward.1} parent=0 // pred_check
    _
  $region63: #{egcl_a2a_forward.1} parent=0 // pred_check_branch
    %56 = sbr.rel (0) target = $region65
  $region64: #{egcl_a2a_forward.1} parent=0 // pred_region
    _
  $region65: #{egcl_a2a_forward.1} parent=0 // pred_fallthru
    _
  // Predicated region
  $region66: #{egcl_a2a_forward.1} parent=0 // pred_check
    _
  $region67: #{egcl_a2a_forward.1} parent=0 // pred_check_branch
    %58 = sbr.rel (0) target = $region69
  $region68: #{egcl_a2a_forward.1} parent=0 // pred_region
    _
  $region69: #{egcl_a2a_forward.1} parent=0 // pred_fallthru
    _
  // Predicated region
  $region70: #{egcl_a2a_forward.1} parent=0 // pred_check
    _
  $region71: #{egcl_a2a_forward.1} parent=0 // pred_check_branch
    %60 = sbr.rel (0) target = $region73
  $region72: #{egcl_a2a_forward.1} parent=0 // pred_region
    _
  $region73: #{egcl_a2a_forward.1} parent=0 // pred_fallthru
    _
  // Predicated region
  $region74: #{egcl_a2a_forward.1} parent=0 // pred_check
    _
  $region75: #{egcl_a2a_forward.1} parent=0 // pred_check_branch
    %62 = sbr.rel (0) target = $region77
  $region76: #{egcl_a2a_forward.1} parent=0 // pred_region
    _
  $region77: #{egcl_a2a_forward.1} parent=0 // pred_fallthru
    _
  // Predicated region
  $region78: #{egcl_a2a_forward.1} parent=0 // pred_check
    _
  $region79: #{egcl_a2a_forward.1} parent=0 // pred_check_branch
    %64 = sbr.rel (0) target = $region81
  $region80: #{egcl_a2a_forward.1} parent=0 // pred_region
    _
  $region81: #{egcl_a2a_forward.1} parent=0 // pred_fallthru
    _
  %p66 = scmp.eq.s32.totalorder 0, 0
  // Predicated region
  $region82: #{egcl_a2a_forward.1} parent=0 // pred_check
    %p67 = pneg %p66
  $region83: #{egcl_a2a_forward.1} parent=0 // pred_check_branch
    %69 = sbr.rel (%p67) target = $region85
  $region84: #{egcl_a2a_forward.1} parent=0 // pred_region
    %70 = vst [vmem:[#allocation2] sm:$0xff] 0.0
    %71 = vst [vmem:[#allocation2 + $0x8] sm:$0xff] 0.0
  $region85: #{egcl_a2a_forward.1} parent=0 // pred_fallthru
    _
  %v72 = vld [vmem:[%s0] sm:$0xff]
  %v73 = vld [vmem:[%s0 + $0x8] sm:$0xff]
  %v74 = vld [vmem:[%s0 + $0x10] sm:$0xff]
  %v75 = vld [vmem:[%s0 + $0x18] sm:$0xff]
  %v76 = vld [vmem:[%s0 + $0x20] sm:$0xff]
  %v77 = vld [vmem:[%s0 + $0x28] sm:$0xff]
  %v78 = vld [vmem:[%s0 + $0x30] sm:$0xff]
  %v79 = vld [vmem:[%s0 + $0x38] sm:$0xff]
  %v80 = vld [vmem:[%s0 + $0x40] sm:$0xff]
  %v81 = vld [vmem:[%s0 + $0x48] sm:$0xff]
  %v82 = vld [vmem:[%s0 + $0x50] sm:$0xff]
  %v83 = vld [vmem:[%s0 + $0x58] sm:$0xff]
  %v84 = vld [vmem:[%s0 + $0x60] sm:$0xff]
  %v85 = vld [vmem:[%s0 + $0x68] sm:$0xff]
  %v86 = vld [vmem:[%s0 + $0x70] sm:$0xff]
  %v87 = vld [vmem:[%s0 + $0x78] sm:$0xff]
  %v88 = vld [vmem:[%s0 + $0x80] sm:$0xff]
  %v89 = vld [vmem:[%s0 + $0x88] sm:$0xff]
  %v90 = vld [vmem:[%s0 + $0x90] sm:$0xff]
  %v91 = vld [vmem:[%s0 + $0x98] sm:$0xff]
  %v92 = vld [vmem:[%s0 + $0xa0] sm:$0xff]
  %v93 = vld [vmem:[%s0 + $0xa8] sm:$0xff]
  %v94 = vld [vmem:[%s0 + $0xb0] sm:$0xff]
  %v95 = vld [vmem:[%s0 + $0xb8] sm:$0xff]
  %v96 = vld [vmem:[%s0 + $0xc0] sm:$0xff]
  %v97 = vld [vmem:[%s0 + $0xc8] sm:$0xff]
  %v98 = vld [vmem:[%s0 + $0xd0] sm:$0xff]
  %v99 = vld [vmem:[%s0 + $0xd8] sm:$0xff]
  %v100 = vld [vmem:[%s0 + $0xe0] sm:$0xff]
  %v101 = vld [vmem:[%s0 + $0xe8] sm:$0xff]
  %v102 = vld [vmem:[%s0 + $0xf0] sm:$0xff]
  %v103 = vld [vmem:[%s0 + $0xf8] sm:$0xff]
  %v104 = vld [vmem:[%s0 + $0x100] sm:$0xff]
  %v105 = vld [vmem:[%s0 + $0x108] sm:$0xff]
  %v106 = vld [vmem:[%s0 + $0x110] sm:$0xff]
  %v107 = vld [vmem:[%s0 + $0x118] sm:$0xff]
  %v108 = vld [vmem:[%s0 + $0x120] sm:$0xff]
  %v109 = vld [vmem:[%s0 + $0x128] sm:$0xff]
  %v110 = vld [vmem:[%s0 + $0x130] sm:$0xff]
  %v111 = vld [vmem:[%s0 + $0x138] sm:$0xff]
  %v112 = vld [vmem:[%s0 + $0x140] sm:$0xff]
  %v113 = vld [vmem:[%s0 + $0x148] sm:$0xff]
  %v114 = vld [vmem:[%s0 + $0x150] sm:$0xff]
  %v115 = vld [vmem:[%s0 + $0x158] sm:$0xff]
  %v116 = vld [vmem:[%s0 + $0x160] sm:$0xff]
  %v117 = vld [vmem:[%s0 + $0x168] sm:$0xff]
  %v118 = vld [vmem:[%s0 + $0x170] sm:$0xff]
  %v119 = vld [vmem:[%s0 + $0x178] sm:$0xff]
  %v120 = vld [vmem:[%s0 + $0x180] sm:$0xff]
  %v121 = vld [vmem:[%s0 + $0x188] sm:$0xff]
  %v122 = vld [vmem:[%s0 + $0x190] sm:$0xff]
  %v123 = vld [vmem:[%s0 + $0x198] sm:$0xff]
  %v124 = vld [vmem:[%s0 + $0x1a0] sm:$0xff]
  %v125 = vld [vmem:[%s0 + $0x1a8] sm:$0xff]
  %v126 = vld [vmem:[%s0 + $0x1b0] sm:$0xff]
  %v127 = vld [vmem:[%s0 + $0x1b8] sm:$0xff]
  %v128 = vld [vmem:[%s0 + $0x1c0] sm:$0xff]
  %v129 = vld [vmem:[%s0 + $0x1c8] sm:$0xff]
  %v130 = vld [vmem:[%s0 + $0x1d0] sm:$0xff]
  %v131 = vld [vmem:[%s0 + $0x1d8] sm:$0xff]
  %v132 = vld [vmem:[%s0 + $0x1e0] sm:$0xff]
  %v133 = vld [vmem:[%s0 + $0x1e8] sm:$0xff]
  %v134 = vld [vmem:[%s0 + $0x1f0] sm:$0xff]
  %v135 = vld [vmem:[%s0 + $0x1f8] sm:$0xff]
  %v136 = vcvt.f32.s32.to.zero.pseudo %v72
  %v137 = vcvt.f32.s32.to.zero.pseudo %v73
  %v138 = vcvt.f32.s32.to.zero.pseudo %v74
  %v139 = vcvt.f32.s32.to.zero.pseudo %v75
  %v140 = vcvt.f32.s32.to.zero.pseudo %v76
  %v141 = vcvt.f32.s32.to.zero.pseudo %v77
  %v142 = vcvt.f32.s32.to.zero.pseudo %v78
  %v143 = vcvt.f32.s32.to.zero.pseudo %v79
  %v144 = vcvt.f32.s32.to.zero.pseudo %v80
  %v145 = vcvt.f32.s32.to.zero.pseudo %v81
  %v146 = vcvt.f32.s32.to.zero.pseudo %v82
  %v147 = vcvt.f32.s32.to.zero.pseudo %v83
  %v148 = vcvt.f32.s32.to.zero.pseudo %v84
  %v149 = vcvt.f32.s32.to.zero.pseudo %v85
  %v150 = vcvt.f32.s32.to.zero.pseudo %v86
  %v151 = vcvt.f32.s32.to.zero.pseudo %v87
  %v152 = vcvt.f32.s32.to.zero.pseudo %v88
  %v153 = vcvt.f32.s32.to.zero.pseudo %v89
  %v154 = vcvt.f32.s32.to.zero.pseudo %v90
  %v155 = vcvt.f32.s32.to.zero.pseudo %v91
  %v156 = vcvt.f32.s32.to.zero.pseudo %v92
  %v157 = vcvt.f32.s32.to.zero.pseudo %v93
  %v158 = vcvt.f32.s32.to.zero.pseudo %v94
  %v159 = vcvt.f32.s32.to.zero.pseudo %v95
  %v160 = vcvt.f32.s32.to.zero.pseudo %v96
  %v161 = vcvt.f32.s32.to.zero.pseudo %v97
  %v162 = vcvt.f32.s32.to.zero.pseudo %v98
  %v163 = vcvt.f32.s32.to.zero.pseudo %v99
  %v164 = vcvt.f32.s32.to.zero.pseudo %v100
  %v165 = vcvt.f32.s32.to.zero.pseudo %v101
  %v166 = vcvt.f32.s32.to.zero.pseudo %v102
  %v167 = vcvt.f32.s32.to.zero.pseudo %v103
  %v168 = vcvt.f32.s32.to.zero.pseudo %v104
  %v169 = vcvt.f32.s32.to.zero.pseudo %v105
  %v170 = vcvt.f32.s32.to.zero.pseudo %v106
  %v171 = vcvt.f32.s32.to.zero.pseudo %v107
  %v172 = vcvt.f32.s32.to.zero.pseudo %v108
  %v173 = vcvt.f32.s32.to.zero.pseudo %v109
  %v174 = vcvt.f32.s32.to.zero.pseudo %v110
  %v175 = vcvt.f32.s32.to.zero.pseudo %v111
  %v176 = vcvt.f32.s32.to.zero.pseudo %v112
  %v177 = vcvt.f32.s32.to.zero.pseudo %v113
  %v178 = vcvt.f32.s32.to.zero.pseudo %v114
  %v179 = vcvt.f32.s32.to.zero.pseudo %v115
  %v180 = vcvt.f32.s32.to.zero.pseudo %v116
  %v181 = vcvt.f32.s32.to.zero.pseudo %v117
  %v182 = vcvt.f32.s32.to.zero.pseudo %v118
  %v183 = vcvt.f32.s32.to.zero.pseudo %v119
  %v184 = vcvt.f32.s32.to.zero.pseudo %v120
  %v185 = vcvt.f32.s32.to.zero.pseudo %v121
  %v186 = vcvt.f32.s32.to.zero.pseudo %v122
  %v187 = vcvt.f32.s32.to.zero.pseudo %v123
  %v188 = vcvt.f32.s32.to.zero.pseudo %v124
  %v189 = vcvt.f32.s32.to.zero.pseudo %v125
  %v190 = vcvt.f32.s32.to.zero.pseudo %v126
  %v191 = vcvt.f32.s32.to.zero.pseudo %v127
  %v192 = vcvt.f32.s32.to.zero.pseudo %v128
  %v193 = vcvt.f32.s32.to.zero.pseudo %v129
  %v194 = vcvt.f32.s32.to.zero.pseudo %v130
  %v195 = vcvt.f32.s32.to.zero.pseudo %v131
  %v196 = vcvt.f32.s32.to.zero.pseudo %v132
  %v197 = vcvt.f32.s32.to.zero.pseudo %v133
  %v198 = vcvt.f32.s32.to.zero.pseudo %v134
  %v199 = vcvt.f32.s32.to.zero.pseudo %v135
  %v200 = vlaneseq
  %v201 = vand.u32 %v200, 127
  %202 = vset.pattern.permute.xlu0 4
  %203 = vperm.xlu0 %202, %v136
  %v204 = vpop.permute.xlu0 %203
  %205 = vset.pattern.permute.xlu0 4
  %206 = vperm.xlu0 %205, %v137
  %v207 = vpop.permute.xlu0 %206
  %208 = vset.pattern.permute.xlu0 4
  %209 = vperm.xlu0 %208, %v138
  %v210 = vpop.permute.xlu0 %209
  %211 = vset.pattern.permute.xlu0 4
  %212 = vperm.xlu0 %211, %v139
  %v213 = vpop.permute.xlu0 %212
  %214 = vset.pattern.permute.xlu0 4
  %215 = vperm.xlu0 %214, %v140
  %v216 = vpop.permute.xlu0 %215
  %217 = vset.pattern.permute.xlu0 4
  %218 = vperm.xlu0 %217, %v141
  %v219 = vpop.permute.xlu0 %218
  %220 = vset.pattern.permute.xlu0 4
  %221 = vperm.xlu0 %220, %v142
  %v222 = vpop.permute.xlu0 %221
  %223 = vset.pattern.permute.xlu0 4
  %224 = vperm.xlu0 %223, %v143
  %v225 = vpop.permute.xlu0 %224
  %226 = vset.pattern.permute.xlu0 4
  %227 = vperm.xlu0 %226, %v144
  %v228 = vpop.permute.xlu0 %227
  %229 = vset.pattern.permute.xlu0 4
  %230 = vperm.xlu0 %229, %v145
  %v231 = vpop.permute.xlu0 %230
  %232 = vset.pattern.permute.xlu0 4
  %233 = vperm.xlu0 %232, %v146
  %v234 = vpop.permute.xlu0 %233
  %235 = vset.pattern.permute.xlu0 4
  %236 = vperm.xlu0 %235, %v147
  %v237 = vpop.permute.xlu0 %236
  %238 = vset.pattern.permute.xlu0 4
  %239 = vperm.xlu0 %238, %v148
  %v240 = vpop.permute.xlu0 %239
  %241 = vset.pattern.permute.xlu0 4
  %242 = vperm.xlu0 %241, %v149
  %v243 = vpop.permute.xlu0 %242
  %244 = vset.pattern.permute.xlu0 4
  %245 = vperm.xlu0 %244, %v150
  %v246 = vpop.permute.xlu0 %245
  %247 = vset.pattern.permute.xlu0 4
  %248 = vperm.xlu0 %247, %v151
  %v249 = vpop.permute.xlu0 %248
  %250 = vset.pattern.permute.xlu0 4
  %251 = vperm.xlu0 %250, %v152
  %v252 = vpop.permute.xlu0 %251
  %253 = vset.pattern.permute.xlu0 4
  %254 = vperm.xlu0 %253, %v153
  %v255 = vpop.permute.xlu0 %254
  %256 = vset.pattern.permute.xlu0 4
  %257 = vperm.xlu0 %256, %v154
  %v258 = vpop.permute.xlu0 %257
  %259 = vset.pattern.permute.xlu0 4
  %260 = vperm.xlu0 %259, %v155
  %v261 = vpop.permute.xlu0 %260
  %262 = vset.pattern.permute.xlu0 4
  %263 = vperm.xlu0 %262, %v156
  %v264 = vpop.permute.xlu0 %263
  %265 = vset.pattern.permute.xlu0 4
  %266 = vperm.xlu0 %265, %v157
  %v267 = vpop.permute.xlu0 %266
  %268 = vset.pattern.permute.xlu0 4
  %269 = vperm.xlu0 %268, %v158
  %v270 = vpop.permute.xlu0 %269
  %271 = vset.pattern.permute.xlu0 4
  %272 = vperm.xlu0 %271, %v159
  %v273 = vpop.permute.xlu0 %272
  %274 = vset.pattern.permute.xlu0 4
  %275 = vperm.xlu0 %274, %v160
  %v276 = vpop.permute.xlu0 %275
  %277 = vset.pattern.permute.xlu0 4
  %278 = vperm.xlu0 %277, %v161
  %v279 = vpop.permute.xlu0 %278
  %280 = vset.pattern.permute.xlu0 4
  %281 = vperm.xlu0 %280, %v162
  %v282 = vpop.permute.xlu0 %281
  %283 = vset.pattern.permute.xlu0 4
  %284 = vperm.xlu0 %283, %v163
  %v285 = vpop.permute.xlu0 %284
  %286 = vset.pattern.permute.xlu0 4
  %287 = vperm.xlu0 %286, %v164
  %v288 = vpop.permute.xlu0 %287
  %289 = vset.pattern.permute.xlu0 4
  %290 = vperm.xlu0 %289, %v165
  %v291 = vpop.permute.xlu0 %290
  %292 = vset.pattern.permute.xlu0 4
  %293 = vperm.xlu0 %292, %v166
  %v294 = vpop.permute.xlu0 %293
  %295 = vset.pattern.permute.xlu0 4
  %296 = vperm.xlu0 %295, %v167
  %v297 = vpop.permute.xlu0 %296
  %298 = vset.pattern.permute.xlu0 4
  %299 = vperm.xlu0 %298, %v168
  %v300 = vpop.permute.xlu0 %299
  %301 = vset.pattern.permute.xlu0 4
  %302 = vperm.xlu0 %301, %v169
  %v303 = vpop.permute.xlu0 %302
  %304 = vset.pattern.permute.xlu0 4
  %305 = vperm.xlu0 %304, %v170
  %v306 = vpop.permute.xlu0 %305
  %307 = vset.pattern.permute.xlu0 4
  %308 = vperm.xlu0 %307, %v171
  %v309 = vpop.permute.xlu0 %308
  %310 = vset.pattern.permute.xlu0 4
  %311 = vperm.xlu0 %310, %v172
  %v312 = vpop.permute.xlu0 %311
  %313 = vset.pattern.permute.xlu0 4
  %314 = vperm.xlu0 %313, %v173
  %v315 = vpop.permute.xlu0 %314
  %316 = vset.pattern.permute.xlu0 4
  %317 = vperm.xlu0 %316, %v174
  %v318 = vpop.permute.xlu0 %317
  %319 = vset.pattern.permute.xlu0 4
  %320 = vperm.xlu0 %319, %v175
  %v321 = vpop.permute.xlu0 %320
  %322 = vset.pattern.permute.xlu0 4
  %323 = vperm.xlu0 %322, %v176
  %v324 = vpop.permute.xlu0 %323
  %325 = vset.pattern.permute.xlu0 4
  %326 = vperm.xlu0 %325, %v177
  %v327 = vpop.permute.xlu0 %326
  %328 = vset.pattern.permute.xlu0 4
  %329 = vperm.xlu0 %328, %v178
  %v330 = vpop.permute.xlu0 %329
  %331 = vset.pattern.permute.xlu0 4
  %332 = vperm.xlu0 %331, %v179
  %v333 = vpop.permute.xlu0 %332
  %334 = vset.pattern.permute.xlu0 4
  %335 = vperm.xlu0 %334, %v180
  %v336 = vpop.permute.xlu0 %335
  %337 = vset.pattern.permute.xlu0 4
  %338 = vperm.xlu0 %337, %v181
  %v339 = vpop.permute.xlu0 %338
  %340 = vset.pattern.permute.xlu0 4
  %341 = vperm.xlu0 %340, %v182
  %v342 = vpop.permute.xlu0 %341
  %343 = vset.pattern.permute.xlu0 4
  %344 = vperm.xlu0 %343, %v183
  %v345 = vpop.permute.xlu0 %344
  %346 = vset.pattern.permute.xlu0 4
  %347 = vperm.xlu0 %346, %v184
  %v348 = vpop.permute.xlu0 %347
  %349 = vset.pattern.permute.xlu0 4
  %350 = vperm.xlu0 %349, %v185
  %v351 = vpop.permute.xlu0 %350
  %352 = vset.pattern.permute.xlu0 4
  %353 = vperm.xlu0 %352, %v186
  %v354 = vpop.permute.xlu0 %353
  %355 = vset.pattern.permute.xlu0 4
  %356 = vperm.xlu0 %355, %v187
  %v357 = vpop.permute.xlu0 %356
  %358 = vset.pattern.permute.xlu0 4
  %359 = vperm.xlu0 %358, %v188
  %v360 = vpop.permute.xlu0 %359
  %361 = vset.pattern.permute.xlu0 4
  %362 = vperm.xlu0 %361, %v189
  %v363 = vpop.permute.xlu0 %362
  %364 = vset.pattern.permute.xlu0 4
  %365 = vperm.xlu0 %364, %v190
  %v366 = vpop.permute.xlu0 %365
  %367 = vset.pattern.permute.xlu0 4
  %368 = vperm.xlu0 %367, %v191
  %v369 = vpop.permute.xlu0 %368
  %370 = vset.pattern.permute.xlu0 4
  %371 = vperm.xlu0 %370, %v192
  %v372 = vpop.permute.xlu0 %371
  %373 = vset.pattern.permute.xlu0 4
  %374 = vperm.xlu0 %373, %v193
  %v375 = vpop.permute.xlu0 %374
  %376 = vset.pattern.permute.xlu0 4
  %377 = vperm.xlu0 %376, %v194
  %v378 = vpop.permute.xlu0 %377
  %379 = vset.pattern.permute.xlu0 4
  %380 = vperm.xlu0 %379, %v195
  %v381 = vpop.permute.xlu0 %380
  %382 = vset.pattern.permute.xlu0 4
  %383 = vperm.xlu0 %382, %v196
  %v384 = vpop.permute.xlu0 %383
  %385 = vset.pattern.permute.xlu0 4
  %386 = vperm.xlu0 %385, %v197
  %v387 = vpop.permute.xlu0 %386
  %388 = vset.pattern.permute.xlu0 4
  %389 = vperm.xlu0 %388, %v198
  %v390 = vpop.permute.xlu0 %389
  %391 = vset.pattern.permute.xlu0 4
  %392 = vperm.xlu0 %391, %v199
  %v393 = vpop.permute.xlu0 %392
  %vm394 = vcmp.eq.s32.totalorder %v201, %v204
  %vm395 = vcmp.eq.s32.totalorder %v201, %v207
  %vm396 = vcmp.eq.s32.totalorder %v201, %v210
  %vm397 = vcmp.eq.s32.totalorder %v201, %v213
  %vm398 = vcmp.eq.s32.totalorder %v201, %v216
  %vm399 = vcmp.eq.s32.totalorder %v201, %v219
  %vm400 = vcmp.eq.s32.totalorder %v201, %v222
  %vm401 = vcmp.eq.s32.totalorder %v201, %v225
  %vm402 = vcmp.eq.s32.totalorder %v201, %v228
  %vm403 = vcmp.eq.s32.totalorder %v201, %v231
  %vm404 = vcmp.eq.s32.totalorder %v201, %v234
  %vm405 = vcmp.eq.s32.totalorder %v201, %v237
  %vm406 = vcmp.eq.s32.totalorder %v201, %v240
  %vm407 = vcmp.eq.s32.totalorder %v201, %v243
  %vm408 = vcmp.eq.s32.totalorder %v201, %v246
  %vm409 = vcmp.eq.s32.totalorder %v201, %v249
  %vm410 = vcmp.eq.s32.totalorder %v201, %v252
  %vm411 = vcmp.eq.s32.totalorder %v201, %v255
  %vm412 = vcmp.eq.s32.totalorder %v201, %v258
  %vm413 = vcmp.eq.s32.totalorder %v201, %v261
  %vm414 = vcmp.eq.s32.totalorder %v201, %v264
  %vm415 = vcmp.eq.s32.totalorder %v201, %v267
  %vm416 = vcmp.eq.s32.totalorder %v201, %v270
  %vm417 = vcmp.eq.s32.totalorder %v201, %v273
  %vm418 = vcmp.eq.s32.totalorder %v201, %v276
  %vm419 = vcmp.eq.s32.totalorder %v201, %v279
  %vm420 = vcmp.eq.s32.totalorder %v201, %v282
  %vm421 = vcmp.eq.s32.totalorder %v201, %v285
  %vm422 = vcmp.eq.s32.totalorder %v201, %v288
  %vm423 = vcmp.eq.s32.totalorder %v201, %v291
  %vm424 = vcmp.eq.s32.totalorder %v201, %v294
  %vm425 = vcmp.eq.s32.totalorder %v201, %v297
  %vm426 = vcmp.eq.s32.totalorder %v201, %v300
  %vm427 = vcmp.eq.s32.totalorder %v201, %v303
  %vm428 = vcmp.eq.s32.totalorder %v201, %v306
  %vm429 = vcmp.eq.s32.totalorder %v201, %v309
  %vm430 = vcmp.eq.s32.totalorder %v201, %v312
  %vm431 = vcmp.eq.s32.totalorder %v201, %v315
  %vm432 = vcmp.eq.s32.totalorder %v201, %v318
  %vm433 = vcmp.eq.s32.totalorder %v201, %v321
  %vm434 = vcmp.eq.s32.totalorder %v201, %v324
  %vm435 = vcmp.eq.s32.totalorder %v201, %v327
  %vm436 = vcmp.eq.s32.totalorder %v201, %v330
  %vm437 = vcmp.eq.s32.totalorder %v201, %v333
  %vm438 = vcmp.eq.s32.totalorder %v201, %v336
  %vm439 = vcmp.eq.s32.totalorder %v201, %v339
  %vm440 = vcmp.eq.s32.totalorder %v201, %v342
  %vm441 = vcmp.eq.s32.totalorder %v201, %v345
  %vm442 = vcmp.eq.s32.totalorder %v201, %v348
  %vm443 = vcmp.eq.s32.totalorder %v201, %v351
  %vm444 = vcmp.eq.s32.totalorder %v201, %v354
  %vm445 = vcmp.eq.s32.totalorder %v201, %v357
  %vm446 = vcmp.eq.s32.totalorder %v201, %v360
  %vm447 = vcmp.eq.s32.totalorder %v201, %v363
  %vm448 = vcmp.eq.s32.totalorder %v201, %v366
  %vm449 = vcmp.eq.s32.totalorder %v201, %v369
  %vm450 = vcmp.eq.s32.totalorder %v201, %v372
  %vm451 = vcmp.eq.s32.totalorder %v201, %v375
  %vm452 = vcmp.eq.s32.totalorder %v201, %v378
  %vm453 = vcmp.eq.s32.totalorder %v201, %v381
  %vm454 = vcmp.eq.s32.totalorder %v201, %v384
  %vm455 = vcmp.eq.s32.totalorder %v201, %v387
  %vm456 = vcmp.eq.s32.totalorder %v201, %v390
  %vm457 = vcmp.eq.s32.totalorder %v201, %v393
  %v458 = vadd.s32 %v136, 16
  %v459 = vadd.s32 %v137, 16
  %v460 = vadd.s32 %v138, 16
  %v461 = vadd.s32 %v139, 16
  %v462 = vadd.s32 %v140, 16
  %v463 = vadd.s32 %v141, 16
  %v464 = vadd.s32 %v142, 16
  %v465 = vadd.s32 %v143, 16
  %v466 = vadd.s32 %v144, 16
  %v467 = vadd.s32 %v145, 16
  %v468 = vadd.s32 %v146, 16
  %v469 = vadd.s32 %v147, 16
  %v470 = vadd.s32 %v148, 16
  %v471 = vadd.s32 %v149, 16
  %v472 = vadd.s32 %v150, 16
  %v473 = vadd.s32 %v151, 16
  %v474 = vadd.s32 %v152, 16
  %v475 = vadd.s32 %v153, 16
  %v476 = vadd.s32 %v154, 16
  %v477 = vadd.s32 %v155, 16
  %v478 = vadd.s32 %v156, 16
  %v479 = vadd.s32 %v157, 16
  %v480 = vadd.s32 %v158, 16
  %v481 = vadd.s32 %v159, 16
  %v482 = vadd.s32 %v160, 16
  %v483 = vadd.s32 %v161, 16
  %v484 = vadd.s32 %v162, 16
  %v485 = vadd.s32 %v163, 16
  %v486 = vadd.s32 %v164, 16
  %v487 = vadd.s32 %v165, 16
  %v488 = vadd.s32 %v166, 16
  %v489 = vadd.s32 %v167, 16
  %v490 = vadd.s32 %v168, 16
  %v491 = vadd.s32 %v169, 16
  %v492 = vadd.s32 %v170, 16
  %v493 = vadd.s32 %v171, 16
  %v494 = vadd.s32 %v172, 16
  %v495 = vadd.s32 %v173, 16
  %v496 = vadd.s32 %v174, 16
  %v497 = vadd.s32 %v175, 16
  %v498 = vadd.s32 %v176, 16
  %v499 = vadd.s32 %v177, 16
  %v500 = vadd.s32 %v178, 16
  %v501 = vadd.s32 %v179, 16
  %v502 = vadd.s32 %v180, 16
  %v503 = vadd.s32 %v181, 16
  %v504 = vadd.s32 %v182, 16
  %v505 = vadd.s32 %v183, 16
  %v506 = vadd.s32 %v184, 16
  %v507 = vadd.s32 %v185, 16
  %v508 = vadd.s32 %v186, 16
  %v509 = vadd.s32 %v187, 16
  %v510 = vadd.s32 %v188, 16
  %v511 = vadd.s32 %v189, 16
  %v512 = vadd.s32 %v190, 16
  %v513 = vadd.s32 %v191, 16
  %v514 = vadd.s32 %v192, 16
  %v515 = vadd.s32 %v193, 16
  %v516 = vadd.s32 %v194, 16
  %v517 = vadd.s32 %v195, 16
  %v518 = vadd.s32 %v196, 16
  %v519 = vadd.s32 %v197, 16
  %v520 = vadd.s32 %v198, 16
  %v521 = vadd.s32 %v199, 16
  %522 = vset.pattern.permute.xlu0 5
  %523 = vperm.xlu0 %522, %v458
  %v524 = vpop.permute.xlu0 %523
  %525 = vset.pattern.permute.xlu0 5
  %526 = vperm.xlu0 %525, %v459
  %v527 = vpop.permute.xlu0 %526
  %528 = vset.pattern.permute.xlu0 5
  %529 = vperm.xlu0 %528, %v460
  %v530 = vpop.permute.xlu0 %529
  %531 = vset.pattern.permute.xlu0 5
  %532 = vperm.xlu0 %531, %v461
  %v533 = vpop.permute.xlu0 %532
  %534 = vset.pattern.permute.xlu0 5
  %535 = vperm.xlu0 %534, %v462
  %v536 = vpop.permute.xlu0 %535
  %537 = vset.pattern.permute.xlu0 5
  %538 = vperm.xlu0 %537, %v463
  %v539 = vpop.permute.xlu0 %538
  %540 = vset.pattern.permute.xlu0 5
  %541 = vperm.xlu0 %540, %v464
  %v542 = vpop.permute.xlu0 %541
  %543 = vset.pattern.permute.xlu0 5
  %544 = vperm.xlu0 %543, %v465
  %v545 = vpop.permute.xlu0 %544
  %546 = vset.pattern.permute.xlu0 5
  %547 = vperm.xlu0 %546, %v466
  %v548 = vpop.permute.xlu0 %547
  %549 = vset.pattern.permute.xlu0 5
  %550 = vperm.xlu0 %549, %v467
  %v551 = vpop.permute.xlu0 %550
  %552 = vset.pattern.permute.xlu0 5
  %553 = vperm.xlu0 %552, %v468
  %v554 = vpop.permute.xlu0 %553
  %555 = vset.pattern.permute.xlu0 5
  %556 = vperm.xlu0 %555, %v469
  %v557 = vpop.permute.xlu0 %556
  %558 = vset.pattern.permute.xlu0 5
  %559 = vperm.xlu0 %558, %v470
  %v560 = vpop.permute.xlu0 %559
  %561 = vset.pattern.permute.xlu0 5
  %562 = vperm.xlu0 %561, %v471
  %v563 = vpop.permute.xlu0 %562
  %564 = vset.pattern.permute.xlu0 5
  %565 = vperm.xlu0 %564, %v472
  %v566 = vpop.permute.xlu0 %565
  %567 = vset.pattern.permute.xlu0 5
  %568 = vperm.xlu0 %567, %v473
  %v569 = vpop.permute.xlu0 %568
  %570 = vset.pattern.permute.xlu0 5
  %571 = vperm.xlu0 %570, %v474
  %v572 = vpop.permute.xlu0 %571
  %573 = vset.pattern.permute.xlu0 5
  %574 = vperm.xlu0 %573, %v475
  %v575 = vpop.permute.xlu0 %574
  %576 = vset.pattern.permute.xlu0 5
  %577 = vperm.xlu0 %576, %v476
  %v578 = vpop.permute.xlu0 %577
  %579 = vset.pattern.permute.xlu0 5
  %580 = vperm.xlu0 %579, %v477
  %v581 = vpop.permute.xlu0 %580
  %582 = vset.pattern.permute.xlu0 5
  %583 = vperm.xlu0 %582, %v478
  %v584 = vpop.permute.xlu0 %583
  %585 = vset.pattern.permute.xlu0 5
  %586 = vperm.xlu0 %585, %v479
  %v587 = vpop.permute.xlu0 %586
  %588 = vset.pattern.permute.xlu0 5
  %589 = vperm.xlu0 %588, %v480
  %v590 = vpop.permute.xlu0 %589
  %591 = vset.pattern.permute.xlu0 5
  %592 = vperm.xlu0 %591, %v481
  %v593 = vpop.permute.xlu0 %592
  %594 = vset.pattern.permute.xlu0 5
  %595 = vperm.xlu0 %594, %v482
  %v596 = vpop.permute.xlu0 %595
  %597 = vset.pattern.permute.xlu0 5
  %598 = vperm.xlu0 %597, %v483
  %v599 = vpop.permute.xlu0 %598
  %600 = vset.pattern.permute.xlu0 5
  %601 = vperm.xlu0 %600, %v484
  %v602 = vpop.permute.xlu0 %601
  %603 = vset.pattern.permute.xlu0 5
  %604 = vperm.xlu0 %603, %v485
  %v605 = vpop.permute.xlu0 %604
  %606 = vset.pattern.permute.xlu0 5
  %607 = vperm.xlu0 %606, %v486
  %v608 = vpop.permute.xlu0 %607
  %609 = vset.pattern.permute.xlu0 5
  %610 = vperm.xlu0 %609, %v487
  %v611 = vpop.permute.xlu0 %610
  %612 = vset.pattern.permute.xlu0 5
  %613 = vperm.xlu0 %612, %v488
  %v614 = vpop.permute.xlu0 %613
  %615 = vset.pattern.permute.xlu0 5
  %616 = vperm.xlu0 %615, %v489
  %v617 = vpop.permute.xlu0 %616
  %618 = vset.pattern.permute.xlu0 5
  %619 = vperm.xlu0 %618, %v490
  %v620 = vpop.permute.xlu0 %619
  %621 = vset.pattern.permute.xlu0 5
  %622 = vperm.xlu0 %621, %v491
  %v623 = vpop.permute.xlu0 %622
  %624 = vset.pattern.permute.xlu0 5
  %625 = vperm.xlu0 %624, %v492
  %v626 = vpop.permute.xlu0 %625
  %627 = vset.pattern.permute.xlu0 5
  %628 = vperm.xlu0 %627, %v493
  %v629 = vpop.permute.xlu0 %628
  %630 = vset.pattern.permute.xlu0 5
  %631 = vperm.xlu0 %630, %v494
  %v632 = vpop.permute.xlu0 %631
  %633 = vset.pattern.permute.xlu0 5
  %634 = vperm.xlu0 %633, %v495
  %v635 = vpop.permute.xlu0 %634
  %636 = vset.pattern.permute.xlu0 5
  %637 = vperm.xlu0 %636, %v496
  %v638 = vpop.permute.xlu0 %637
  %639 = vset.pattern.permute.xlu0 5
  %640 = vperm.xlu0 %639, %v497
  %v641 = vpop.permute.xlu0 %640
  %642 = vset.pattern.permute.xlu0 5
  %643 = vperm.xlu0 %642, %v498
  %v644 = vpop.permute.xlu0 %643
  %645 = vset.pattern.permute.xlu0 5
  %646 = vperm.xlu0 %645, %v499
  %v647 = vpop.permute.xlu0 %646
  %648 = vset.pattern.permute.xlu0 5
  %649 = vperm.xlu0 %648, %v500
  %v650 = vpop.permute.xlu0 %649
  %651 = vset.pattern.permute.xlu0 5
  %652 = vperm.xlu0 %651, %v501
  %v653 = vpop.permute.xlu0 %652
  %654 = vset.pattern.permute.xlu0 5
  %655 = vperm.xlu0 %654, %v502
  %v656 = vpop.permute.xlu0 %655
  %657 = vset.pattern.permute.xlu0 5
  %658 = vperm.xlu0 %657, %v503
  %v659 = vpop.permute.xlu0 %658
  %660 = vset.pattern.permute.xlu0 5
  %661 = vperm.xlu0 %660, %v504
  %v662 = vpop.permute.xlu0 %661
  %663 = vset.pattern.permute.xlu0 5
  %664 = vperm.xlu0 %663, %v505
  %v665 = vpop.permute.xlu0 %664
  %666 = vset.pattern.permute.xlu0 5
  %667 = vperm.xlu0 %666, %v506
  %v668 = vpop.permute.xlu0 %667
  %669 = vset.pattern.permute.xlu0 5
  %670 = vperm.xlu0 %669, %v507
  %v671 = vpop.permute.xlu0 %670
  %672 = vset.pattern.permute.xlu0 5
  %673 = vperm.xlu0 %672, %v508
  %v674 = vpop.permute.xlu0 %673
  %675 = vset.pattern.permute.xlu0 5
  %676 = vperm.xlu0 %675, %v509
  %v677 = vpop.permute.xlu0 %676
  %678 = vset.pattern.permute.xlu0 5
  %679 = vperm.xlu0 %678, %v510
  %v680 = vpop.permute.xlu0 %679
  %681 = vset.pattern.permute.xlu0 5
  %682 = vperm.xlu0 %681, %v511
  %v683 = vpop.permute.xlu0 %682
  %684 = vset.pattern.permute.xlu0 5
  %685 = vperm.xlu0 %684, %v512
  %v686 = vpop.permute.xlu0 %685
  %687 = vset.pattern.permute.xlu0 5
  %688 = vperm.xlu0 %687, %v513
  %v689 = vpop.permute.xlu0 %688
  %690 = vset.pattern.permute.xlu0 5
  %691 = vperm.xlu0 %690, %v514
  %v692 = vpop.permute.xlu0 %691
  %693 = vset.pattern.permute.xlu0 5
  %694 = vperm.xlu0 %693, %v515
  %v695 = vpop.permute.xlu0 %694
  %696 = vset.pattern.permute.xlu0 5
  %697 = vperm.xlu0 %696, %v516
  %v698 = vpop.permute.xlu0 %697
  %699 = vset.pattern.permute.xlu0 5
  %700 = vperm.xlu0 %699, %v517
  %v701 = vpop.permute.xlu0 %700
  %702 = vset.pattern.permute.xlu0 5
  %703 = vperm.xlu0 %702, %v518
  %v704 = vpop.permute.xlu0 %703
  %705 = vset.pattern.permute.xlu0 5
  %706 = vperm.xlu0 %705, %v519
  %v707 = vpop.permute.xlu0 %706
  %708 = vset.pattern.permute.xlu0 5
  %709 = vperm.xlu0 %708, %v520
  %v710 = vpop.permute.xlu0 %709
  %711 = vset.pattern.permute.xlu0 5
  %712 = vperm.xlu0 %711, %v521
  %v713 = vpop.permute.xlu0 %712
  %vm714 = vcmp.eq.s32.totalorder %v201, %v524
  %vm715 = vcmp.eq.s32.totalorder %v201, %v527
  %vm716 = vcmp.eq.s32.totalorder %v201, %v530
  %vm717 = vcmp.eq.s32.totalorder %v201, %v533
  %vm718 = vcmp.eq.s32.totalorder %v201, %v536
  %vm719 = vcmp.eq.s32.totalorder %v201, %v539
  %vm720 = vcmp.eq.s32.totalorder %v201, %v542
  %vm721 = vcmp.eq.s32.totalorder %v201, %v545
  %vm722 = vcmp.eq.s32.totalorder %v201, %v548
  %vm723 = vcmp.eq.s32.totalorder %v201, %v551
  %vm724 = vcmp.eq.s32.totalorder %v201, %v554
  %vm725 = vcmp.eq.s32.totalorder %v201, %v557
  %vm726 = vcmp.eq.s32.totalorder %v201, %v560
  %vm727 = vcmp.eq.s32.totalorder %v201, %v563
  %vm728 = vcmp.eq.s32.totalorder %v201, %v566
  %vm729 = vcmp.eq.s32.totalorder %v201, %v569
  %vm730 = vcmp.eq.s32.totalorder %v201, %v572
  %vm731 = vcmp.eq.s32.totalorder %v201, %v575
  %vm732 = vcmp.eq.s32.totalorder %v201, %v578
  %vm733 = vcmp.eq.s32.totalorder %v201, %v581
  %vm734 = vcmp.eq.s32.totalorder %v201, %v584
  %vm735 = vcmp.eq.s32.totalorder %v201, %v587
  %vm736 = vcmp.eq.s32.totalorder %v201, %v590
  %vm737 = vcmp.eq.s32.totalorder %v201, %v593
  %vm738 = vcmp.eq.s32.totalorder %v201, %v596
  %vm739 = vcmp.eq.s32.totalorder %v201, %v599
  %vm740 = vcmp.eq.s32.totalorder %v201, %v602
  %vm741 = vcmp.eq.s32.totalorder %v201, %v605
  %vm742 = vcmp.eq.s32.totalorder %v201, %v608
  %vm743 = vcmp.eq.s32.totalorder %v201, %v611
  %vm744 = vcmp.eq.s32.totalorder %v201, %v614
  %vm745 = vcmp.eq.s32.totalorder %v201, %v617
  %vm746 = vcmp.eq.s32.totalorder %v201, %v620
  %vm747 = vcmp.eq.s32.totalorder %v201, %v623
  %vm748 = vcmp.eq.s32.totalorder %v201, %v626
  %vm749 = vcmp.eq.s32.totalorder %v201, %v629
  %vm750 = vcmp.eq.s32.totalorder %v201, %v632
  %vm751 = vcmp.eq.s32.totalorder %v201, %v635
  %vm752 = vcmp.eq.s32.totalorder %v201, %v638
  %vm753 = vcmp.eq.s32.totalorder %v201, %v641
  %vm754 = vcmp.eq.s32.totalorder %v201, %v644
  %vm755 = vcmp.eq.s32.totalorder %v201, %v647
  %vm756 = vcmp.eq.s32.totalorder %v201, %v650
  %vm757 = vcmp.eq.s32.totalorder %v201, %v653
  %vm758 = vcmp.eq.s32.totalorder %v201, %v656
  %vm759 = vcmp.eq.s32.totalorder %v201, %v659
  %vm760 = vcmp.eq.s32.totalorder %v201, %v662
  %vm761 = vcmp.eq.s32.totalorder %v201, %v665
  %vm762 = vcmp.eq.s32.totalorder %v201, %v668
  %vm763 = vcmp.eq.s32.totalorder %v201, %v671
  %vm764 = vcmp.eq.s32.totalorder %v201, %v674
  %vm765 = vcmp.eq.s32.totalorder %v201, %v677
  %vm766 = vcmp.eq.s32.totalorder %v201, %v680
  %vm767 = vcmp.eq.s32.totalorder %v201, %v683
  %vm768 = vcmp.eq.s32.totalorder %v201, %v686
  %vm769 = vcmp.eq.s32.totalorder %v201, %v689
  %vm770 = vcmp.eq.s32.totalorder %v201, %v692
  %vm771 = vcmp.eq.s32.totalorder %v201, %v695
  %vm772 = vcmp.eq.s32.totalorder %v201, %v698
  %vm773 = vcmp.eq.s32.totalorder %v201, %v701
  %vm774 = vcmp.eq.s32.totalorder %v201, %v704
  %vm775 = vcmp.eq.s32.totalorder %v201, %v707
  %vm776 = vcmp.eq.s32.totalorder %v201, %v710
  %vm777 = vcmp.eq.s32.totalorder %v201, %v713
  %vm778 = vmor %vm394, %vm714
  %vm779 = vmor %vm395, %vm715
  %vm780 = vmor %vm396, %vm716
  %vm781 = vmor %vm397, %vm717
  %vm782 = vmor %vm398, %vm718
  %vm783 = vmor %vm399, %vm719
  %vm784 = vmor %vm400, %vm720
  %vm785 = vmor %vm401, %vm721
  %vm786 = vmor %vm402, %vm722
  %vm787 = vmor %vm403, %vm723
  %vm788 = vmor %vm404, %vm724
  %vm789 = vmor %vm405, %vm725
  %vm790 = vmor %vm406, %vm726
  %vm791 = vmor %vm407, %vm727
  %vm792 = vmor %vm408, %vm728
  %vm793 = vmor %vm409, %vm729
  %vm794 = vmor %vm410, %vm730
  %vm795 = vmor %vm411, %vm731
  %vm796 = vmor %vm412, %vm732
  %vm797 = vmor %vm413, %vm733
  %vm798 = vmor %vm414, %vm734
  %vm799 = vmor %vm415, %vm735
  %vm800 = vmor %vm416, %vm736
  %vm801 = vmor %vm417, %vm737
  %vm802 = vmor %vm418, %vm738
  %vm803 = vmor %vm419, %vm739
  %vm804 = vmor %vm420, %vm740
  %vm805 = vmor %vm421, %vm741
  %vm806 = vmor %vm422, %vm742
  %vm807 = vmor %vm423, %vm743
  %vm808 = vmor %vm424, %vm744
  %vm809 = vmor %vm425, %vm745
  %vm810 = vmor %vm426, %vm746
  %vm811 = vmor %vm427, %vm747
  %vm812 = vmor %vm428, %vm748
  %vm813 = vmor %vm429, %vm749
  %vm814 = vmor %vm430, %vm750
  %vm815 = vmor %vm431, %vm751
  %vm816 = vmor %vm432, %vm752
  %vm817 = vmor %vm433, %vm753
  %vm818 = vmor %vm434, %vm754
  %vm819 = vmor %vm435, %vm755
  %vm820 = vmor %vm436, %vm756
  %vm821 = vmor %vm437, %vm757
  %vm822 = vmor %vm438, %vm758
  %vm823 = vmor %vm439, %vm759
  %vm824 = vmor %vm440, %vm760
  %vm825 = vmor %vm441, %vm761
  %vm826 = vmor %vm442, %vm762
  %vm827 = vmor %vm443, %vm763
  %vm828 = vmor %vm444, %vm764
  %vm829 = vmor %vm445, %vm765
  %vm830 = vmor %vm446, %vm766
  %vm831 = vmor %vm447, %vm767
  %vm832 = vmor %vm448, %vm768
  %vm833 = vmor %vm449, %vm769
  %vm834 = vmor %vm450, %vm770
  %vm835 = vmor %vm451, %vm771
  %vm836 = vmor %vm452, %vm772
  %vm837 = vmor %vm453, %vm773
  %vm838 = vmor %vm454, %vm774
  %vm839 = vmor %vm455, %vm775
  %vm840 = vmor %vm456, %vm776
  %vm841 = vmor %vm457, %vm777
  %v842 = vsel %vm778, 1, 0
  %v843 = vsel %vm779, 1, 0
  %v844 = vsel %vm780, 1, 0
  %v845 = vsel %vm781, 1, 0
  %v846 = vsel %vm782, 1, 0
  %v847 = vsel %vm783, 1, 0
  %v848 = vsel %vm784, 1, 0
  %v849 = vsel %vm785, 1, 0
  %v850 = vsel %vm786, 1, 0
  %v851 = vsel %vm787, 1, 0
  %v852 = vsel %vm788, 1, 0
  %v853 = vsel %vm789, 1, 0
  %v854 = vsel %vm790, 1, 0
  %v855 = vsel %vm791, 1, 0
  %v856 = vsel %vm792, 1, 0
  %v857 = vsel %vm793, 1, 0
  %v858 = vsel %vm794, 1, 0
  %v859 = vsel %vm795, 1, 0
  %v860 = vsel %vm796, 1, 0
  %v861 = vsel %vm797, 1, 0
  %v862 = vsel %vm798, 1, 0
  %v863 = vsel %vm799, 1, 0
  %v864 = vsel %vm800, 1, 0
  %v865 = vsel %vm801, 1, 0
  %v866 = vsel %vm802, 1, 0
  %v867 = vsel %vm803, 1, 0
  %v868 = vsel %vm804, 1, 0
  %v869 = vsel %vm805, 1, 0
  %v870 = vsel %vm806, 1, 0
  %v871 = vsel %vm807, 1, 0
  %v872 = vsel %vm808, 1, 0
  %v873 = vsel %vm809, 1, 0
  %v874 = vsel %vm810, 1, 0
  %v875 = vsel %vm811, 1, 0
  %v876 = vsel %vm812, 1, 0
  %v877 = vsel %vm813, 1, 0
  %v878 = vsel %vm814, 1, 0
  %v879 = vsel %vm815, 1, 0
  %v880 = vsel %vm816, 1, 0
  %v881 = vsel %vm817, 1, 0
  %v882 = vsel %vm818, 1, 0
  %v883 = vsel %vm819, 1, 0
  %v884 = vsel %vm820, 1, 0
  %v885 = vsel %vm821, 1, 0
  %v886 = vsel %vm822, 1, 0
  %v887 = vsel %vm823, 1, 0
  %v888 = vsel %vm824, 1, 0
  %v889 = vsel %vm825, 1, 0
  %v890 = vsel %vm826, 1, 0
  %v891 = vsel %vm827, 1, 0
  %v892 = vsel %vm828, 1, 0
  %v893 = vsel %vm829, 1, 0
  %v894 = vsel %vm830, 1, 0
  %v895 = vsel %vm831, 1, 0
  %v896 = vsel %vm832, 1, 0
  %v897 = vsel %vm833, 1, 0
  %v898 = vsel %vm834, 1, 0
  %v899 = vsel %vm835, 1, 0
  %v900 = vsel %vm836, 1, 0
  %v901 = vsel %vm837, 1, 0
  %v902 = vsel %vm838, 1, 0
  %v903 = vsel %vm839, 1, 0
  %v904 = vsel %vm840, 1, 0
  %v905 = vsel %vm841, 1, 0
  %v906 = vcvt.s32.f32 %v842
  %v907 = vcvt.s32.f32 %v843
  %v908 = vcvt.s32.f32 %v844
  %v909 = vcvt.s32.f32 %v845
  %v910 = vcvt.s32.f32 %v846
  %v911 = vcvt.s32.f32 %v847
  %v912 = vcvt.s32.f32 %v848
  %v913 = vcvt.s32.f32 %v849
  %v914 = vcvt.s32.f32 %v850
  %v915 = vcvt.s32.f32 %v851
  %v916 = vcvt.s32.f32 %v852
  %v917 = vcvt.s32.f32 %v853
  %v918 = vcvt.s32.f32 %v854
  %v919 = vcvt.s32.f32 %v855
  %v920 = vcvt.s32.f32 %v856
  %v921 = vcvt.s32.f32 %v857
  %v922 = vcvt.s32.f32 %v858
  %v923 = vcvt.s32.f32 %v859
  %v924 = vcvt.s32.f32 %v860
  %v925 = vcvt.s32.f32 %v861
  %v926 = vcvt.s32.f32 %v862
  %v927 = vcvt.s32.f32 %v863
  %v928 = vcvt.s32.f32 %v864
  %v929 = vcvt.s32.f32 %v865
  %v930 = vcvt.s32.f32 %v866
  %v931 = vcvt.s32.f32 %v867
  %v932 = vcvt.s32.f32 %v868
  %v933 = vcvt.s32.f32 %v869
  %v934 = vcvt.s32.f32 %v870
  %v935 = vcvt.s32.f32 %v871
  %v936 = vcvt.s32.f32 %v872
  %v937 = vcvt.s32.f32 %v873
  %v938 = vcvt.s32.f32 %v874
  %v939 = vcvt.s32.f32 %v875
  %v940 = vcvt.s32.f32 %v876
  %v941 = vcvt.s32.f32 %v877
  %v942 = vcvt.s32.f32 %v878
  %v943 = vcvt.s32.f32 %v879
  %v944 = vcvt.s32.f32 %v880
  %v945 = vcvt.s32.f32 %v881
  %v946 = vcvt.s32.f32 %v882
  %v947 = vcvt.s32.f32 %v883
  %v948 = vcvt.s32.f32 %v884
  %v949 = vcvt.s32.f32 %v885
  %v950 = vcvt.s32.f32 %v886
  %v951 = vcvt.s32.f32 %v887
  %v952 = vcvt.s32.f32 %v888
  %v953 = vcvt.s32.f32 %v889
  %v954 = vcvt.s32.f32 %v890
  %v955 = vcvt.s32.f32 %v891
  %v956 = vcvt.s32.f32 %v892
  %v957 = vcvt.s32.f32 %v893
  %v958 = vcvt.s32.f32 %v894
  %v959 = vcvt.s32.f32 %v895
  %v960 = vcvt.s32.f32 %v896
  %v961 = vcvt.s32.f32 %v897
  %v962 = vcvt.s32.f32 %v898
  %v963 = vcvt.s32.f32 %v899
  %v964 = vcvt.s32.f32 %v900
  %v965 = vcvt.s32.f32 %v901
  %v966 = vcvt.s32.f32 %v902
  %v967 = vcvt.s32.f32 %v903
  %v968 = vcvt.s32.f32 %v904
  %v969 = vcvt.s32.f32 %v905
  %v970 = vld [vmem:[%s2] sm:$0xff]
  %v971 = vld [vmem:[%s2 + $0x8] sm:$0xff]
  %v972 = vld [vmem:[%s2 + $0x10] sm:$0xff]
  %v973 = vld [vmem:[%s2 + $0x18] sm:$0xff]
  %vm974 = vcmask 261120
  %v976 = vsel %vm974, %v906, 0
  %v979 = vsel %vm974, %v907, 0
  %v982 = vsel %vm974, %v908, 0
  %v985 = vsel %vm974, %v909, 0
  %v988 = vsel %vm974, %v910, 0
  %v991 = vsel %vm974, %v911, 0
  %v994 = vsel %vm974, %v912, 0
  %v997 = vsel %vm974, %v913, 0
  %v1000 = vsel %vm974, %v914, 0
  %v1003 = vsel %vm974, %v915, 0
  %v1006 = vsel %vm974, %v916, 0
  %v1009 = vsel %vm974, %v917, 0
  %v1012 = vsel %vm974, %v918, 0
  %v1015 = vsel %vm974, %v919, 0
  %v1018 = vsel %vm974, %v920, 0
  %v1021 = vsel %vm974, %v921, 0
  %v1024 = vsel %vm974, %v922, 0
  %v1027 = vsel %vm974, %v923, 0
  %v1030 = vsel %vm974, %v924, 0
  %v1033 = vsel %vm974, %v925, 0
  %v1036 = vsel %vm974, %v926, 0
  %v1039 = vsel %vm974, %v927, 0
  %v1042 = vsel %vm974, %v928, 0
  %v1045 = vsel %vm974, %v929, 0
  %v1048 = vsel %vm974, %v930, 0
  %v1051 = vsel %vm974, %v931, 0
  %v1054 = vsel %vm974, %v932, 0
  %v1057 = vsel %vm974, %v933, 0
  %v1060 = vsel %vm974, %v934, 0
  %v1063 = vsel %vm974, %v935, 0
  %v1066 = vsel %vm974, %v936, 0
  %v1069 = vsel %vm974, %v937, 0
  %v1072 = vsel %vm974, %v938, 0
  %v1075 = vsel %vm974, %v939, 0
  %v1078 = vsel %vm974, %v940, 0
  %v1081 = vsel %vm974, %v941, 0
  %v1084 = vsel %vm974, %v942, 0
  %v1087 = vsel %vm974, %v943, 0
  %v1090 = vsel %vm974, %v944, 0
  %v1093 = vsel %vm974, %v945, 0
  %v1096 = vsel %vm974, %v946, 0
  %v1099 = vsel %vm974, %v947, 0
  %v1102 = vsel %vm974, %v948, 0
  %v1105 = vsel %vm974, %v949, 0
  %v1108 = vsel %vm974, %v950, 0
  %v1111 = vsel %vm974, %v951, 0
  %v1114 = vsel %vm974, %v952, 0
  %v1117 = vsel %vm974, %v953, 0
  %v1120 = vsel %vm974, %v954, 0
  %v1123 = vsel %vm974, %v955, 0
  %v1126 = vsel %vm974, %v956, 0
  %v1129 = vsel %vm974, %v957, 0
  %v1132 = vsel %vm974, %v958, 0
  %v1135 = vsel %vm974, %v959, 0
  %v1138 = vsel %vm974, %v960, 0
  %v1141 = vsel %vm974, %v961, 0
  %v1144 = vsel %vm974, %v962, 0
  %v1147 = vsel %vm974, %v963, 0
  %v1150 = vsel %vm974, %v964, 0
  %v1153 = vsel %vm974, %v965, 0
  %v1156 = vsel %vm974, %v966, 0
  %v1159 = vsel %vm974, %v967, 0
  %v1162 = vsel %vm974, %v968, 0
  %v1165 = vsel %vm974, %v969, 0
  %1167 = vmatpush.msra.mxu0 0.0
  %1168 = vmatpush.msra.mxu0 0.0
  %1169 = vmatpush.msra.mxu0 0.0
  %1170 = vmatpush.msra.mxu0 0.0
  %1171 = vmatpush.msra.mxu0 0.0
  %1172 = vmatpush.msra.mxu0 0.0
  %1173 = vmatpush.msra.mxu0 0.0
  %1174 = vmatpush.msra.mxu0 0.0
  %1175 = vmatpush.msra.mxu0 0.0
  %1176 = vmatpush.msra.mxu0 0.0
  %1177 = vmatpush.msra.mxu0 0.0
  %1178 = vmatpush.msra.mxu0 0.0
  %1179 = vmatpush.msra.mxu0 %v973
  %1180 = vmatpush.msra.mxu0 %v972
  %1181 = vmatpush.msra.mxu0 %v971
  %1182 = vmatpush.msra.mxu0 %v970
  %1183 = vmatmul.f32.gmra.mxu0 %v976
  %v1184 = vpop.f32.mrf.mxu0
  %v1185 = vadd.f32 0.0, %v1184
  %1186 = vmatmul.f32.gmra.mxu0 %v979
  %v1187 = vpop.f32.mrf.mxu0
  %v1188 = vadd.f32 0.0, %v1187
  %1189 = vmatmul.f32.gmra.mxu0 %v982
  %v1190 = vpop.f32.mrf.mxu0
  %v1191 = vadd.f32 0.0, %v1190
  %1192 = vmatmul.f32.gmra.mxu0 %v985
  %v1193 = vpop.f32.mrf.mxu0
  %v1194 = vadd.f32 0.0, %v1193
  %1195 = vmatmul.f32.gmra.mxu0 %v988
  %v1196 = vpop.f32.mrf.mxu0
  %v1197 = vadd.f32 0.0, %v1196
  %1198 = vmatmul.f32.gmra.mxu0 %v991
  %v1199 = vpop.f32.mrf.mxu0
  %v1200 = vadd.f32 0.0, %v1199
  %1201 = vmatmul.f32.gmra.mxu0 %v994
  %v1202 = vpop.f32.mrf.mxu0
  %v1203 = vadd.f32 0.0, %v1202
  %1204 = vmatmul.f32.gmra.mxu0 %v997
  %v1205 = vpop.f32.mrf.mxu0
  %v1206 = vadd.f32 0.0, %v1205
  %1207 = vmatmul.f32.gmra.mxu0 %v1000
  %v1208 = vpop.f32.mrf.mxu0
  %v1209 = vadd.f32 0.0, %v1208
  %1210 = vmatmul.f32.gmra.mxu0 %v1003
  %v1211 = vpop.f32.mrf.mxu0
  %v1212 = vadd.f32 0.0, %v1211
  %1213 = vmatmul.f32.gmra.mxu0 %v1006
  %v1214 = vpop.f32.mrf.mxu0
  %v1215 = vadd.f32 0.0, %v1214
  %1216 = vmatmul.f32.gmra.mxu0 %v1009
  %v1217 = vpop.f32.mrf.mxu0
  %v1218 = vadd.f32 0.0, %v1217
  %1219 = vmatmul.f32.gmra.mxu0 %v1012
  %v1220 = vpop.f32.mrf.mxu0
  %v1221 = vadd.f32 0.0, %v1220
  %1222 = vmatmul.f32.gmra.mxu0 %v1015
  %v1223 = vpop.f32.mrf.mxu0
  %v1224 = vadd.f32 0.0, %v1223
  %1225 = vmatmul.f32.gmra.mxu0 %v1018
  %v1226 = vpop.f32.mrf.mxu0
  %v1227 = vadd.f32 0.0, %v1226
  %1228 = vmatmul.f32.gmra.mxu0 %v1021
  %v1229 = vpop.f32.mrf.mxu0
  %v1230 = vadd.f32 0.0, %v1229
  %1231 = vmatmul.f32.gmra.mxu0 %v1024
  %v1232 = vpop.f32.mrf.mxu0
  %v1233 = vadd.f32 0.0, %v1232
  %1234 = vmatmul.f32.gmra.mxu0 %v1027
  %v1235 = vpop.f32.mrf.mxu0
  %v1236 = vadd.f32 0.0, %v1235
  %1237 = vmatmul.f32.gmra.mxu0 %v1030
  %v1238 = vpop.f32.mrf.mxu0
  %v1239 = vadd.f32 0.0, %v1238
  %1240 = vmatmul.f32.gmra.mxu0 %v1033
  %v1241 = vpop.f32.mrf.mxu0
  %v1242 = vadd.f32 0.0, %v1241
  %1243 = vmatmul.f32.gmra.mxu0 %v1036
  %v1244 = vpop.f32.mrf.mxu0
  %v1245 = vadd.f32 0.0, %v1244
  %1246 = vmatmul.f32.gmra.mxu0 %v1039
  %v1247 = vpop.f32.mrf.mxu0
  %v1248 = vadd.f32 0.0, %v1247
  %1249 = vmatmul.f32.gmra.mxu0 %v1042
  %v1250 = vpop.f32.mrf.mxu0
  %v1251 = vadd.f32 0.0, %v1250
  %1252 = vmatmul.f32.gmra.mxu0 %v1045
  %v1253 = vpop.f32.mrf.mxu0
  %v1254 = vadd.f32 0.0, %v1253
  %1255 = vmatmul.f32.gmra.mxu0 %v1048
  %v1256 = vpop.f32.mrf.mxu0
  %v1257 = vadd.f32 0.0, %v1256
  %1258 = vmatmul.f32.gmra.mxu0 %v1051
  %v1259 = vpop.f32.mrf.mxu0
  %v1260 = vadd.f32 0.0, %v1259
  %1261 = vmatmul.f32.gmra.mxu0 %v1054
  %v1262 = vpop.f32.mrf.mxu0
  %v1263 = vadd.f32 0.0, %v1262
  %1264 = vmatmul.f32.gmra.mxu0 %v1057
  %v1265 = vpop.f32.mrf.mxu0
  %v1266 = vadd.f32 0.0, %v1265
  %1267 = vmatmul.f32.gmra.mxu0 %v1060
  %v1268 = vpop.f32.mrf.mxu0
  %v1269 = vadd.f32 0.0, %v1268
  %1270 = vmatmul.f32.gmra.mxu0 %v1063
  %v1271 = vpop.f32.mrf.mxu0
  %v1272 = vadd.f32 0.0, %v1271
  %1273 = vmatmul.f32.gmra.mxu0 %v1066
  %v1274 = vpop.f32.mrf.mxu0
  %v1275 = vadd.f32 0.0, %v1274
  %1276 = vmatmul.f32.gmra.mxu0 %v1069
  %v1277 = vpop.f32.mrf.mxu0
  %v1278 = vadd.f32 0.0, %v1277
  %1279 = vmatmul.f32.gmra.mxu0 %v1072
  %v1280 = vpop.f32.mrf.mxu0
  %v1281 = vadd.f32 0.0, %v1280
  %1282 = vmatmul.f32.gmra.mxu0 %v1075
  %v1283 = vpop.f32.mrf.mxu0
  %v1284 = vadd.f32 0.0, %v1283
  %1285 = vmatmul.f32.gmra.mxu0 %v1078
  %v1286 = vpop.f32.mrf.mxu0
  %v1287 = vadd.f32 0.0, %v1286
  %1288 = vmatmul.f32.gmra.mxu0 %v1081
  %v1289 = vpop.f32.mrf.mxu0
  %v1290 = vadd.f32 0.0, %v1289
  %1291 = vmatmul.f32.gmra.mxu0 %v1084
  %v1292 = vpop.f32.mrf.mxu0
  %v1293 = vadd.f32 0.0, %v1292
  %1294 = vmatmul.f32.gmra.mxu0 %v1087
  %v1295 = vpop.f32.mrf.mxu0
  %v1296 = vadd.f32 0.0, %v1295
  %1297 = vmatmul.f32.gmra.mxu0 %v1090
  %v1298 = vpop.f32.mrf.mxu0
  %v1299 = vadd.f32 0.0, %v1298
  %1300 = vmatmul.f32.gmra.mxu0 %v1093
  %v1301 = vpop.f32.mrf.mxu0
  %v1302 = vadd.f32 0.0, %v1301
  %1303 = vmatmul.f32.gmra.mxu0 %v1096
  %v1304 = vpop.f32.mrf.mxu0
  %v1305 = vadd.f32 0.0, %v1304
  %1306 = vmatmul.f32.gmra.mxu0 %v1099
  %v1307 = vpop.f32.mrf.mxu0
  %v1308 = vadd.f32 0.0, %v1307
  %1309 = vmatmul.f32.gmra.mxu0 %v1102
  %v1310 = vpop.f32.mrf.mxu0
  %v1311 = vadd.f32 0.0, %v1310
  %1312 = vmatmul.f32.gmra.mxu0 %v1105
  %v1313 = vpop.f32.mrf.mxu0
  %v1314 = vadd.f32 0.0, %v1313
  %1315 = vmatmul.f32.gmra.mxu0 %v1108
  %v1316 = vpop.f32.mrf.mxu0
  %v1317 = vadd.f32 0.0, %v1316
  %1318 = vmatmul.f32.gmra.mxu0 %v1111
  %v1319 = vpop.f32.mrf.mxu0
  %v1320 = vadd.f32 0.0, %v1319
  %1321 = vmatmul.f32.gmra.mxu0 %v1114
  %v1322 = vpop.f32.mrf.mxu0
  %v1323 = vadd.f32 0.0, %v1322
  %1324 = vmatmul.f32.gmra.mxu0 %v1117
  %v1325 = vpop.f32.mrf.mxu0
  %v1326 = vadd.f32 0.0, %v1325
  %1327 = vmatmul.f32.gmra.mxu0 %v1120
  %v1328 = vpop.f32.mrf.mxu0
  %v1329 = vadd.f32 0.0, %v1328
  %1330 = vmatmul.f32.gmra.mxu0 %v1123
  %v1331 = vpop.f32.mrf.mxu0
  %v1332 = vadd.f32 0.0, %v1331
  %1333 = vmatmul.f32.gmra.mxu0 %v1126
  %v1334 = vpop.f32.mrf.mxu0
  %v1335 = vadd.f32 0.0, %v1334
  %1336 = vmatmul.f32.gmra.mxu0 %v1129
  %v1337 = vpop.f32.mrf.mxu0
  %v1338 = vadd.f32 0.0, %v1337
  %1339 = vmatmul.f32.gmra.mxu0 %v1132
  %v1340 = vpop.f32.mrf.mxu0
  %v1341 = vadd.f32 0.0, %v1340
  %1342 = vmatmul.f32.gmra.mxu0 %v1135
  %v1343 = vpop.f32.mrf.mxu0
  %v1344 = vadd.f32 0.0, %v1343
  %1345 = vmatmul.f32.gmra.mxu0 %v1138
  %v1346 = vpop.f32.mrf.mxu0
  %v1347 = vadd.f32 0.0, %v1346
  %1348 = vmatmul.f32.gmra.mxu0 %v1141
  %v1349 = vpop.f32.mrf.mxu0
  %v1350 = vadd.f32 0.0, %v1349
  %1351 = vmatmul.f32.gmra.mxu0 %v1144
  %v1352 = vpop.f32.mrf.mxu0
  %v1353 = vadd.f32 0.0, %v1352
  %1354 = vmatmul.f32.gmra.mxu0 %v1147
  %v1355 = vpop.f32.mrf.mxu0
  %v1356 = vadd.f32 0.0, %v1355
  %1357 = vmatmul.f32.gmra.mxu0 %v1150
  %v1358 = vpop.f32.mrf.mxu0
  %v1359 = vadd.f32 0.0, %v1358
  %1360 = vmatmul.f32.gmra.mxu0 %v1153
  %v1361 = vpop.f32.mrf.mxu0
  %v1362 = vadd.f32 0.0, %v1361
  %1363 = vmatmul.f32.gmra.mxu0 %v1156
  %v1364 = vpop.f32.mrf.mxu0
  %v1365 = vadd.f32 0.0, %v1364
  %1366 = vmatmul.f32.gmra.mxu0 %v1159
  %v1367 = vpop.f32.mrf.mxu0
  %v1368 = vadd.f32 0.0, %v1367
  %1369 = vmatmul.f32.gmra.mxu0 %v1162
  %v1370 = vpop.f32.mrf.mxu0
  %v1371 = vadd.f32 0.0, %v1370
  %1372 = vmatmul.f32.gmra.mxu0 %v1165
  %v1373 = vpop.f32.mrf.mxu0
  %v1374 = vadd.f32 0.0, %v1373
  %1375 = vdwg.mxu0
  %v1376 = vmul.f32 %v1185, %v1185
  %v1377 = vmul.f32 %v1188, %v1188
  %v1378 = vmul.f32 %v1191, %v1191
  %v1379 = vmul.f32 %v1194, %v1194
  %v1380 = vmul.f32 %v1197, %v1197
  %v1381 = vmul.f32 %v1200, %v1200
  %v1382 = vmul.f32 %v1203, %v1203
  %v1383 = vmul.f32 %v1206, %v1206
  %v1384 = vmul.f32 %v1209, %v1209
  %v1385 = vmul.f32 %v1212, %v1212
  %v1386 = vmul.f32 %v1215, %v1215
  %v1387 = vmul.f32 %v1218, %v1218
  %v1388 = vmul.f32 %v1221, %v1221
  %v1389 = vmul.f32 %v1224, %v1224
  %v1390 = vmul.f32 %v1227, %v1227
  %v1391 = vmul.f32 %v1230, %v1230
  %v1392 = vmul.f32 %v1233, %v1233
  %v1393 = vmul.f32 %v1236, %v1236
  %v1394 = vmul.f32 %v1239, %v1239
  %v1395 = vmul.f32 %v1242, %v1242
  %v1396 = vmul.f32 %v1245, %v1245
  %v1397 = vmul.f32 %v1248, %v1248
  %v1398 = vmul.f32 %v1251, %v1251
  %v1399 = vmul.f32 %v1254, %v1254
  %v1400 = vmul.f32 %v1257, %v1257
  %v1401 = vmul.f32 %v1260, %v1260
  %v1402 = vmul.f32 %v1263, %v1263
  %v1403 = vmul.f32 %v1266, %v1266
  %v1404 = vmul.f32 %v1269, %v1269
  %v1405 = vmul.f32 %v1272, %v1272
  %v1406 = vmul.f32 %v1275, %v1275
  %v1407 = vmul.f32 %v1278, %v1278
  %v1408 = vmul.f32 %v1281, %v1281
  %v1409 = vmul.f32 %v1284, %v1284
  %v1410 = vmul.f32 %v1287, %v1287
  %v1411 = vmul.f32 %v1290, %v1290
  %v1412 = vmul.f32 %v1293, %v1293
  %v1413 = vmul.f32 %v1296, %v1296
  %v1414 = vmul.f32 %v1299, %v1299
  %v1415 = vmul.f32 %v1302, %v1302
  %v1416 = vmul.f32 %v1305, %v1305
  %v1417 = vmul.f32 %v1308, %v1308
  %v1418 = vmul.f32 %v1311, %v1311
  %v1419 = vmul.f32 %v1314, %v1314
  %v1420 = vmul.f32 %v1317, %v1317
  %v1421 = vmul.f32 %v1320, %v1320
  %v1422 = vmul.f32 %v1323, %v1323
  %v1423 = vmul.f32 %v1326, %v1326
  %v1424 = vmul.f32 %v1329, %v1329
  %v1425 = vmul.f32 %v1332, %v1332
  %v1426 = vmul.f32 %v1335, %v1335
  %v1427 = vmul.f32 %v1338, %v1338
  %v1428 = vmul.f32 %v1341, %v1341
  %v1429 = vmul.f32 %v1344, %v1344
  %v1430 = vmul.f32 %v1347, %v1347
  %v1431 = vmul.f32 %v1350, %v1350
  %v1432 = vmul.f32 %v1353, %v1353
  %v1433 = vmul.f32 %v1356, %v1356
  %v1434 = vmul.f32 %v1359, %v1359
  %v1435 = vmul.f32 %v1362, %v1362
  %v1436 = vmul.f32 %v1365, %v1365
  %v1437 = vmul.f32 %v1368, %v1368
  %v1438 = vmul.f32 %v1371, %v1371
  %v1439 = vmul.f32 %v1374, %v1374
  %1504 = vrot.lane.b32.xlu0 %v1376, 96
  %v1505 = vpop.permute.xlu0 %1504
  %1506 = vrot.lane.b32.xlu0 %v1377, 96
  %v1507 = vpop.permute.xlu0 %1506
  %1508 = vrot.lane.b32.xlu0 %v1378, 96
  %v1509 = vpop.permute.xlu0 %1508
  %1510 = vrot.lane.b32.xlu0 %v1379, 96
  %v1511 = vpop.permute.xlu0 %1510
  %1512 = vrot.lane.b32.xlu0 %v1380, 96
  %v1513 = vpop.permute.xlu0 %1512
  %1514 = vrot.lane.b32.xlu0 %v1381, 96
  %v1515 = vpop.permute.xlu0 %1514
  %1516 = vrot.lane.b32.xlu0 %v1382, 96
  %v1517 = vpop.permute.xlu0 %1516
  %1518 = vrot.lane.b32.xlu0 %v1383, 96
  %v1519 = vpop.permute.xlu0 %1518
  %1520 = vrot.lane.b32.xlu0 %v1384, 96
  %v1521 = vpop.permute.xlu0 %1520
  %1522 = vrot.lane.b32.xlu0 %v1385, 96
  %v1523 = vpop.permute.xlu0 %1522
  %1524 = vrot.lane.b32.xlu0 %v1386, 96
  %v1525 = vpop.permute.xlu0 %1524
  %1526 = vrot.lane.b32.xlu0 %v1387, 96
  %v1527 = vpop.permute.xlu0 %1526
  %1528 = vrot.lane.b32.xlu0 %v1388, 96
  %v1529 = vpop.permute.xlu0 %1528
  %1530 = vrot.lane.b32.xlu0 %v1389, 96
  %v1531 = vpop.permute.xlu0 %1530
  %1532 = vrot.lane.b32.xlu0 %v1390, 96
  %v1533 = vpop.permute.xlu0 %1532
  %1534 = vrot.lane.b32.xlu0 %v1391, 96
  %v1535 = vpop.permute.xlu0 %1534
  %1536 = vrot.lane.b32.xlu0 %v1392, 96
  %v1537 = vpop.permute.xlu0 %1536
  %1538 = vrot.lane.b32.xlu0 %v1393, 96
  %v1539 = vpop.permute.xlu0 %1538
  %1540 = vrot.lane.b32.xlu0 %v1394, 96
  %v1541 = vpop.permute.xlu0 %1540
  %1542 = vrot.lane.b32.xlu0 %v1395, 96
  %v1543 = vpop.permute.xlu0 %1542
  %1544 = vrot.lane.b32.xlu0 %v1396, 96
  %v1545 = vpop.permute.xlu0 %1544
  %1546 = vrot.lane.b32.xlu0 %v1397, 96
  %v1547 = vpop.permute.xlu0 %1546
  %1548 = vrot.lane.b32.xlu0 %v1398, 96
  %v1549 = vpop.permute.xlu0 %1548
  %1550 = vrot.lane.b32.xlu0 %v1399, 96
  %v1551 = vpop.permute.xlu0 %1550
  %1552 = vrot.lane.b32.xlu0 %v1400, 96
  %v1553 = vpop.permute.xlu0 %1552
  %1554 = vrot.lane.b32.xlu0 %v1401, 96
  %v1555 = vpop.permute.xlu0 %1554
  %1556 = vrot.lane.b32.xlu0 %v1402, 96
  %v1557 = vpop.permute.xlu0 %1556
  %1558 = vrot.lane.b32.xlu0 %v1403, 96
  %v1559 = vpop.permute.xlu0 %1558
  %1560 = vrot.lane.b32.xlu0 %v1404, 96
  %v1561 = vpop.permute.xlu0 %1560
  %1562 = vrot.lane.b32.xlu0 %v1405, 96
  %v1563 = vpop.permute.xlu0 %1562
  %1564 = vrot.lane.b32.xlu0 %v1406, 96
  %v1565 = vpop.permute.xlu0 %1564
  %1566 = vrot.lane.b32.xlu0 %v1407, 96
  %v1567 = vpop.permute.xlu0 %1566
  %1568 = vrot.lane.b32.xlu0 %v1408, 96
  %v1569 = vpop.permute.xlu0 %1568
  %1570 = vrot.lane.b32.xlu0 %v1409, 96
  %v1571 = vpop.permute.xlu0 %1570
  %1572 = vrot.lane.b32.xlu0 %v1410, 96
  %v1573 = vpop.permute.xlu0 %1572
  %1574 = vrot.lane.b32.xlu0 %v1411, 96
  %v1575 = vpop.permute.xlu0 %1574
  %1576 = vrot.lane.b32.xlu0 %v1412, 96
  %v1577 = vpop.permute.xlu0 %1576
  %1578 = vrot.lane.b32.xlu0 %v1413, 96
  %v1579 = vpop.permute.xlu0 %1578
  %1580 = vrot.lane.b32.xlu0 %v1414, 96
  %v1581 = vpop.permute.xlu0 %1580
  %1582 = vrot.lane.b32.xlu0 %v1415, 96
  %v1583 = vpop.permute.xlu0 %1582
  %1584 = vrot.lane.b32.xlu0 %v1416, 96
  %v1585 = vpop.permute.xlu0 %1584
  %1586 = vrot.lane.b32.xlu0 %v1417, 96
  %v1587 = vpop.permute.xlu0 %1586
  %1588 = vrot.lane.b32.xlu0 %v1418, 96
  %v1589 = vpop.permute.xlu0 %1588
  %1590 = vrot.lane.b32.xlu0 %v1419, 96
  %v1591 = vpop.permute.xlu0 %1590
  %1592 = vrot.lane.b32.xlu0 %v1420, 96
  %v1593 = vpop.permute.xlu0 %1592
  %1594 = vrot.lane.b32.xlu0 %v1421, 96
  %v1595 = vpop.permute.xlu0 %1594
  %1596 = vrot.lane.b32.xlu0 %v1422, 96
  %v1597 = vpop.permute.xlu0 %1596
  %1598 = vrot.lane.b32.xlu0 %v1423, 96
  %v1599 = vpop.permute.xlu0 %1598
  %1600 = vrot.lane.b32.xlu0 %v1424, 96
  %v1601 = vpop.permute.xlu0 %1600
  %1602 = vrot.lane.b32.xlu0 %v1425, 96
  %v1603 = vpop.permute.xlu0 %1602
  %1604 = vrot.lane.b32.xlu0 %v1426, 96
  %v1605 = vpop.permute.xlu0 %1604
  %1606 = vrot.lane.b32.xlu0 %v1427, 96
  %v1607 = vpop.permute.xlu0 %1606
  %1608 = vrot.lane.b32.xlu0 %v1428, 96
  %v1609 = vpop.permute.xlu0 %1608
  %1610 = vrot.lane.b32.xlu0 %v1429, 96
  %v1611 = vpop.permute.xlu0 %1610
  %1612 = vrot.lane.b32.xlu0 %v1430, 96
  %v1613 = vpop.permute.xlu0 %1612
  %1614 = vrot.lane.b32.xlu0 %v1431, 96
  %v1615 = vpop.permute.xlu0 %1614
  %1616 = vrot.lane.b32.xlu0 %v1432, 96
  %v1617 = vpop.permute.xlu0 %1616
  %1618 = vrot.lane.b32.xlu0 %v1433, 96
  %v1619 = vpop.permute.xlu0 %1618
  %1620 = vrot.lane.b32.xlu0 %v1434, 96
  %v1621 = vpop.permute.xlu0 %1620
  %1622 = vrot.lane.b32.xlu0 %v1435, 96
  %v1623 = vpop.permute.xlu0 %1622
  %1624 = vrot.lane.b32.xlu0 %v1436, 96
  %v1625 = vpop.permute.xlu0 %1624
  %1626 = vrot.lane.b32.xlu0 %v1437, 96
  %v1627 = vpop.permute.xlu0 %1626
  %1628 = vrot.lane.b32.xlu0 %v1438, 96
  %v1629 = vpop.permute.xlu0 %1628
  %1630 = vrot.lane.b32.xlu0 %v1439, 96
  %v1631 = vpop.permute.xlu0 %1630
  %vm1696 = vcmask 23552
  %v1697 = vsel %vm1696, %v1505, 0.0
  %1698 = vadd.xlane.f32.xlu0 %v1697
  %v1699 = vpop.xlane.xlu0 %1698
  %v1700 = vsel %vm1696, %v1507, 0.0
  %1701 = vadd.xlane.f32.xlu0 %v1700
  %v1702 = vpop.xlane.xlu0 %1701
  %v1703 = vsel %vm1696, %v1509, 0.0
  %1704 = vadd.xlane.f32.xlu0 %v1703
  %v1705 = vpop.xlane.xlu0 %1704
  %v1706 = vsel %vm1696, %v1511, 0.0
  %1707 = vadd.xlane.f32.xlu0 %v1706
  %v1708 = vpop.xlane.xlu0 %1707
  %v1709 = vsel %vm1696, %v1513, 0.0
  %1710 = vadd.xlane.f32.xlu0 %v1709
  %v1711 = vpop.xlane.xlu0 %1710
  %v1712 = vsel %vm1696, %v1515, 0.0
  %1713 = vadd.xlane.f32.xlu0 %v1712
  %v1714 = vpop.xlane.xlu0 %1713
  %v1715 = vsel %vm1696, %v1517, 0.0
  %1716 = vadd.xlane.f32.xlu0 %v1715
  %v1717 = vpop.xlane.xlu0 %1716
  %v1718 = vsel %vm1696, %v1519, 0.0
  %1719 = vadd.xlane.f32.xlu0 %v1718
  %v1720 = vpop.xlane.xlu0 %1719
  %v1721 = vsel %vm1696, %v1521, 0.0
  %1722 = vadd.xlane.f32.xlu0 %v1721
  %v1723 = vpop.xlane.xlu0 %1722
  %v1724 = vsel %vm1696, %v1523, 0.0
  %1725 = vadd.xlane.f32.xlu0 %v1724
  %v1726 = vpop.xlane.xlu0 %1725
  %v1727 = vsel %vm1696, %v1525, 0.0
  %1728 = vadd.xlane.f32.xlu0 %v1727
  %v1729 = vpop.xlane.xlu0 %1728
  %v1730 = vsel %vm1696, %v1527, 0.0
  %1731 = vadd.xlane.f32.xlu0 %v1730
  %v1732 = vpop.xlane.xlu0 %1731
  %v1733 = vsel %vm1696, %v1529, 0.0
  %1734 = vadd.xlane.f32.xlu0 %v1733
  %v1735 = vpop.xlane.xlu0 %1734
  %v1736 = vsel %vm1696, %v1531, 0.0
  %1737 = vadd.xlane.f32.xlu0 %v1736
  %v1738 = vpop.xlane.xlu0 %1737
  %v1739 = vsel %vm1696, %v1533, 0.0
  %1740 = vadd.xlane.f32.xlu0 %v1739
  %v1741 = vpop.xlane.xlu0 %1740
  %v1742 = vsel %vm1696, %v1535, 0.0
  %1743 = vadd.xlane.f32.xlu0 %v1742
  %v1744 = vpop.xlane.xlu0 %1743
  %v1745 = vsel %vm1696, %v1537, 0.0
  %1746 = vadd.xlane.f32.xlu0 %v1745
  %v1747 = vpop.xlane.xlu0 %1746
  %v1748 = vsel %vm1696, %v1539, 0.0
  %1749 = vadd.xlane.f32.xlu0 %v1748
  %v1750 = vpop.xlane.xlu0 %1749
  %v1751 = vsel %vm1696, %v1541, 0.0
  %1752 = vadd.xlane.f32.xlu0 %v1751
  %v1753 = vpop.xlane.xlu0 %1752
  %v1754 = vsel %vm1696, %v1543, 0.0
  %1755 = vadd.xlane.f32.xlu0 %v1754
  %v1756 = vpop.xlane.xlu0 %1755
  %v1757 = vsel %vm1696, %v1545, 0.0
  %1758 = vadd.xlane.f32.xlu0 %v1757
  %v1759 = vpop.xlane.xlu0 %1758
  %v1760 = vsel %vm1696, %v1547, 0.0
  %1761 = vadd.xlane.f32.xlu0 %v1760
  %v1762 = vpop.xlane.xlu0 %1761
  %v1763 = vsel %vm1696, %v1549, 0.0
  %1764 = vadd.xlane.f32.xlu0 %v1763
  %v1765 = vpop.xlane.xlu0 %1764
  %v1766 = vsel %vm1696, %v1551, 0.0
  %1767 = vadd.xlane.f32.xlu0 %v1766
  %v1768 = vpop.xlane.xlu0 %1767
  %v1769 = vsel %vm1696, %v1553, 0.0
  %1770 = vadd.xlane.f32.xlu0 %v1769
  %v1771 = vpop.xlane.xlu0 %1770
  %v1772 = vsel %vm1696, %v1555, 0.0
  %1773 = vadd.xlane.f32.xlu0 %v1772
  %v1774 = vpop.xlane.xlu0 %1773
  %v1775 = vsel %vm1696, %v1557, 0.0
  %1776 = vadd.xlane.f32.xlu0 %v1775
  %v1777 = vpop.xlane.xlu0 %1776
  %v1778 = vsel %vm1696, %v1559, 0.0
  %1779 = vadd.xlane.f32.xlu0 %v1778
  %v1780 = vpop.xlane.xlu0 %1779
  %v1781 = vsel %vm1696, %v1561, 0.0
  %1782 = vadd.xlane.f32.xlu0 %v1781
  %v1783 = vpop.xlane.xlu0 %1782
  %v1784 = vsel %vm1696, %v1563, 0.0
  %1785 = vadd.xlane.f32.xlu0 %v1784
  %v1786 = vpop.xlane.xlu0 %1785
  %v1787 = vsel %vm1696, %v1565, 0.0
  %1788 = vadd.xlane.f32.xlu0 %v1787
  %v1789 = vpop.xlane.xlu0 %1788
  %v1790 = vsel %vm1696, %v1567, 0.0
  %1791 = vadd.xlane.f32.xlu0 %v1790
  %v1792 = vpop.xlane.xlu0 %1791
  %v1793 = vsel %vm1696, %v1569, 0.0
  %1794 = vadd.xlane.f32.xlu0 %v1793
  %v1795 = vpop.xlane.xlu0 %1794
  %v1796 = vsel %vm1696, %v1571, 0.0
  %1797 = vadd.xlane.f32.xlu0 %v1796
  %v1798 = vpop.xlane.xlu0 %1797
  %v1799 = vsel %vm1696, %v1573, 0.0
  %1800 = vadd.xlane.f32.xlu0 %v1799
  %v1801 = vpop.xlane.xlu0 %1800
  %v1802 = vsel %vm1696, %v1575, 0.0
  %1803 = vadd.xlane.f32.xlu0 %v1802
  %v1804 = vpop.xlane.xlu0 %1803
  %v1805 = vsel %vm1696, %v1577, 0.0
  %1806 = vadd.xlane.f32.xlu0 %v1805
  %v1807 = vpop.xlane.xlu0 %1806
  %v1808 = vsel %vm1696, %v1579, 0.0
  %1809 = vadd.xlane.f32.xlu0 %v1808
  %v1810 = vpop.xlane.xlu0 %1809
  %v1811 = vsel %vm1696, %v1581, 0.0
  %1812 = vadd.xlane.f32.xlu0 %v1811
  %v1813 = vpop.xlane.xlu0 %1812
  %v1814 = vsel %vm1696, %v1583, 0.0
  %1815 = vadd.xlane.f32.xlu0 %v1814
  %v1816 = vpop.xlane.xlu0 %1815
  %v1817 = vsel %vm1696, %v1585, 0.0
  %1818 = vadd.xlane.f32.xlu0 %v1817
  %v1819 = vpop.xlane.xlu0 %1818
  %v1820 = vsel %vm1696, %v1587, 0.0
  %1821 = vadd.xlane.f32.xlu0 %v1820
  %v1822 = vpop.xlane.xlu0 %1821
  %v1823 = vsel %vm1696, %v1589, 0.0
  %1824 = vadd.xlane.f32.xlu0 %v1823
  %v1825 = vpop.xlane.xlu0 %1824
  %v1826 = vsel %vm1696, %v1591, 0.0
  %1827 = vadd.xlane.f32.xlu0 %v1826
  %v1828 = vpop.xlane.xlu0 %1827
  %v1829 = vsel %vm1696, %v1593, 0.0
  %1830 = vadd.xlane.f32.xlu0 %v1829
  %v1831 = vpop.xlane.xlu0 %1830
  %v1832 = vsel %vm1696, %v1595, 0.0
  %1833 = vadd.xlane.f32.xlu0 %v1832
  %v1834 = vpop.xlane.xlu0 %1833
  %v1835 = vsel %vm1696, %v1597, 0.0
  %1836 = vadd.xlane.f32.xlu0 %v1835
  %v1837 = vpop.xlane.xlu0 %1836
  %v1838 = vsel %vm1696, %v1599, 0.0
  %1839 = vadd.xlane.f32.xlu0 %v1838
  %v1840 = vpop.xlane.xlu0 %1839
  %v1841 = vsel %vm1696, %v1601, 0.0
  %1842 = vadd.xlane.f32.xlu0 %v1841
  %v1843 = vpop.xlane.xlu0 %1842
  %v1844 = vsel %vm1696, %v1603, 0.0
  %1845 = vadd.xlane.f32.xlu0 %v1844
  %v1846 = vpop.xlane.xlu0 %1845
  %v1847 = vsel %vm1696, %v1605, 0.0
  %1848 = vadd.xlane.f32.xlu0 %v1847
  %v1849 = vpop.xlane.xlu0 %1848
  %v1850 = vsel %vm1696, %v1607, 0.0
  %1851 = vadd.xlane.f32.xlu0 %v1850
  %v1852 = vpop.xlane.xlu0 %1851
  %v1853 = vsel %vm1696, %v1609, 0.0
  %1854 = vadd.xlane.f32.xlu0 %v1853
  %v1855 = vpop.xlane.xlu0 %1854
  %v1856 = vsel %vm1696, %v1611, 0.0
  %1857 = vadd.xlane.f32.xlu0 %v1856
  %v1858 = vpop.xlane.xlu0 %1857
  %v1859 = vsel %vm1696, %v1613, 0.0
  %1860 = vadd.xlane.f32.xlu0 %v1859
  %v1861 = vpop.xlane.xlu0 %1860
  %v1862 = vsel %vm1696, %v1615, 0.0
  %1863 = vadd.xlane.f32.xlu0 %v1862
  %v1864 = vpop.xlane.xlu0 %1863
  %v1865 = vsel %vm1696, %v1617, 0.0
  %1866 = vadd.xlane.f32.xlu0 %v1865
  %v1867 = vpop.xlane.xlu0 %1866
  %v1868 = vsel %vm1696, %v1619, 0.0
  %1869 = vadd.xlane.f32.xlu0 %v1868
  %v1870 = vpop.xlane.xlu0 %1869
  %v1871 = vsel %vm1696, %v1621, 0.0
  %1872 = vadd.xlane.f32.xlu0 %v1871
  %v1873 = vpop.xlane.xlu0 %1872
  %v1874 = vsel %vm1696, %v1623, 0.0
  %1875 = vadd.xlane.f32.xlu0 %v1874
  %v1876 = vpop.xlane.xlu0 %1875
  %v1877 = vsel %vm1696, %v1625, 0.0
  %1878 = vadd.xlane.f32.xlu0 %v1877
  %v1879 = vpop.xlane.xlu0 %1878
  %v1880 = vsel %vm1696, %v1627, 0.0
  %1881 = vadd.xlane.f32.xlu0 %v1880
  %v1882 = vpop.xlane.xlu0 %1881
  %v1883 = vsel %vm1696, %v1629, 0.0
  %1884 = vadd.xlane.f32.xlu0 %v1883
  %v1885 = vpop.xlane.xlu0 %1884
  %v1886 = vsel %vm1696, %v1631, 0.0
  %1887 = vadd.xlane.f32.xlu0 %v1886
  %v1888 = vpop.xlane.xlu0 %1887
  %v1889 = vld [vmem:[%s6] sm:$0x1]
  %v1891 = vperm.slane %v1889, 0
  %v1893 = vmul.f32 %v1699, %v1891
  %v1894 = vmul.f32 %v1702, %v1891
  %v1895 = vmul.f32 %v1705, %v1891
  %v1896 = vmul.f32 %v1708, %v1891
  %v1897 = vmul.f32 %v1711, %v1891
  %v1898 = vmul.f32 %v1714, %v1891
  %v1899 = vmul.f32 %v1717, %v1891
  %v1900 = vmul.f32 %v1720, %v1891
  %v1901 = vmul.f32 %v1723, %v1891
  %v1902 = vmul.f32 %v1726, %v1891
  %v1903 = vmul.f32 %v1729, %v1891
  %v1904 = vmul.f32 %v1732, %v1891
  %v1905 = vmul.f32 %v1735, %v1891
  %v1906 = vmul.f32 %v1738, %v1891
  %v1907 = vmul.f32 %v1741, %v1891
  %v1908 = vmul.f32 %v1744, %v1891
  %v1909 = vmul.f32 %v1747, %v1891
  %v1910 = vmul.f32 %v1750, %v1891
  %v1911 = vmul.f32 %v1753, %v1891
  %v1912 = vmul.f32 %v1756, %v1891
  %v1913 = vmul.f32 %v1759, %v1891
  %v1914 = vmul.f32 %v1762, %v1891
  %v1915 = vmul.f32 %v1765, %v1891
  %v1916 = vmul.f32 %v1768, %v1891
  %v1917 = vmul.f32 %v1771, %v1891
  %v1918 = vmul.f32 %v1774, %v1891
  %v1919 = vmul.f32 %v1777, %v1891
  %v1920 = vmul.f32 %v1780, %v1891
  %v1921 = vmul.f32 %v1783, %v1891
  %v1922 = vmul.f32 %v1786, %v1891
  %v1923 = vmul.f32 %v1789, %v1891
  %v1924 = vmul.f32 %v1792, %v1891
  %v1925 = vmul.f32 %v1795, %v1891
  %v1926 = vmul.f32 %v1798, %v1891
  %v1927 = vmul.f32 %v1801, %v1891
  %v1928 = vmul.f32 %v1804, %v1891
  %v1929 = vmul.f32 %v1807, %v1891
  %v1930 = vmul.f32 %v1810, %v1891
  %v1931 = vmul.f32 %v1813, %v1891
  %v1932 = vmul.f32 %v1816, %v1891
  %v1933 = vmul.f32 %v1819, %v1891
  %v1934 = vmul.f32 %v1822, %v1891
  %v1935 = vmul.f32 %v1825, %v1891
  %v1936 = vmul.f32 %v1828, %v1891
  %v1937 = vmul.f32 %v1831, %v1891
  %v1938 = vmul.f32 %v1834, %v1891
  %v1939 = vmul.f32 %v1837, %v1891
  %v1940 = vmul.f32 %v1840, %v1891
  %v1941 = vmul.f32 %v1843, %v1891
  %v1942 = vmul.f32 %v1846, %v1891
  %v1943 = vmul.f32 %v1849, %v1891
  %v1944 = vmul.f32 %v1852, %v1891
  %v1945 = vmul.f32 %v1855, %v1891
  %v1946 = vmul.f32 %v1858, %v1891
  %v1947 = vmul.f32 %v1861, %v1891
  %v1948 = vmul.f32 %v1864, %v1891
  %v1949 = vmul.f32 %v1867, %v1891
  %v1950 = vmul.f32 %v1870, %v1891
  %v1951 = vmul.f32 %v1873, %v1891
  %v1952 = vmul.f32 %v1876, %v1891
  %v1953 = vmul.f32 %v1879, %v1891
  %v1954 = vmul.f32 %v1882, %v1891
  %v1955 = vmul.f32 %v1885, %v1891
  %v1956 = vmul.f32 %v1888, %v1891
  %v1957 = vadd.f32 %v1185, %v1893
  %v1958 = vadd.f32 %v1188, %v1894
  %v1959 = vadd.f32 %v1191, %v1895
  %v1960 = vadd.f32 %v1194, %v1896
  %v1961 = vadd.f32 %v1197, %v1897
  %v1962 = vadd.f32 %v1200, %v1898
  %v1963 = vadd.f32 %v1203, %v1899
  %v1964 = vadd.f32 %v1206, %v1900
  %v1965 = vadd.f32 %v1209, %v1901
  %v1966 = vadd.f32 %v1212, %v1902
  %v1967 = vadd.f32 %v1215, %v1903
  %v1968 = vadd.f32 %v1218, %v1904
  %v1969 = vadd.f32 %v1221, %v1905
  %v1970 = vadd.f32 %v1224, %v1906
  %v1971 = vadd.f32 %v1227, %v1907
  %v1972 = vadd.f32 %v1230, %v1908
  %v1973 = vadd.f32 %v1233, %v1909
  %v1974 = vadd.f32 %v1236, %v1910
  %v1975 = vadd.f32 %v1239, %v1911
  %v1976 = vadd.f32 %v1242, %v1912
  %v1977 = vadd.f32 %v1245, %v1913
  %v1978 = vadd.f32 %v1248, %v1914
  %v1979 = vadd.f32 %v1251, %v1915
  %v1980 = vadd.f32 %v1254, %v1916
  %v1981 = vadd.f32 %v1257, %v1917
  %v1982 = vadd.f32 %v1260, %v1918
  %v1983 = vadd.f32 %v1263, %v1919
  %v1984 = vadd.f32 %v1266, %v1920
  %v1985 = vadd.f32 %v1269, %v1921
  %v1986 = vadd.f32 %v1272, %v1922
  %v1987 = vadd.f32 %v1275, %v1923
  %v1988 = vadd.f32 %v1278, %v1924
  %v1989 = vadd.f32 %v1281, %v1925
  %v1990 = vadd.f32 %v1284, %v1926
  %v1991 = vadd.f32 %v1287, %v1927
  %v1992 = vadd.f32 %v1290, %v1928
  %v1993 = vadd.f32 %v1293, %v1929
  %v1994 = vadd.f32 %v1296, %v1930
  %v1995 = vadd.f32 %v1299, %v1931
  %v1996 = vadd.f32 %v1302, %v1932
  %v1997 = vadd.f32 %v1305, %v1933
  %v1998 = vadd.f32 %v1308, %v1934
  %v1999 = vadd.f32 %v1311, %v1935
  %v2000 = vadd.f32 %v1314, %v1936
  %v2001 = vadd.f32 %v1317, %v1937
  %v2002 = vadd.f32 %v1320, %v1938
  %v2003 = vadd.f32 %v1323, %v1939
  %v2004 = vadd.f32 %v1326, %v1940
  %v2005 = vadd.f32 %v1329, %v1941
  %v2006 = vadd.f32 %v1332, %v1942
  %v2007 = vadd.f32 %v1335, %v1943
  %v2008 = vadd.f32 %v1338, %v1944
  %v2009 = vadd.f32 %v1341, %v1945
  %v2010 = vadd.f32 %v1344, %v1946
  %v2011 = vadd.f32 %v1347, %v1947
  %v2012 = vadd.f32 %v1350, %v1948
  %v2013 = vadd.f32 %v1353, %v1949
  %v2014 = vadd.f32 %v1356, %v1950
  %v2015 = vadd.f32 %v1359, %v1951
  %v2016 = vadd.f32 %v1362, %v1952
  %v2017 = vadd.f32 %v1365, %v1953
  %v2018 = vadd.f32 %v1368, %v1954
  %v2019 = vadd.f32 %v1371, %v1955
  %v2020 = vadd.f32 %v1374, %v1956
  %v2021 = vpack.c.bf16 %v73, %v72
  %v2022 = vpack.c.bf16 %v75, %v74
  %v2023 = vpack.c.bf16 %v77, %v76
  %v2024 = vpack.c.bf16 %v79, %v78
  %v2025 = vpack.c.bf16 %v81, %v80
  %v2026 = vpack.c.bf16 %v83, %v82
  %v2027 = vpack.c.bf16 %v85, %v84
  %v2028 = vpack.c.bf16 %v87, %v86
  %v2029 = vpack.c.bf16 %v89, %v88
  %v2030 = vpack.c.bf16 %v91, %v90
  %v2031 = vpack.c.bf16 %v93, %v92
  %v2032 = vpack.c.bf16 %v95, %v94
  %v2033 = vpack.c.bf16 %v97, %v96
  %v2034 = vpack.c.bf16 %v99, %v98
  %v2035 = vpack.c.bf16 %v101, %v100
  %v2036 = vpack.c.bf16 %v103, %v102
  %v2037 = vpack.c.bf16 %v105, %v104
  %v2038 = vpack.c.bf16 %v107, %v106
  %v2039 = vpack.c.bf16 %v109, %v108
  %v2040 = vpack.c.bf16 %v111, %v110
  %v2041 = vpack.c.bf16 %v113, %v112
  %v2042 = vpack.c.bf16 %v115, %v114
  %v2043 = vpack.c.bf16 %v117, %v116
  %v2044 = vpack.c.bf16 %v119, %v118
  %v2045 = vpack.c.bf16 %v121, %v120
  %v2046 = vpack.c.bf16 %v123, %v122
  %v2047 = vpack.c.bf16 %v125, %v124
  %v2048 = vpack.c.bf16 %v127, %v126
  %v2049 = vpack.c.bf16 %v129, %v128
  %v2050 = vpack.c.bf16 %v131, %v130
  %v2051 = vpack.c.bf16 %v133, %v132
  %v2052 = vpack.c.bf16 %v135, %v134
  %v2053 = vld [vmem:[%s7] sm:$0x3]
  %vm2054 = vcmask 31744
  %v2056 = vsel %vm2054, %v2021, 0
  %v2059 = vsel %vm2054, %v2022, 0
  %v2062 = vsel %vm2054, %v2023, 0
  %v2065 = vsel %vm2054, %v2024, 0
  %v2068 = vsel %vm2054, %v2025, 0
  %v2071 = vsel %vm2054, %v2026, 0
  %v2074 = vsel %vm2054, %v2027, 0
  %v2077 = vsel %vm2054, %v2028, 0
  %v2080 = vsel %vm2054, %v2029, 0
  %v2083 = vsel %vm2054, %v2030, 0
  %v2086 = vsel %vm2054, %v2031, 0
  %v2089 = vsel %vm2054, %v2032, 0
  %v2092 = vsel %vm2054, %v2033, 0
  %v2095 = vsel %vm2054, %v2034, 0
  %v2098 = vsel %vm2054, %v2035, 0
  %v2101 = vsel %vm2054, %v2036, 0
  %v2104 = vsel %vm2054, %v2037, 0
  %v2107 = vsel %vm2054, %v2038, 0
  %v2110 = vsel %vm2054, %v2039, 0
  %v2113 = vsel %vm2054, %v2040, 0
  %v2116 = vsel %vm2054, %v2041, 0
  %v2119 = vsel %vm2054, %v2042, 0
  %v2122 = vsel %vm2054, %v2043, 0
  %v2125 = vsel %vm2054, %v2044, 0
  %v2128 = vsel %vm2054, %v2045, 0
  %v2131 = vsel %vm2054, %v2046, 0
  %v2134 = vsel %vm2054, %v2047, 0
  %v2137 = vsel %vm2054, %v2048, 0
  %v2140 = vsel %vm2054, %v2049, 0
  %v2143 = vsel %vm2054, %v2050, 0
  %v2146 = vsel %vm2054, %v2051, 0
  %v2149 = vsel %vm2054, %v2052, 0
  %vm2151 = vcmask 1041408
  %v2153 = vsel %vm2151, %v2053, 0
  %2155 = vmatpush.bf16.msra.mxu0 0
  %2156 = vmatpush.bf16.msra.mxu0 0
  %2157 = vmatpush.bf16.msra.mxu0 0
  %2158 = vmatpush.bf16.msra.mxu0 0
  %2159 = vmatpush.bf16.msra.mxu0 0
  %2160 = vmatpush.bf16.msra.mxu0 0
  %2161 = vmatpush.bf16.msra.mxu0 0
  %2162 = vmatpush.bf16.msra.mxu0 %v2153
  %2163 = vmatmul.bf16.gmra.mxu0 %v2056
  %v2164 = vpop.f32.mrf.mxu0
  %v2165 = vadd.f32 0.0, %v2164
  %v2166 = vpop.f32.mrf.mxu0
  %v2167 = vadd.f32 0.0, %v2166
  %2168 = vmatmul.bf16.gmra.mxu0 %v2059
  %v2169 = vpop.f32.mrf.mxu0
  %v2170 = vadd.f32 0.0, %v2169
  %v2171 = vpop.f32.mrf.mxu0
  %v2172 = vadd.f32 0.0, %v2171
  %2173 = vmatmul.bf16.gmra.mxu0 %v2062
  %v2174 = vpop.f32.mrf.mxu0
  %v2175 = vadd.f32 0.0, %v2174
  %v2176 = vpop.f32.mrf.mxu0
  %v2177 = vadd.f32 0.0, %v2176
  %2178 = vmatmul.bf16.gmra.mxu0 %v2065
  %v2179 = vpop.f32.mrf.mxu0
  %v2180 = vadd.f32 0.0, %v2179
  %v2181 = vpop.f32.mrf.mxu0
  %v2182 = vadd.f32 0.0, %v2181
  %2183 = vmatmul.bf16.gmra.mxu0 %v2068
  %v2184 = vpop.f32.mrf.mxu0
  %v2185 = vadd.f32 0.0, %v2184
  %v2186 = vpop.f32.mrf.mxu0
  %v2187 = vadd.f32 0.0, %v2186
  %2188 = vmatmul.bf16.gmra.mxu0 %v2071
  %v2189 = vpop.f32.mrf.mxu0
  %v2190 = vadd.f32 0.0, %v2189
  %v2191 = vpop.f32.mrf.mxu0
  %v2192 = vadd.f32 0.0, %v2191
  %2193 = vmatmul.bf16.gmra.mxu0 %v2074
  %v2194 = vpop.f32.mrf.mxu0
  %v2195 = vadd.f32 0.0, %v2194
  %v2196 = vpop.f32.mrf.mxu0
  %v2197 = vadd.f32 0.0, %v2196
  %2198 = vmatmul.bf16.gmra.mxu0 %v2077
  %v2199 = vpop.f32.mrf.mxu0
  %v2200 = vadd.f32 0.0, %v2199
  %v2201 = vpop.f32.mrf.mxu0
  %v2202 = vadd.f32 0.0, %v2201
  %2203 = vmatmul.bf16.gmra.mxu0 %v2080
  %v2204 = vpop.f32.mrf.mxu0
  %v2205 = vadd.f32 0.0, %v2204
  %v2206 = vpop.f32.mrf.mxu0
  %v2207 = vadd.f32 0.0, %v2206
  %2208 = vmatmul.bf16.gmra.mxu0 %v2083
  %v2209 = vpop.f32.mrf.mxu0
  %v2210 = vadd.f32 0.0, %v2209
  %v2211 = vpop.f32.mrf.mxu0
  %v2212 = vadd.f32 0.0, %v2211
  %2213 = vmatmul.bf16.gmra.mxu0 %v2086
  %v2214 = vpop.f32.mrf.mxu0
  %v2215 = vadd.f32 0.0, %v2214
  %v2216 = vpop.f32.mrf.mxu0
  %v2217 = vadd.f32 0.0, %v2216
  %2218 = vmatmul.bf16.gmra.mxu0 %v2089
  %v2219 = vpop.f32.mrf.mxu0
  %v2220 = vadd.f32 0.0, %v2219
  %v2221 = vpop.f32.mrf.mxu0
  %v2222 = vadd.f32 0.0, %v2221
  %2223 = vmatmul.bf16.gmra.mxu0 %v2092
  %v2224 = vpop.f32.mrf.mxu0
  %v2225 = vadd.f32 0.0, %v2224
  %v2226 = vpop.f32.mrf.mxu0
  %v2227 = vadd.f32 0.0, %v2226
  %2228 = vmatmul.bf16.gmra.mxu0 %v2095
  %v2229 = vpop.f32.mrf.mxu0
  %v2230 = vadd.f32 0.0, %v2229
  %v2231 = vpop.f32.mrf.mxu0
  %v2232 = vadd.f32 0.0, %v2231
  %2233 = vmatmul.bf16.gmra.mxu0 %v2098
  %v2234 = vpop.f32.mrf.mxu0
  %v2235 = vadd.f32 0.0, %v2234
  %v2236 = vpop.f32.mrf.mxu0
  %v2237 = vadd.f32 0.0, %v2236
  %2238 = vmatmul.bf16.gmra.mxu0 %v2101
  %v2239 = vpop.f32.mrf.mxu0
  %v2240 = vadd.f32 0.0, %v2239
  %v2241 = vpop.f32.mrf.mxu0
  %v2242 = vadd.f32 0.0, %v2241
  %2243 = vmatmul.bf16.gmra.mxu0 %v2104
  %v2244 = vpop.f32.mrf.mxu0
  %v2245 = vadd.f32 0.0, %v2244
  %v2246 = vpop.f32.mrf.mxu0
  %v2247 = vadd.f32 0.0, %v2246
  %2248 = vmatmul.bf16.gmra.mxu0 %v2107
  %v2249 = vpop.f32.mrf.mxu0
  %v2250 = vadd.f32 0.0, %v2249
  %v2251 = vpop.f32.mrf.mxu0
  %v2252 = vadd.f32 0.0, %v2251
  %2253 = vmatmul.bf16.gmra.mxu0 %v2110
  %v2254 = vpop.f32.mrf.mxu0
  %v2255 = vadd.f32 0.0, %v2254
  %v2256 = vpop.f32.mrf.mxu0
  %v2257 = vadd.f32 0.0, %v2256
  %2258 = vmatmul.bf16.gmra.mxu0 %v2113
  %v2259 = vpop.f32.mrf.mxu0
  %v2260 = vadd.f32 0.0, %v2259
  %v2261 = vpop.f32.mrf.mxu0
  %v2262 = vadd.f32 0.0, %v2261
  %2263 = vmatmul.bf16.gmra.mxu0 %v2116
  %v2264 = vpop.f32.mrf.mxu0
  %v2265 = vadd.f32 0.0, %v2264
  %v2266 = vpop.f32.mrf.mxu0
  %v2267 = vadd.f32 0.0, %v2266
  %2268 = vmatmul.bf16.gmra.mxu0 %v2119
  %v2269 = vpop.f32.mrf.mxu0
  %v2270 = vadd.f32 0.0, %v2269
  %v2271 = vpop.f32.mrf.mxu0
  %v2272 = vadd.f32 0.0, %v2271
  %2273 = vmatmul.bf16.gmra.mxu0 %v2122
  %v2274 = vpop.f32.mrf.mxu0
  %v2275 = vadd.f32 0.0, %v2274
  %v2276 = vpop.f32.mrf.mxu0
  %v2277 = vadd.f32 0.0, %v2276
  %2278 = vmatmul.bf16.gmra.mxu0 %v2125
  %v2279 = vpop.f32.mrf.mxu0
  %v2280 = vadd.f32 0.0, %v2279
  %v2281 = vpop.f32.mrf.mxu0
  %v2282 = vadd.f32 0.0, %v2281
  %2283 = vmatmul.bf16.gmra.mxu0 %v2128
  %v2284 = vpop.f32.mrf.mxu0
  %v2285 = vadd.f32 0.0, %v2284
  %v2286 = vpop.f32.mrf.mxu0
  %v2287 = vadd.f32 0.0, %v2286
  %2288 = vmatmul.bf16.gmra.mxu0 %v2131
  %v2289 = vpop.f32.mrf.mxu0
  %v2290 = vadd.f32 0.0, %v2289
  %v2291 = vpop.f32.mrf.mxu0
  %v2292 = vadd.f32 0.0, %v2291
  %2293 = vmatmul.bf16.gmra.mxu0 %v2134
  %v2294 = vpop.f32.mrf.mxu0
  %v2295 = vadd.f32 0.0, %v2294
  %v2296 = vpop.f32.mrf.mxu0
  %v2297 = vadd.f32 0.0, %v2296
  %2298 = vmatmul.bf16.gmra.mxu0 %v2137
  %v2299 = vpop.f32.mrf.mxu0
  %v2300 = vadd.f32 0.0, %v2299
  %v2301 = vpop.f32.mrf.mxu0
  %v2302 = vadd.f32 0.0, %v2301
  %2303 = vmatmul.bf16.gmra.mxu0 %v2140
  %v2304 = vpop.f32.mrf.mxu0
  %v2305 = vadd.f32 0.0, %v2304
  %v2306 = vpop.f32.mrf.mxu0
  %v2307 = vadd.f32 0.0, %v2306
  %2308 = vmatmul.bf16.gmra.mxu0 %v2143
  %v2309 = vpop.f32.mrf.mxu0
  %v2310 = vadd.f32 0.0, %v2309
  %v2311 = vpop.f32.mrf.mxu0
  %v2312 = vadd.f32 0.0, %v2311
  %2313 = vmatmul.bf16.gmra.mxu0 %v2146
  %v2314 = vpop.f32.mrf.mxu0
  %v2315 = vadd.f32 0.0, %v2314
  %v2316 = vpop.f32.mrf.mxu0
  %v2317 = vadd.f32 0.0, %v2316
  %2318 = vmatmul.bf16.gmra.mxu0 %v2149
  %v2319 = vpop.f32.mrf.mxu0
  %v2320 = vadd.f32 0.0, %v2319
  %v2321 = vpop.f32.mrf.mxu0
  %v2322 = vadd.f32 0.0, %v2321
  %2323 = vdwg.mxu0
  %v2324 = vadd.f32 %v1957, %v2165
  %v2325 = vadd.f32 %v1958, %v2167
  %v2326 = vadd.f32 %v1959, %v2170
  %v2327 = vadd.f32 %v1960, %v2172
  %v2328 = vadd.f32 %v1961, %v2175
  %v2329 = vadd.f32 %v1962, %v2177
  %v2330 = vadd.f32 %v1963, %v2180
  %v2331 = vadd.f32 %v1964, %v2182
  %v2332 = vadd.f32 %v1965, %v2185
  %v2333 = vadd.f32 %v1966, %v2187
  %v2334 = vadd.f32 %v1967, %v2190
  %v2335 = vadd.f32 %v1968, %v2192
  %v2336 = vadd.f32 %v1969, %v2195
  %v2337 = vadd.f32 %v1970, %v2197
  %v2338 = vadd.f32 %v1971, %v2200
  %v2339 = vadd.f32 %v1972, %v2202
  %v2340 = vadd.f32 %v1973, %v2205
  %v2341 = vadd.f32 %v1974, %v2207
  %v2342 = vadd.f32 %v1975, %v2210
  %v2343 = vadd.f32 %v1976, %v2212
  %v2344 = vadd.f32 %v1977, %v2215
  %v2345 = vadd.f32 %v1978, %v2217
  %v2346 = vadd.f32 %v1979, %v2220
  %v2347 = vadd.f32 %v1980, %v2222
  %v2348 = vadd.f32 %v1981, %v2225
  %v2349 = vadd.f32 %v1982, %v2227
  %v2350 = vadd.f32 %v1983, %v2230
  %v2351 = vadd.f32 %v1984, %v2232
  %v2352 = vadd.f32 %v1985, %v2235
  %v2353 = vadd.f32 %v1986, %v2237
  %v2354 = vadd.f32 %v1987, %v2240
  %v2355 = vadd.f32 %v1988, %v2242
  %v2356 = vadd.f32 %v1989, %v2245
  %v2357 = vadd.f32 %v1990, %v2247
  %v2358 = vadd.f32 %v1991, %v2250
  %v2359 = vadd.f32 %v1992, %v2252
  %v2360 = vadd.f32 %v1993, %v2255
  %v2361 = vadd.f32 %v1994, %v2257
  %v2362 = vadd.f32 %v1995, %v2260
  %v2363 = vadd.f32 %v1996, %v2262
  %v2364 = vadd.f32 %v1997, %v2265
  %v2365 = vadd.f32 %v1998, %v2267
  %v2366 = vadd.f32 %v1999, %v2270
  %v2367 = vadd.f32 %v2000, %v2272
  %v2368 = vadd.f32 %v2001, %v2275
  %v2369 = vadd.f32 %v2002, %v2277
  %v2370 = vadd.f32 %v2003, %v2280
  %v2371 = vadd.f32 %v2004, %v2282
  %v2372 = vadd.f32 %v2005, %v2285
  %v2373 = vadd.f32 %v2006, %v2287
  %v2374 = vadd.f32 %v2007, %v2290
  %v2375 = vadd.f32 %v2008, %v2292
  %v2376 = vadd.f32 %v2009, %v2295
  %v2377 = vadd.f32 %v2010, %v2297
  %v2378 = vadd.f32 %v2011, %v2300
  %v2379 = vadd.f32 %v2012, %v2302
  %v2380 = vadd.f32 %v2013, %v2305
  %v2381 = vadd.f32 %v2014, %v2307
  %v2382 = vadd.f32 %v2015, %v2310
  %v2383 = vadd.f32 %v2016, %v2312
  %v2384 = vadd.f32 %v2017, %v2315
  %v2385 = vadd.f32 %v2018, %v2317
  %v2386 = vadd.f32 %v2019, %v2320
  %v2387 = vadd.f32 %v2020, %v2322
  %v2388 = vld [vmem:[%s8] sm:$0x1]
  %v2390 = vperm.slane %v2388, 0
  %v2392 = vadd.f32 %v2324, %v2390
  %v2393 = vadd.f32 %v2325, %v2390
  %v2394 = vadd.f32 %v2326, %v2390
  %v2395 = vadd.f32 %v2327, %v2390
  %v2396 = vadd.f32 %v2328, %v2390
  %v2397 = vadd.f32 %v2329, %v2390
  %v2398 = vadd.f32 %v2330, %v2390
  %v2399 = vadd.f32 %v2331, %v2390
  %v2400 = vadd.f32 %v2332, %v2390
  %v2401 = vadd.f32 %v2333, %v2390
  %v2402 = vadd.f32 %v2334, %v2390
  %v2403 = vadd.f32 %v2335, %v2390
  %v2404 = vadd.f32 %v2336, %v2390
  %v2405 = vadd.f32 %v2337, %v2390
  %v2406 = vadd.f32 %v2338, %v2390
  %v2407 = vadd.f32 %v2339, %v2390
  %v2408 = vadd.f32 %v2340, %v2390
  %v2409 = vadd.f32 %v2341, %v2390
  %v2410 = vadd.f32 %v2342, %v2390
  %v2411 = vadd.f32 %v2343, %v2390
  %v2412 = vadd.f32 %v2344, %v2390
  %v2413 = vadd.f32 %v2345, %v2390
  %v2414 = vadd.f32 %v2346, %v2390
  %v2415 = vadd.f32 %v2347, %v2390
  %v2416 = vadd.f32 %v2348, %v2390
  %v2417 = vadd.f32 %v2349, %v2390
  %v2418 = vadd.f32 %v2350, %v2390
  %v2419 = vadd.f32 %v2351, %v2390
  %v2420 = vadd.f32 %v2352, %v2390
  %v2421 = vadd.f32 %v2353, %v2390
  %v2422 = vadd.f32 %v2354, %v2390
  %v2423 = vadd.f32 %v2355, %v2390
  %v2424 = vadd.f32 %v2356, %v2390
  %v2425 = vadd.f32 %v2357, %v2390
  %v2426 = vadd.f32 %v2358, %v2390
  %v2427 = vadd.f32 %v2359, %v2390
  %v2428 = vadd.f32 %v2360, %v2390
  %v2429 = vadd.f32 %v2361, %v2390
  %v2430 = vadd.f32 %v2362, %v2390
  %v2431 = vadd.f32 %v2363, %v2390
  %v2432 = vadd.f32 %v2364, %v2390
  %v2433 = vadd.f32 %v2365, %v2390
  %v2434 = vadd.f32 %v2366, %v2390
  %v2435 = vadd.f32 %v2367, %v2390
  %v2436 = vadd.f32 %v2368, %v2390
  %v2437 = vadd.f32 %v2369, %v2390
  %v2438 = vadd.f32 %v2370, %v2390
  %v2439 = vadd.f32 %v2371, %v2390
  %v2440 = vadd.f32 %v2372, %v2390
  %v2441 = vadd.f32 %v2373, %v2390
  %v2442 = vadd.f32 %v2374, %v2390
  %v2443 = vadd.f32 %v2375, %v2390
  %v2444 = vadd.f32 %v2376, %v2390
  %v2445 = vadd.f32 %v2377, %v2390
  %v2446 = vadd.f32 %v2378, %v2390
  %v2447 = vadd.f32 %v2379, %v2390
  %v2448 = vadd.f32 %v2380, %v2390
  %v2449 = vadd.f32 %v2381, %v2390
  %v2450 = vadd.f32 %v2382, %v2390
  %v2451 = vadd.f32 %v2383, %v2390
  %v2452 = vadd.f32 %v2384, %v2390
  %v2453 = vadd.f32 %v2385, %v2390
  %v2454 = vadd.f32 %v2386, %v2390
  %v2455 = vadd.f32 %v2387, %v2390
  %v2456 = vmul.f32 %v2392, 0.5
  %v2457 = vmul.f32 %v2393, 0.5
  %v2458 = vmul.f32 %v2394, 0.5
  %v2459 = vmul.f32 %v2395, 0.5
  %v2460 = vmul.f32 %v2396, 0.5
  %v2461 = vmul.f32 %v2397, 0.5
  %v2462 = vmul.f32 %v2398, 0.5
  %v2463 = vmul.f32 %v2399, 0.5
  %v2464 = vmul.f32 %v2400, 0.5
  %v2465 = vmul.f32 %v2401, 0.5
  %v2466 = vmul.f32 %v2402, 0.5
  %v2467 = vmul.f32 %v2403, 0.5
  %v2468 = vmul.f32 %v2404, 0.5
  %v2469 = vmul.f32 %v2405, 0.5
  %v2470 = vmul.f32 %v2406, 0.5
  %v2471 = vmul.f32 %v2407, 0.5
  %v2472 = vmul.f32 %v2408, 0.5
  %v2473 = vmul.f32 %v2409, 0.5
  %v2474 = vmul.f32 %v2410, 0.5
  %v2475 = vmul.f32 %v2411, 0.5
  %v2476 = vmul.f32 %v2412, 0.5
  %v2477 = vmul.f32 %v2413, 0.5
  %v2478 = vmul.f32 %v2414, 0.5
  %v2479 = vmul.f32 %v2415, 0.5
  %v2480 = vmul.f32 %v2416, 0.5
  %v2481 = vmul.f32 %v2417, 0.5
  %v2482 = vmul.f32 %v2418, 0.5
  %v2483 = vmul.f32 %v2419, 0.5
  %v2484 = vmul.f32 %v2420, 0.5
  %v2485 = vmul.f32 %v2421, 0.5
  %v2486 = vmul.f32 %v2422, 0.5
  %v2487 = vmul.f32 %v2423, 0.5
  %v2488 = vmul.f32 %v2424, 0.5
  %v2489 = vmul.f32 %v2425, 0.5
  %v2490 = vmul.f32 %v2426, 0.5
  %v2491 = vmul.f32 %v2427, 0.5
  %v2492 = vmul.f32 %v2428, 0.5
  %v2493 = vmul.f32 %v2429, 0.5
  %v2494 = vmul.f32 %v2430, 0.5
  %v2495 = vmul.f32 %v2431, 0.5
  %v2496 = vmul.f32 %v2432, 0.5
  %v2497 = vmul.f32 %v2433, 0.5
  %v2498 = vmul.f32 %v2434, 0.5
  %v2499 = vmul.f32 %v2435, 0.5
  %v2500 = vmul.f32 %v2436, 0.5
  %v2501 = vmul.f32 %v2437, 0.5
  %v2502 = vmul.f32 %v2438, 0.5
  %v2503 = vmul.f32 %v2439, 0.5
  %v2504 = vmul.f32 %v2440, 0.5
  %v2505 = vmul.f32 %v2441, 0.5
  %v2506 = vmul.f32 %v2442, 0.5
  %v2507 = vmul.f32 %v2443, 0.5
  %v2508 = vmul.f32 %v2444, 0.5
  %v2509 = vmul.f32 %v2445, 0.5
  %v2510 = vmul.f32 %v2446, 0.5
  %v2511 = vmul.f32 %v2447, 0.5
  %v2512 = vmul.f32 %v2448, 0.5
  %v2513 = vmul.f32 %v2449, 0.5
  %v2514 = vmul.f32 %v2450, 0.5
  %v2515 = vmul.f32 %v2451, 0.5
  %v2516 = vmul.f32 %v2452, 0.5
  %v2517 = vmul.f32 %v2453, 0.5
  %v2518 = vmul.f32 %v2454, 0.5
  %v2519 = vmul.f32 %v2455, 0.5
  %v2520 = vtanh.pop %v2456
  %v2521 = vtanh.pop %v2457
  %v2522 = vtanh.pop %v2458
  %v2523 = vtanh.pop %v2459
  %v2524 = vtanh.pop %v2460
  %v2525 = vtanh.pop %v2461
  %v2526 = vtanh.pop %v2462
  %v2527 = vtanh.pop %v2463
  %v2528 = vtanh.pop %v2464
  %v2529 = vtanh.pop %v2465
  %v2530 = vtanh.pop %v2466
  %v2531 = vtanh.pop %v2467
  %v2532 = vtanh.pop %v2468
  %v2533 = vtanh.pop %v2469
  %v2534 = vtanh.pop %v2470
  %v2535 = vtanh.pop %v2471
  %v2536 = vtanh.pop %v2472
  %v2537 = vtanh.pop %v2473
  %v2538 = vtanh.pop %v2474
  %v2539 = vtanh.pop %v2475
  %v2540 = vtanh.pop %v2476
  %v2541 = vtanh.pop %v2477
  %v2542 = vtanh.pop %v2478
  %v2543 = vtanh.pop %v2479
  %v2544 = vtanh.pop %v2480
  %v2545 = vtanh.pop %v2481
  %v2546 = vtanh.pop %v2482
  %v2547 = vtanh.pop %v2483
  %v2548 = vtanh.pop %v2484
  %v2549 = vtanh.pop %v2485
  %v2550 = vtanh.pop %v2486
  %v2551 = vtanh.pop %v2487
  %v2552 = vtanh.pop %v2488
  %v2553 = vtanh.pop %v2489
  %v2554 = vtanh.pop %v2490
  %v2555 = vtanh.pop %v2491
  %v2556 = vtanh.pop %v2492
  %v2557 = vtanh.pop %v2493
  %v2558 = vtanh.pop %v2494
  %v2559 = vtanh.pop %v2495
  %v2560 = vtanh.pop %v2496
  %v2561 = vtanh.pop %v2497
  %v2562 = vtanh.pop %v2498
  %v2563 = vtanh.pop %v2499
  %v2564 = vtanh.pop %v2500
  %v2565 = vtanh.pop %v2501
  %v2566 = vtanh.pop %v2502
  %v2567 = vtanh.pop %v2503
  %v2568 = vtanh.pop %v2504
  %v2569 = vtanh.pop %v2505
  %v2570 = vtanh.pop %v2506
  %v2571 = vtanh.pop %v2507
  %v2572 = vtanh.pop %v2508
  %v2573 = vtanh.pop %v2509
  %v2574 = vtanh.pop %v2510
  %v2575 = vtanh.pop %v2511
  %v2576 = vtanh.pop %v2512
  %v2577 = vtanh.pop %v2513
  %v2578 = vtanh.pop %v2514
  %v2579 = vtanh.pop %v2515
  %v2580 = vtanh.pop %v2516
  %v2581 = vtanh.pop %v2517
  %v2582 = vtanh.pop %v2518
  %v2583 = vtanh.pop %v2519
  %v2584 = vmul.f32 %v2520, 0.5
  %v2585 = vmul.f32 %v2521, 0.5
  %v2586 = vmul.f32 %v2522, 0.5
  %v2587 = vmul.f32 %v2523, 0.5
  %v2588 = vmul.f32 %v2524, 0.5
  %v2589 = vmul.f32 %v2525, 0.5
  %v2590 = vmul.f32 %v2526, 0.5
  %v2591 = vmul.f32 %v2527, 0.5
  %v2592 = vmul.f32 %v2528, 0.5
  %v2593 = vmul.f32 %v2529, 0.5
  %v2594 = vmul.f32 %v2530, 0.5
  %v2595 = vmul.f32 %v2531, 0.5
  %v2596 = vmul.f32 %v2532, 0.5
  %v2597 = vmul.f32 %v2533, 0.5
  %v2598 = vmul.f32 %v2534, 0.5
  %v2599 = vmul.f32 %v2535, 0.5
  %v2600 = vmul.f32 %v2536, 0.5
  %v2601 = vmul.f32 %v2537, 0.5
  %v2602 = vmul.f32 %v2538, 0.5
  %v2603 = vmul.f32 %v2539, 0.5
  %v2604 = vmul.f32 %v2540, 0.5
  %v2605 = vmul.f32 %v2541, 0.5
  %v2606 = vmul.f32 %v2542, 0.5
  %v2607 = vmul.f32 %v2543, 0.5
  %v2608 = vmul.f32 %v2544, 0.5
  %v2609 = vmul.f32 %v2545, 0.5
  %v2610 = vmul.f32 %v2546, 0.5
  %v2611 = vmul.f32 %v2547, 0.5
  %v2612 = vmul.f32 %v2548, 0.5
  %v2613 = vmul.f32 %v2549, 0.5
  %v2614 = vmul.f32 %v2550, 0.5
  %v2615 = vmul.f32 %v2551, 0.5
  %v2616 = vmul.f32 %v2552, 0.5
  %v2617 = vmul.f32 %v2553, 0.5
  %v2618 = vmul.f32 %v2554, 0.5
  %v2619 = vmul.f32 %v2555, 0.5
  %v2620 = vmul.f32 %v2556, 0.5
  %v2621 = vmul.f32 %v2557, 0.5
  %v2622 = vmul.f32 %v2558, 0.5
  %v2623 = vmul.f32 %v2559, 0.5
  %v2624 = vmul.f32 %v2560, 0.5
  %v2625 = vmul.f32 %v2561, 0.5
  %v2626 = vmul.f32 %v2562, 0.5
  %v2627 = vmul.f32 %v2563, 0.5
  %v2628 = vmul.f32 %v2564, 0.5
  %v2629 = vmul.f32 %v2565, 0.5
  %v2630 = vmul.f32 %v2566, 0.5
  %v2631 = vmul.f32 %v2567, 0.5
  %v2632 = vmul.f32 %v2568, 0.5
  %v2633 = vmul.f32 %v2569, 0.5
  %v2634 = vmul.f32 %v2570, 0.5
  %v2635 = vmul.f32 %v2571, 0.5
  %v2636 = vmul.f32 %v2572, 0.5
  %v2637 = vmul.f32 %v2573, 0.5
  %v2638 = vmul.f32 %v2574, 0.5
  %v2639 = vmul.f32 %v2575, 0.5
  %v2640 = vmul.f32 %v2576, 0.5
  %v2641 = vmul.f32 %v2577, 0.5
  %v2642 = vmul.f32 %v2578, 0.5
  %v2643 = vmul.f32 %v2579, 0.5
  %v2644 = vmul.f32 %v2580, 0.5
  %v2645 = vmul.f32 %v2581, 0.5
  %v2646 = vmul.f32 %v2582, 0.5
  %v2647 = vmul.f32 %v2583, 0.5
  %v2648 = vadd.f32 %v2584, 0.5
  %v2649 = vadd.f32 %v2585, 0.5
  %v2650 = vadd.f32 %v2586, 0.5
  %v2651 = vadd.f32 %v2587, 0.5
  %v2652 = vadd.f32 %v2588, 0.5
  %v2653 = vadd.f32 %v2589, 0.5
  %v2654 = vadd.f32 %v2590, 0.5
  %v2655 = vadd.f32 %v2591, 0.5
  %v2656 = vadd.f32 %v2592, 0.5
  %v2657 = vadd.f32 %v2593, 0.5
  %v2658 = vadd.f32 %v2594, 0.5
  %v2659 = vadd.f32 %v2595, 0.5
  %v2660 = vadd.f32 %v2596, 0.5
  %v2661 = vadd.f32 %v2597, 0.5
  %v2662 = vadd.f32 %v2598, 0.5
  %v2663 = vadd.f32 %v2599, 0.5
  %v2664 = vadd.f32 %v2600, 0.5
  %v2665 = vadd.f32 %v2601, 0.5
  %v2666 = vadd.f32 %v2602, 0.5
  %v2667 = vadd.f32 %v2603, 0.5
  %v2668 = vadd.f32 %v2604, 0.5
  %v2669 = vadd.f32 %v2605, 0.5
  %v2670 = vadd.f32 %v2606, 0.5
  %v2671 = vadd.f32 %v2607, 0.5
  %v2672 = vadd.f32 %v2608, 0.5
  %v2673 = vadd.f32 %v2609, 0.5
  %v2674 = vadd.f32 %v2610, 0.5
  %v2675 = vadd.f32 %v2611, 0.5
  %v2676 = vadd.f32 %v2612, 0.5
  %v2677 = vadd.f32 %v2613, 0.5
  %v2678 = vadd.f32 %v2614, 0.5
  %v2679 = vadd.f32 %v2615, 0.5
  %v2680 = vadd.f32 %v2616, 0.5
  %v2681 = vadd.f32 %v2617, 0.5
  %v2682 = vadd.f32 %v2618, 0.5
  %v2683 = vadd.f32 %v2619, 0.5
  %v2684 = vadd.f32 %v2620, 0.5
  %v2685 = vadd.f32 %v2621, 0.5
  %v2686 = vadd.f32 %v2622, 0.5
  %v2687 = vadd.f32 %v2623, 0.5
  %v2688 = vadd.f32 %v2624, 0.5
  %v2689 = vadd.f32 %v2625, 0.5
  %v2690 = vadd.f32 %v2626, 0.5
  %v2691 = vadd.f32 %v2627, 0.5
  %v2692 = vadd.f32 %v2628, 0.5
  %v2693 = vadd.f32 %v2629, 0.5
  %v2694 = vadd.f32 %v2630, 0.5
  %v2695 = vadd.f32 %v2631, 0.5
  %v2696 = vadd.f32 %v2632, 0.5
  %v2697 = vadd.f32 %v2633, 0.5
  %v2698 = vadd.f32 %v2634, 0.5
  %v2699 = vadd.f32 %v2635, 0.5
  %v2700 = vadd.f32 %v2636, 0.5
  %v2701 = vadd.f32 %v2637, 0.5
  %v2702 = vadd.f32 %v2638, 0.5
  %v2703 = vadd.f32 %v2639, 0.5
  %v2704 = vadd.f32 %v2640, 0.5
  %v2705 = vadd.f32 %v2641, 0.5
  %v2706 = vadd.f32 %v2642, 0.5
  %v2707 = vadd.f32 %v2643, 0.5
  %v2708 = vadd.f32 %v2644, 0.5
  %v2709 = vadd.f32 %v2645, 0.5
  %v2710 = vadd.f32 %v2646, 0.5
  %v2711 = vadd.f32 %v2647, 0.5
  %v2712 = vmul.f32 %v2392, %v2648
  %v2713 = vmul.f32 %v2393, %v2649
  %v2714 = vmul.f32 %v2394, %v2650
  %v2715 = vmul.f32 %v2395, %v2651
  %v2716 = vmul.f32 %v2396, %v2652
  %v2717 = vmul.f32 %v2397, %v2653
  %v2718 = vmul.f32 %v2398, %v2654
  %v2719 = vmul.f32 %v2399, %v2655
  %v2720 = vmul.f32 %v2400, %v2656
  %v2721 = vmul.f32 %v2401, %v2657
  %v2722 = vmul.f32 %v2402, %v2658
  %v2723 = vmul.f32 %v2403, %v2659
  %v2724 = vmul.f32 %v2404, %v2660
  %v2725 = vmul.f32 %v2405, %v2661
  %v2726 = vmul.f32 %v2406, %v2662
  %v2727 = vmul.f32 %v2407, %v2663
  %v2728 = vmul.f32 %v2408, %v2664
  %v2729 = vmul.f32 %v2409, %v2665
  %v2730 = vmul.f32 %v2410, %v2666
  %v2731 = vmul.f32 %v2411, %v2667
  %v2732 = vmul.f32 %v2412, %v2668
  %v2733 = vmul.f32 %v2413, %v2669
  %v2734 = vmul.f32 %v2414, %v2670
  %v2735 = vmul.f32 %v2415, %v2671
  %v2736 = vmul.f32 %v2416, %v2672
  %v2737 = vmul.f32 %v2417, %v2673
  %v2738 = vmul.f32 %v2418, %v2674
  %v2739 = vmul.f32 %v2419, %v2675
  %v2740 = vmul.f32 %v2420, %v2676
  %v2741 = vmul.f32 %v2421, %v2677
  %v2742 = vmul.f32 %v2422, %v2678
  %v2743 = vmul.f32 %v2423, %v2679
  %v2744 = vmul.f32 %v2424, %v2680
  %v2745 = vmul.f32 %v2425, %v2681
  %v2746 = vmul.f32 %v2426, %v2682
  %v2747 = vmul.f32 %v2427, %v2683
  %v2748 = vmul.f32 %v2428, %v2684
  %v2749 = vmul.f32 %v2429, %v2685
  %v2750 = vmul.f32 %v2430, %v2686
  %v2751 = vmul.f32 %v2431, %v2687
  %v2752 = vmul.f32 %v2432, %v2688
  %v2753 = vmul.f32 %v2433, %v2689
  %v2754 = vmul.f32 %v2434, %v2690
  %v2755 = vmul.f32 %v2435, %v2691
  %v2756 = vmul.f32 %v2436, %v2692
  %v2757 = vmul.f32 %v2437, %v2693
  %v2758 = vmul.f32 %v2438, %v2694
  %v2759 = vmul.f32 %v2439, %v2695
  %v2760 = vmul.f32 %v2440, %v2696
  %v2761 = vmul.f32 %v2441, %v2697
  %v2762 = vmul.f32 %v2442, %v2698
  %v2763 = vmul.f32 %v2443, %v2699
  %v2764 = vmul.f32 %v2444, %v2700
  %v2765 = vmul.f32 %v2445, %v2701
  %v2766 = vmul.f32 %v2446, %v2702
  %v2767 = vmul.f32 %v2447, %v2703
  %v2768 = vmul.f32 %v2448, %v2704
  %v2769 = vmul.f32 %v2449, %v2705
  %v2770 = vmul.f32 %v2450, %v2706
  %v2771 = vmul.f32 %v2451, %v2707
  %v2772 = vmul.f32 %v2452, %v2708
  %v2773 = vmul.f32 %v2453, %v2709
  %v2774 = vmul.f32 %v2454, %v2710
  %v2775 = vmul.f32 %v2455, %v2711
  %v2776 = vpack.c.bf16 %v2713, %v2712
  %v2777 = vpack.c.bf16 %v2715, %v2714
  %v2778 = vpack.c.bf16 %v2717, %v2716
  %v2779 = vpack.c.bf16 %v2719, %v2718
  %v2780 = vpack.c.bf16 %v2721, %v2720
  %v2781 = vpack.c.bf16 %v2723, %v2722
  %v2782 = vpack.c.bf16 %v2725, %v2724
  %v2783 = vpack.c.bf16 %v2727, %v2726
  %v2784 = vpack.c.bf16 %v2729, %v2728
  %v2785 = vpack.c.bf16 %v2731, %v2730
  %v2786 = vpack.c.bf16 %v2733, %v2732
  %v2787 = vpack.c.bf16 %v2735, %v2734
  %v2788 = vpack.c.bf16 %v2737, %v2736
  %v2789 = vpack.c.bf16 %v2739, %v2738
  %v2790 = vpack.c.bf16 %v2741, %v2740
  %v2791 = vpack.c.bf16 %v2743, %v2742
  %v2792 = vpack.c.bf16 %v2745, %v2744
  %v2793 = vpack.c.bf16 %v2747, %v2746
  %v2794 = vpack.c.bf16 %v2749, %v2748
  %v2795 = vpack.c.bf16 %v2751, %v2750
  %v2796 = vpack.c.bf16 %v2753, %v2752
  %v2797 = vpack.c.bf16 %v2755, %v2754
  %v2798 = vpack.c.bf16 %v2757, %v2756
  %v2799 = vpack.c.bf16 %v2759, %v2758
  %v2800 = vpack.c.bf16 %v2761, %v2760
  %v2801 = vpack.c.bf16 %v2763, %v2762
  %v2802 = vpack.c.bf16 %v2765, %v2764
  %v2803 = vpack.c.bf16 %v2767, %v2766
  %v2804 = vpack.c.bf16 %v2769, %v2768
  %v2805 = vpack.c.bf16 %v2771, %v2770
  %v2806 = vpack.c.bf16 %v2773, %v2772
  %v2807 = vpack.c.bf16 %v2775, %v2774
  %v2808 = vld [vmem:[%s9] sm:$0xf]
  %v2809 = vld [vmem:[%s9 + $0x4] sm:$0xf]
  %v2810 = vld [vmem:[%s9 + $0x8] sm:$0xf]
  %v2811 = vld [vmem:[%s9 + $0xc] sm:$0xf]
  %v2812 = vld [vmem:[%s10] sm:$0x1]
  %v2814 = vperm.slane %v2812, 0
  %v2820 = vunpack.c.l.b16 %v2808
  %v2821 = vunpack.c.l.b16 %v2809
  %v2822 = vunpack.c.l.b16 %v2810
  %v2823 = vunpack.c.l.b16 %v2811
  %v2824 = vpack.c.b16 %v2821, %v2820
  %v2825 = vpack.c.b16 %v2823, %v2822
  %v2829 = vsel %vm974, %v2776, 0
  %v2832 = vsel %vm974, %v2777, 0
  %v2835 = vsel %vm974, %v2778, 0
  %v2838 = vsel %vm974, %v2779, 0
  %v2841 = vsel %vm974, %v2780, 0
  %v2844 = vsel %vm974, %v2781, 0
  %v2847 = vsel %vm974, %v2782, 0
  %v2850 = vsel %vm974, %v2783, 0
  %v2853 = vsel %vm974, %v2784, 0
  %v2856 = vsel %vm974, %v2785, 0
  %v2859 = vsel %vm974, %v2786, 0
  %v2862 = vsel %vm974, %v2787, 0
  %v2865 = vsel %vm974, %v2788, 0
  %v2868 = vsel %vm974, %v2789, 0
  %v2871 = vsel %vm974, %v2790, 0
  %v2874 = vsel %vm974, %v2791, 0
  %v2877 = vsel %vm974, %v2792, 0
  %v2880 = vsel %vm974, %v2793, 0
  %v2883 = vsel %vm974, %v2794, 0
  %v2886 = vsel %vm974, %v2795, 0
  %v2889 = vsel %vm974, %v2796, 0
  %v2892 = vsel %vm974, %v2797, 0
  %v2895 = vsel %vm974, %v2798, 0
  %v2898 = vsel %vm974, %v2799, 0
  %v2901 = vsel %vm974, %v2800, 0
  %v2904 = vsel %vm974, %v2801, 0
  %v2907 = vsel %vm974, %v2802, 0
  %v2910 = vsel %vm974, %v2803, 0
  %v2913 = vsel %vm974, %v2804, 0
  %v2916 = vsel %vm974, %v2805, 0
  %v2919 = vsel %vm974, %v2806, 0
  %v2922 = vsel %vm974, %v2807, 0
  %2924 = vmatpush.bf16.msra.mxu0 0
  %2925 = vmatpush.bf16.msra.mxu0 0
  %2926 = vmatpush.bf16.msra.mxu0 0
  %2927 = vmatpush.bf16.msra.mxu0 0
  %2928 = vmatpush.bf16.msra.mxu0 0
  %2929 = vmatpush.bf16.msra.mxu0 0
  %2930 = vmatpush.bf16.msra.mxu0 %v2825
  %2931 = vmatpush.bf16.msra.mxu0 %v2824
  %2932 = vmatmul.bf16.gmra.mxu0 %v2829
  %v2933 = vpop.f32.mrf.mxu0
  %v2934 = vadd.f32 %v2814, %v2933
  %v2935 = vpop.f32.mrf.mxu0
  %v2936 = vadd.f32 %v2814, %v2935
  %2937 = vmatmul.bf16.gmra.mxu0 %v2832
  %v2938 = vpop.f32.mrf.mxu0
  %v2939 = vadd.f32 %v2814, %v2938
  %v2940 = vpop.f32.mrf.mxu0
  %v2941 = vadd.f32 %v2814, %v2940
  %2942 = vmatmul.bf16.gmra.mxu0 %v2835
  %v2943 = vpop.f32.mrf.mxu0
  %v2944 = vadd.f32 %v2814, %v2943
  %v2945 = vpop.f32.mrf.mxu0
  %v2946 = vadd.f32 %v2814, %v2945
  %2947 = vmatmul.bf16.gmra.mxu0 %v2838
  %v2948 = vpop.f32.mrf.mxu0
  %v2949 = vadd.f32 %v2814, %v2948
  %v2950 = vpop.f32.mrf.mxu0
  %v2951 = vadd.f32 %v2814, %v2950
  %2952 = vmatmul.bf16.gmra.mxu0 %v2841
  %v2953 = vpop.f32.mrf.mxu0
  %v2954 = vadd.f32 %v2814, %v2953
  %v2955 = vpop.f32.mrf.mxu0
  %v2956 = vadd.f32 %v2814, %v2955
  %2957 = vmatmul.bf16.gmra.mxu0 %v2844
  %v2958 = vpop.f32.mrf.mxu0
  %v2959 = vadd.f32 %v2814, %v2958
  %v2960 = vpop.f32.mrf.mxu0
  %v2961 = vadd.f32 %v2814, %v2960
  %2962 = vmatmul.bf16.gmra.mxu0 %v2847
  %v2963 = vpop.f32.mrf.mxu0
  %v2964 = vadd.f32 %v2814, %v2963
  %v2965 = vpop.f32.mrf.mxu0
  %v2966 = vadd.f32 %v2814, %v2965
  %2967 = vmatmul.bf16.gmra.mxu0 %v2850
  %v2968 = vpop.f32.mrf.mxu0
  %v2969 = vadd.f32 %v2814, %v2968
  %v2970 = vpop.f32.mrf.mxu0
  %v2971 = vadd.f32 %v2814, %v2970
  %2972 = vmatmul.bf16.gmra.mxu0 %v2853
  %v2973 = vpop.f32.mrf.mxu0
  %v2974 = vadd.f32 %v2814, %v2973
  %v2975 = vpop.f32.mrf.mxu0
  %v2976 = vadd.f32 %v2814, %v2975
  %2977 = vmatmul.bf16.gmra.mxu0 %v2856
  %v2978 = vpop.f32.mrf.mxu0
  %v2979 = vadd.f32 %v2814, %v2978
  %v2980 = vpop.f32.mrf.mxu0
  %v2981 = vadd.f32 %v2814, %v2980
  %2982 = vmatmul.bf16.gmra.mxu0 %v2859
  %v2983 = vpop.f32.mrf.mxu0
  %v2984 = vadd.f32 %v2814, %v2983
  %v2985 = vpop.f32.mrf.mxu0
  %v2986 = vadd.f32 %v2814, %v2985
  %2987 = vmatmul.bf16.gmra.mxu0 %v2862
  %v2988 = vpop.f32.mrf.mxu0
  %v2989 = vadd.f32 %v2814, %v2988
  %v2990 = vpop.f32.mrf.mxu0
  %v2991 = vadd.f32 %v2814, %v2990
  %2992 = vmatmul.bf16.gmra.mxu0 %v2865
  %v2993 = vpop.f32.mrf.mxu0
  %v2994 = vadd.f32 %v2814, %v2993
  %v2995 = vpop.f32.mrf.mxu0
  %v2996 = vadd.f32 %v2814, %v2995
  %2997 = vmatmul.bf16.gmra.mxu0 %v2868
  %v2998 = vpop.f32.mrf.mxu0
  %v2999 = vadd.f32 %v2814, %v2998
  %v3000 = vpop.f32.mrf.mxu0
  %v3001 = vadd.f32 %v2814, %v3000
  %3002 = vmatmul.bf16.gmra.mxu0 %v2871
  %v3003 = vpop.f32.mrf.mxu0
  %v3004 = vadd.f32 %v2814, %v3003
  %v3005 = vpop.f32.mrf.mxu0
  %v3006 = vadd.f32 %v2814, %v3005
  %3007 = vmatmul.bf16.gmra.mxu0 %v2874
  %v3008 = vpop.f32.mrf.mxu0
  %v3009 = vadd.f32 %v2814, %v3008
  %v3010 = vpop.f32.mrf.mxu0
  %v3011 = vadd.f32 %v2814, %v3010
  %3012 = vmatmul.bf16.gmra.mxu0 %v2877
  %v3013 = vpop.f32.mrf.mxu0
  %v3014 = vadd.f32 %v2814, %v3013
  %v3015 = vpop.f32.mrf.mxu0
  %v3016 = vadd.f32 %v2814, %v3015
  %3017 = vmatmul.bf16.gmra.mxu0 %v2880
  %v3018 = vpop.f32.mrf.mxu0
  %v3019 = vadd.f32 %v2814, %v3018
  %v3020 = vpop.f32.mrf.mxu0
  %v3021 = vadd.f32 %v2814, %v3020
  %3022 = vmatmul.bf16.gmra.mxu0 %v2883
  %v3023 = vpop.f32.mrf.mxu0
  %v3024 = vadd.f32 %v2814, %v3023
  %v3025 = vpop.f32.mrf.mxu0
  %v3026 = vadd.f32 %v2814, %v3025
  %3027 = vmatmul.bf16.gmra.mxu0 %v2886
  %v3028 = vpop.f32.mrf.mxu0
  %v3029 = vadd.f32 %v2814, %v3028
  %v3030 = vpop.f32.mrf.mxu0
  %v3031 = vadd.f32 %v2814, %v3030
  %3032 = vmatmul.bf16.gmra.mxu0 %v2889
  %v3033 = vpop.f32.mrf.mxu0
  %v3034 = vadd.f32 %v2814, %v3033
  %v3035 = vpop.f32.mrf.mxu0
  %v3036 = vadd.f32 %v2814, %v3035
  %3037 = vmatmul.bf16.gmra.mxu0 %v2892
  %v3038 = vpop.f32.mrf.mxu0
  %v3039 = vadd.f32 %v2814, %v3038
  %v3040 = vpop.f32.mrf.mxu0
  %v3041 = vadd.f32 %v2814, %v3040
  %3042 = vmatmul.bf16.gmra.mxu0 %v2895
  %v3043 = vpop.f32.mrf.mxu0
  %v3044 = vadd.f32 %v2814, %v3043
  %v3045 = vpop.f32.mrf.mxu0
  %v3046 = vadd.f32 %v2814, %v3045
  %3047 = vmatmul.bf16.gmra.mxu0 %v2898
  %v3048 = vpop.f32.mrf.mxu0
  %v3049 = vadd.f32 %v2814, %v3048
  %v3050 = vpop.f32.mrf.mxu0
  %v3051 = vadd.f32 %v2814, %v3050
  %3052 = vmatmul.bf16.gmra.mxu0 %v2901
  %v3053 = vpop.f32.mrf.mxu0
  %v3054 = vadd.f32 %v2814, %v3053
  %v3055 = vpop.f32.mrf.mxu0
  %v3056 = vadd.f32 %v2814, %v3055
  %3057 = vmatmul.bf16.gmra.mxu0 %v2904
  %v3058 = vpop.f32.mrf.mxu0
  %v3059 = vadd.f32 %v2814, %v3058
  %v3060 = vpop.f32.mrf.mxu0
  %v3061 = vadd.f32 %v2814, %v3060
  %3062 = vmatmul.bf16.gmra.mxu0 %v2907
  %v3063 = vpop.f32.mrf.mxu0
  %v3064 = vadd.f32 %v2814, %v3063
  %v3065 = vpop.f32.mrf.mxu0
  %v3066 = vadd.f32 %v2814, %v3065
  %3067 = vmatmul.bf16.gmra.mxu0 %v2910
  %v3068 = vpop.f32.mrf.mxu0
  %v3069 = vadd.f32 %v2814, %v3068
  %v3070 = vpop.f32.mrf.mxu0
  %v3071 = vadd.f32 %v2814, %v3070
  %3072 = vmatmul.bf16.gmra.mxu0 %v2913
  %v3073 = vpop.f32.mrf.mxu0
  %v3074 = vadd.f32 %v2814, %v3073
  %v3075 = vpop.f32.mrf.mxu0
  %v3076 = vadd.f32 %v2814, %v3075
  %3077 = vmatmul.bf16.gmra.mxu0 %v2916
  %v3078 = vpop.f32.mrf.mxu0
  %v3079 = vadd.f32 %v2814, %v3078
  %v3080 = vpop.f32.mrf.mxu0
  %v3081 = vadd.f32 %v2814, %v3080
  %3082 = vmatmul.bf16.gmra.mxu0 %v2919
  %v3083 = vpop.f32.mrf.mxu0
  %v3084 = vadd.f32 %v2814, %v3083
  %v3085 = vpop.f32.mrf.mxu0
  %v3086 = vadd.f32 %v2814, %v3085
  %3087 = vmatmul.bf16.gmra.mxu0 %v2922
  %v3088 = vpop.f32.mrf.mxu0
  %v3089 = vadd.f32 %v2814, %v3088
  %v3090 = vpop.f32.mrf.mxu0
  %v3091 = vadd.f32 %v2814, %v3090
  %3092 = vdwg.mxu0
  %v3093 = vmul.f32 %v2934, 0.5
  %v3094 = vmul.f32 %v2936, 0.5
  %v3095 = vmul.f32 %v2939, 0.5
  %v3096 = vmul.f32 %v2941, 0.5
  %v3097 = vmul.f32 %v2944, 0.5
  %v3098 = vmul.f32 %v2946, 0.5
  %v3099 = vmul.f32 %v2949, 0.5
  %v3100 = vmul.f32 %v2951, 0.5
  %v3101 = vmul.f32 %v2954, 0.5
  %v3102 = vmul.f32 %v2956, 0.5
  %v3103 = vmul.f32 %v2959, 0.5
  %v3104 = vmul.f32 %v2961, 0.5
  %v3105 = vmul.f32 %v2964, 0.5
  %v3106 = vmul.f32 %v2966, 0.5
  %v3107 = vmul.f32 %v2969, 0.5
  %v3108 = vmul.f32 %v2971, 0.5
  %v3109 = vmul.f32 %v2974, 0.5
  %v3110 = vmul.f32 %v2976, 0.5
  %v3111 = vmul.f32 %v2979, 0.5
  %v3112 = vmul.f32 %v2981, 0.5
  %v3113 = vmul.f32 %v2984, 0.5
  %v3114 = vmul.f32 %v2986, 0.5
  %v3115 = vmul.f32 %v2989, 0.5
  %v3116 = vmul.f32 %v2991, 0.5
  %v3117 = vmul.f32 %v2994, 0.5
  %v3118 = vmul.f32 %v2996, 0.5
  %v3119 = vmul.f32 %v2999, 0.5
  %v3120 = vmul.f32 %v3001, 0.5
  %v3121 = vmul.f32 %v3004, 0.5
  %v3122 = vmul.f32 %v3006, 0.5
  %v3123 = vmul.f32 %v3009, 0.5
  %v3124 = vmul.f32 %v3011, 0.5
  %v3125 = vmul.f32 %v3014, 0.5
  %v3126 = vmul.f32 %v3016, 0.5
  %v3127 = vmul.f32 %v3019, 0.5
  %v3128 = vmul.f32 %v3021, 0.5
  %v3129 = vmul.f32 %v3024, 0.5
  %v3130 = vmul.f32 %v3026, 0.5
  %v3131 = vmul.f32 %v3029, 0.5
  %v3132 = vmul.f32 %v3031, 0.5
  %v3133 = vmul.f32 %v3034, 0.5
  %v3134 = vmul.f32 %v3036, 0.5
  %v3135 = vmul.f32 %v3039, 0.5
  %v3136 = vmul.f32 %v3041, 0.5
  %v3137 = vmul.f32 %v3044, 0.5
  %v3138 = vmul.f32 %v3046, 0.5
  %v3139 = vmul.f32 %v3049, 0.5
  %v3140 = vmul.f32 %v3051, 0.5
  %v3141 = vmul.f32 %v3054, 0.5
  %v3142 = vmul.f32 %v3056, 0.5
  %v3143 = vmul.f32 %v3059, 0.5
  %v3144 = vmul.f32 %v3061, 0.5
  %v3145 = vmul.f32 %v3064, 0.5
  %v3146 = vmul.f32 %v3066, 0.5
  %v3147 = vmul.f32 %v3069, 0.5
  %v3148 = vmul.f32 %v3071, 0.5
  %v3149 = vmul.f32 %v3074, 0.5
  %v3150 = vmul.f32 %v3076, 0.5
  %v3151 = vmul.f32 %v3079, 0.5
  %v3152 = vmul.f32 %v3081, 0.5
  %v3153 = vmul.f32 %v3084, 0.5
  %v3154 = vmul.f32 %v3086, 0.5
  %v3155 = vmul.f32 %v3089, 0.5
  %v3156 = vmul.f32 %v3091, 0.5
  %v3157 = vtanh.pop %v3093
  %v3158 = vtanh.pop %v3094
  %v3159 = vtanh.pop %v3095
  %v3160 = vtanh.pop %v3096
  %v3161 = vtanh.pop %v3097
  %v3162 = vtanh.pop %v3098
  %v3163 = vtanh.pop %v3099
  %v3164 = vtanh.pop %v3100
  %v3165 = vtanh.pop %v3101
  %v3166 = vtanh.pop %v3102
  %v3167 = vtanh.pop %v3103
  %v3168 = vtanh.pop %v3104
  %v3169 = vtanh.pop %v3105
  %v3170 = vtanh.pop %v3106
  %v3171 = vtanh.pop %v3107
  %v3172 = vtanh.pop %v3108
  %v3173 = vtanh.pop %v3109
  %v3174 = vtanh.pop %v3110
  %v3175 = vtanh.pop %v3111
  %v3176 = vtanh.pop %v3112
  %v3177 = vtanh.pop %v3113
  %v3178 = vtanh.pop %v3114
  %v3179 = vtanh.pop %v3115
  %v3180 = vtanh.pop %v3116
  %v3181 = vtanh.pop %v3117
  %v3182 = vtanh.pop %v3118
  %v3183 = vtanh.pop %v3119
  %v3184 = vtanh.pop %v3120
  %v3185 = vtanh.pop %v3121
  %v3186 = vtanh.pop %v3122
  %v3187 = vtanh.pop %v3123
  %v3188 = vtanh.pop %v3124
  %v3189 = vtanh.pop %v3125
  %v3190 = vtanh.pop %v3126
  %v3191 = vtanh.pop %v3127
  %v3192 = vtanh.pop %v3128
  %v3193 = vtanh.pop %v3129
  %v3194 = vtanh.pop %v3130
  %v3195 = vtanh.pop %v3131
  %v3196 = vtanh.pop %v3132
  %v3197 = vtanh.pop %v3133
  %v3198 = vtanh.pop %v3134
  %v3199 = vtanh.pop %v3135
  %v3200 = vtanh.pop %v3136
  %v3201 = vtanh.pop %v3137
  %v3202 = vtanh.pop %v3138
  %v3203 = vtanh.pop %v3139
  %v3204 = vtanh.pop %v3140
  %v3205 = vtanh.pop %v3141
  %v3206 = vtanh.pop %v3142
  %v3207 = vtanh.pop %v3143
  %v3208 = vtanh.pop %v3144
  %v3209 = vtanh.pop %v3145
  %v3210 = vtanh.pop %v3146
  %v3211 = vtanh.pop %v3147
  %v3212 = vtanh.pop %v3148
  %v3213 = vtanh.pop %v3149
  %v3214 = vtanh.pop %v3150
  %v3215 = vtanh.pop %v3151
  %v3216 = vtanh.pop %v3152
  %v3217 = vtanh.pop %v3153
  %v3218 = vtanh.pop %v3154
  %v3219 = vtanh.pop %v3155
  %v3220 = vtanh.pop %v3156
  %v3221 = vmul.f32 %v3157, 0.5
  %v3222 = vmul.f32 %v3158, 0.5
  %v3223 = vmul.f32 %v3159, 0.5
  %v3224 = vmul.f32 %v3160, 0.5
  %v3225 = vmul.f32 %v3161, 0.5
  %v3226 = vmul.f32 %v3162, 0.5
  %v3227 = vmul.f32 %v3163, 0.5
  %v3228 = vmul.f32 %v3164, 0.5
  %v3229 = vmul.f32 %v3165, 0.5
  %v3230 = vmul.f32 %v3166, 0.5
  %v3231 = vmul.f32 %v3167, 0.5
  %v3232 = vmul.f32 %v3168, 0.5
  %v3233 = vmul.f32 %v3169, 0.5
  %v3234 = vmul.f32 %v3170, 0.5
  %v3235 = vmul.f32 %v3171, 0.5
  %v3236 = vmul.f32 %v3172, 0.5
  %v3237 = vmul.f32 %v3173, 0.5
  %v3238 = vmul.f32 %v3174, 0.5
  %v3239 = vmul.f32 %v3175, 0.5
  %v3240 = vmul.f32 %v3176, 0.5
  %v3241 = vmul.f32 %v3177, 0.5
  %v3242 = vmul.f32 %v3178, 0.5
  %v3243 = vmul.f32 %v3179, 0.5
  %v3244 = vmul.f32 %v3180, 0.5
  %v3245 = vmul.f32 %v3181, 0.5
  %v3246 = vmul.f32 %v3182, 0.5
  %v3247 = vmul.f32 %v3183, 0.5
  %v3248 = vmul.f32 %v3184, 0.5
  %v3249 = vmul.f32 %v3185, 0.5
  %v3250 = vmul.f32 %v3186, 0.5
  %v3251 = vmul.f32 %v3187, 0.5
  %v3252 = vmul.f32 %v3188, 0.5
  %v3253 = vmul.f32 %v3189, 0.5
  %v3254 = vmul.f32 %v3190, 0.5
  %v3255 = vmul.f32 %v3191, 0.5
  %v3256 = vmul.f32 %v3192, 0.5
  %v3257 = vmul.f32 %v3193, 0.5
  %v3258 = vmul.f32 %v3194, 0.5
  %v3259 = vmul.f32 %v3195, 0.5
  %v3260 = vmul.f32 %v3196, 0.5
  %v3261 = vmul.f32 %v3197, 0.5
  %v3262 = vmul.f32 %v3198, 0.5
  %v3263 = vmul.f32 %v3199, 0.5
  %v3264 = vmul.f32 %v3200, 0.5
  %v3265 = vmul.f32 %v3201, 0.5
  %v3266 = vmul.f32 %v3202, 0.5
  %v3267 = vmul.f32 %v3203, 0.5
  %v3268 = vmul.f32 %v3204, 0.5
  %v3269 = vmul.f32 %v3205, 0.5
  %v3270 = vmul.f32 %v3206, 0.5
  %v3271 = vmul.f32 %v3207, 0.5
  %v3272 = vmul.f32 %v3208, 0.5
  %v3273 = vmul.f32 %v3209, 0.5
  %v3274 = vmul.f32 %v3210, 0.5
  %v3275 = vmul.f32 %v3211, 0.5
  %v3276 = vmul.f32 %v3212, 0.5
  %v3277 = vmul.f32 %v3213, 0.5
  %v3278 = vmul.f32 %v3214, 0.5
  %v3279 = vmul.f32 %v3215, 0.5
  %v3280 = vmul.f32 %v3216, 0.5
  %v3281 = vmul.f32 %v3217, 0.5
  %v3282 = vmul.f32 %v3218, 0.5
  %v3283 = vmul.f32 %v3219, 0.5
  %v3284 = vmul.f32 %v3220, 0.5
  %v3285 = vadd.f32 %v3221, 0.5
  %v3286 = vadd.f32 %v3222, 0.5
  %v3287 = vadd.f32 %v3223, 0.5
  %v3288 = vadd.f32 %v3224, 0.5
  %v3289 = vadd.f32 %v3225, 0.5
  %v3290 = vadd.f32 %v3226, 0.5
  %v3291 = vadd.f32 %v3227, 0.5
  %v3292 = vadd.f32 %v3228, 0.5
  %v3293 = vadd.f32 %v3229, 0.5
  %v3294 = vadd.f32 %v3230, 0.5
  %v3295 = vadd.f32 %v3231, 0.5
  %v3296 = vadd.f32 %v3232, 0.5
  %v3297 = vadd.f32 %v3233, 0.5
  %v3298 = vadd.f32 %v3234, 0.5
  %v3299 = vadd.f32 %v3235, 0.5
  %v3300 = vadd.f32 %v3236, 0.5
  %v3301 = vadd.f32 %v3237, 0.5
  %v3302 = vadd.f32 %v3238, 0.5
  %v3303 = vadd.f32 %v3239, 0.5
  %v3304 = vadd.f32 %v3240, 0.5
  %v3305 = vadd.f32 %v3241, 0.5
  %v3306 = vadd.f32 %v3242, 0.5
  %v3307 = vadd.f32 %v3243, 0.5
  %v3308 = vadd.f32 %v3244, 0.5
  %v3309 = vadd.f32 %v3245, 0.5
  %v3310 = vadd.f32 %v3246, 0.5
  %v3311 = vadd.f32 %v3247, 0.5
  %v3312 = vadd.f32 %v3248, 0.5
  %v3313 = vadd.f32 %v3249, 0.5
  %v3314 = vadd.f32 %v3250, 0.5
  %v3315 = vadd.f32 %v3251, 0.5
  %v3316 = vadd.f32 %v3252, 0.5
  %v3317 = vadd.f32 %v3253, 0.5
  %v3318 = vadd.f32 %v3254, 0.5
  %v3319 = vadd.f32 %v3255, 0.5
  %v3320 = vadd.f32 %v3256, 0.5
  %v3321 = vadd.f32 %v3257, 0.5
  %v3322 = vadd.f32 %v3258, 0.5
  %v3323 = vadd.f32 %v3259, 0.5
  %v3324 = vadd.f32 %v3260, 0.5
  %v3325 = vadd.f32 %v3261, 0.5
  %v3326 = vadd.f32 %v3262, 0.5
  %v3327 = vadd.f32 %v3263, 0.5
  %v3328 = vadd.f32 %v3264, 0.5
  %v3329 = vadd.f32 %v3265, 0.5
  %v3330 = vadd.f32 %v3266, 0.5
  %v3331 = vadd.f32 %v3267, 0.5
  %v3332 = vadd.f32 %v3268, 0.5
  %v3333 = vadd.f32 %v3269, 0.5
  %v3334 = vadd.f32 %v3270, 0.5
  %v3335 = vadd.f32 %v3271, 0.5
  %v3336 = vadd.f32 %v3272, 0.5
  %v3337 = vadd.f32 %v3273, 0.5
  %v3338 = vadd.f32 %v3274, 0.5
  %v3339 = vadd.f32 %v3275, 0.5
  %v3340 = vadd.f32 %v3276, 0.5
  %v3341 = vadd.f32 %v3277, 0.5
  %v3342 = vadd.f32 %v3278, 0.5
  %v3343 = vadd.f32 %v3279, 0.5
  %v3344 = vadd.f32 %v3280, 0.5
  %v3345 = vadd.f32 %v3281, 0.5
  %v3346 = vadd.f32 %v3282, 0.5
  %v3347 = vadd.f32 %v3283, 0.5
  %v3348 = vadd.f32 %v3284, 0.5
  %v3349 = vmul.f32 %v2934, %v3285
  %v3350 = vmul.f32 %v2936, %v3286
  %v3351 = vmul.f32 %v2939, %v3287
  %v3352 = vmul.f32 %v2941, %v3288
  %v3353 = vmul.f32 %v2944, %v3289
  %v3354 = vmul.f32 %v2946, %v3290
  %v3355 = vmul.f32 %v2949, %v3291
  %v3356 = vmul.f32 %v2951, %v3292
  %v3357 = vmul.f32 %v2954, %v3293
  %v3358 = vmul.f32 %v2956, %v3294
  %v3359 = vmul.f32 %v2959, %v3295
  %v3360 = vmul.f32 %v2961, %v3296
  %v3361 = vmul.f32 %v2964, %v3297
  %v3362 = vmul.f32 %v2966, %v3298
  %v3363 = vmul.f32 %v2969, %v3299
  %v3364 = vmul.f32 %v2971, %v3300
  %v3365 = vmul.f32 %v2974, %v3301
  %v3366 = vmul.f32 %v2976, %v3302
  %v3367 = vmul.f32 %v2979, %v3303
  %v3368 = vmul.f32 %v2981, %v3304
  %v3369 = vmul.f32 %v2984, %v3305
  %v3370 = vmul.f32 %v2986, %v3306
  %v3371 = vmul.f32 %v2989, %v3307
  %v3372 = vmul.f32 %v2991, %v3308
  %v3373 = vmul.f32 %v2994, %v3309
  %v3374 = vmul.f32 %v2996, %v3310
  %v3375 = vmul.f32 %v2999, %v3311
  %v3376 = vmul.f32 %v3001, %v3312
  %v3377 = vmul.f32 %v3004, %v3313
  %v3378 = vmul.f32 %v3006, %v3314
  %v3379 = vmul.f32 %v3009, %v3315
  %v3380 = vmul.f32 %v3011, %v3316
  %v3381 = vmul.f32 %v3014, %v3317
  %v3382 = vmul.f32 %v3016, %v3318
  %v3383 = vmul.f32 %v3019, %v3319
  %v3384 = vmul.f32 %v3021, %v3320
  %v3385 = vmul.f32 %v3024, %v3321
  %v3386 = vmul.f32 %v3026, %v3322
  %v3387 = vmul.f32 %v3029, %v3323
  %v3388 = vmul.f32 %v3031, %v3324
  %v3389 = vmul.f32 %v3034, %v3325
  %v3390 = vmul.f32 %v3036, %v3326
  %v3391 = vmul.f32 %v3039, %v3327
  %v3392 = vmul.f32 %v3041, %v3328
  %v3393 = vmul.f32 %v3044, %v3329
  %v3394 = vmul.f32 %v3046, %v3330
  %v3395 = vmul.f32 %v3049, %v3331
  %v3396 = vmul.f32 %v3051, %v3332
  %v3397 = vmul.f32 %v3054, %v3333
  %v3398 = vmul.f32 %v3056, %v3334
  %v3399 = vmul.f32 %v3059, %v3335
  %v3400 = vmul.f32 %v3061, %v3336
  %v3401 = vmul.f32 %v3064, %v3337
  %v3402 = vmul.f32 %v3066, %v3338
  %v3403 = vmul.f32 %v3069, %v3339
  %v3404 = vmul.f32 %v3071, %v3340
  %v3405 = vmul.f32 %v3074, %v3341
  %v3406 = vmul.f32 %v3076, %v3342
  %v3407 = vmul.f32 %v3079, %v3343
  %v3408 = vmul.f32 %v3081, %v3344
  %v3409 = vmul.f32 %v3084, %v3345
  %v3410 = vmul.f32 %v3086, %v3346
  %v3411 = vmul.f32 %v3089, %v3347
  %v3412 = vmul.f32 %v3091, %v3348
  %v3413 = vpack.c.bf16 %v3350, %v3349
  %v3414 = vpack.c.bf16 %v3352, %v3351
  %v3415 = vpack.c.bf16 %v3354, %v3353
  %v3416 = vpack.c.bf16 %v3356, %v3355
  %v3417 = vpack.c.bf16 %v3358, %v3357
  %v3418 = vpack.c.bf16 %v3360, %v3359
  %v3419 = vpack.c.bf16 %v3362, %v3361
  %v3420 = vpack.c.bf16 %v3364, %v3363
  %v3421 = vpack.c.bf16 %v3366, %v3365
  %v3422 = vpack.c.bf16 %v3368, %v3367
  %v3423 = vpack.c.bf16 %v3370, %v3369
  %v3424 = vpack.c.bf16 %v3372, %v3371
  %v3425 = vpack.c.bf16 %v3374, %v3373
  %v3426 = vpack.c.bf16 %v3376, %v3375
  %v3427 = vpack.c.bf16 %v3378, %v3377
  %v3428 = vpack.c.bf16 %v3380, %v3379
  %v3429 = vpack.c.bf16 %v3382, %v3381
  %v3430 = vpack.c.bf16 %v3384, %v3383
  %v3431 = vpack.c.bf16 %v3386, %v3385
  %v3432 = vpack.c.bf16 %v3388, %v3387
  %v3433 = vpack.c.bf16 %v3390, %v3389
  %v3434 = vpack.c.bf16 %v3392, %v3391
  %v3435 = vpack.c.bf16 %v3394, %v3393
  %v3436 = vpack.c.bf16 %v3396, %v3395
  %v3437 = vpack.c.bf16 %v3398, %v3397
  %v3438 = vpack.c.bf16 %v3400, %v3399
  %v3439 = vpack.c.bf16 %v3402, %v3401
  %v3440 = vpack.c.bf16 %v3404, %v3403
  %v3441 = vpack.c.bf16 %v3406, %v3405
  %v3442 = vpack.c.bf16 %v3408, %v3407
  %v3443 = vpack.c.bf16 %v3410, %v3409
  %v3444 = vpack.c.bf16 %v3412, %v3411
  %v3445 = vld [vmem:[%s11] sm:$0xf]
  %v3446 = vld [vmem:[%s11 + $0x4] sm:$0xf]
  %v3447 = vld [vmem:[%s11 + $0x8] sm:$0xf]
  %v3448 = vld [vmem:[%s11 + $0xc] sm:$0xf]
  %v3449 = vld [vmem:[%s12] sm:$0x1]
  %v3451 = vperm.slane %v3449, 0
  %v3457 = vunpack.c.l.b16 %v3445
  %v3458 = vunpack.c.l.b16 %v3446
  %v3459 = vunpack.c.l.b16 %v3447
  %v3460 = vunpack.c.l.b16 %v3448
  %v3461 = vpack.c.b16 %v3458, %v3457
  %v3462 = vpack.c.b16 %v3460, %v3459
  %v3466 = vsel %vm974, %v3413, 0
  %v3469 = vsel %vm974, %v3414, 0
  %v3472 = vsel %vm974, %v3415, 0
  %v3475 = vsel %vm974, %v3416, 0
  %v3478 = vsel %vm974, %v3417, 0
  %v3481 = vsel %vm974, %v3418, 0
  %v3484 = vsel %vm974, %v3419, 0
  %v3487 = vsel %vm974, %v3420, 0
  %v3490 = vsel %vm974, %v3421, 0
  %v3493 = vsel %vm974, %v3422, 0
  %v3496 = vsel %vm974, %v3423, 0
  %v3499 = vsel %vm974, %v3424, 0
  %v3502 = vsel %vm974, %v3425, 0
  %v3505 = vsel %vm974, %v3426, 0
  %v3508 = vsel %vm974, %v3427, 0
  %v3511 = vsel %vm974, %v3428, 0
  %v3514 = vsel %vm974, %v3429, 0
  %v3517 = vsel %vm974, %v3430, 0
  %v3520 = vsel %vm974, %v3431, 0
  %v3523 = vsel %vm974, %v3432, 0
  %v3526 = vsel %vm974, %v3433, 0
  %v3529 = vsel %vm974, %v3434, 0
  %v3532 = vsel %vm974, %v3435, 0
  %v3535 = vsel %vm974, %v3436, 0
  %v3538 = vsel %vm974, %v3437, 0
  %v3541 = vsel %vm974, %v3438, 0
  %v3544 = vsel %vm974, %v3439, 0
  %v3547 = vsel %vm974, %v3440, 0
  %v3550 = vsel %vm974, %v3441, 0
  %v3553 = vsel %vm974, %v3442, 0
  %v3556 = vsel %vm974, %v3443, 0
  %v3559 = vsel %vm974, %v3444, 0
  %3561 = vmatpush.bf16.msra.mxu0 0
  %3562 = vmatpush.bf16.msra.mxu0 0
  %3563 = vmatpush.bf16.msra.mxu0 0
  %3564 = vmatpush.bf16.msra.mxu0 0
  %3565 = vmatpush.bf16.msra.mxu0 0
  %3566 = vmatpush.bf16.msra.mxu0 0
  %3567 = vmatpush.bf16.msra.mxu0 %v3462
  %3568 = vmatpush.bf16.msra.mxu0 %v3461
  %3569 = vmatmul.bf16.gmra.mxu0 %v3466
  %v3570 = vpop.f32.mrf.mxu0
  %v3571 = vadd.f32 %v3451, %v3570
  %v3572 = vpop.f32.mrf.mxu0
  %v3573 = vadd.f32 %v3451, %v3572
  %3574 = vmatmul.bf16.gmra.mxu0 %v3469
  %v3575 = vpop.f32.mrf.mxu0
  %v3576 = vadd.f32 %v3451, %v3575
  %v3577 = vpop.f32.mrf.mxu0
  %v3578 = vadd.f32 %v3451, %v3577
  %3579 = vmatmul.bf16.gmra.mxu0 %v3472
  %v3580 = vpop.f32.mrf.mxu0
  %v3581 = vadd.f32 %v3451, %v3580
  %v3582 = vpop.f32.mrf.mxu0
  %v3583 = vadd.f32 %v3451, %v3582
  %3584 = vmatmul.bf16.gmra.mxu0 %v3475
  %v3585 = vpop.f32.mrf.mxu0
  %v3586 = vadd.f32 %v3451, %v3585
  %v3587 = vpop.f32.mrf.mxu0
  %v3588 = vadd.f32 %v3451, %v3587
  %3589 = vmatmul.bf16.gmra.mxu0 %v3478
  %v3590 = vpop.f32.mrf.mxu0
  %v3591 = vadd.f32 %v3451, %v3590
  %v3592 = vpop.f32.mrf.mxu0
  %v3593 = vadd.f32 %v3451, %v3592
  %3594 = vmatmul.bf16.gmra.mxu0 %v3481
  %v3595 = vpop.f32.mrf.mxu0
  %v3596 = vadd.f32 %v3451, %v3595
  %v3597 = vpop.f32.mrf.mxu0
  %v3598 = vadd.f32 %v3451, %v3597
  %3599 = vmatmul.bf16.gmra.mxu0 %v3484
  %v3600 = vpop.f32.mrf.mxu0
  %v3601 = vadd.f32 %v3451, %v3600
  %v3602 = vpop.f32.mrf.mxu0
  %v3603 = vadd.f32 %v3451, %v3602
  %3604 = vmatmul.bf16.gmra.mxu0 %v3487
  %v3605 = vpop.f32.mrf.mxu0
  %v3606 = vadd.f32 %v3451, %v3605
  %v3607 = vpop.f32.mrf.mxu0
  %v3608 = vadd.f32 %v3451, %v3607
  %3609 = vmatmul.bf16.gmra.mxu0 %v3490
  %v3610 = vpop.f32.mrf.mxu0
  %v3611 = vadd.f32 %v3451, %v3610
  %v3612 = vpop.f32.mrf.mxu0
  %v3613 = vadd.f32 %v3451, %v3612
  %3614 = vmatmul.bf16.gmra.mxu0 %v3493
  %v3615 = vpop.f32.mrf.mxu0
  %v3616 = vadd.f32 %v3451, %v3615
  %v3617 = vpop.f32.mrf.mxu0
  %v3618 = vadd.f32 %v3451, %v3617
  %3619 = vmatmul.bf16.gmra.mxu0 %v3496
  %v3620 = vpop.f32.mrf.mxu0
  %v3621 = vadd.f32 %v3451, %v3620
  %v3622 = vpop.f32.mrf.mxu0
  %v3623 = vadd.f32 %v3451, %v3622
  %3624 = vmatmul.bf16.gmra.mxu0 %v3499
  %v3625 = vpop.f32.mrf.mxu0
  %v3626 = vadd.f32 %v3451, %v3625
  %v3627 = vpop.f32.mrf.mxu0
  %v3628 = vadd.f32 %v3451, %v3627
  %3629 = vmatmul.bf16.gmra.mxu0 %v3502
  %v3630 = vpop.f32.mrf.mxu0
  %v3631 = vadd.f32 %v3451, %v3630
  %v3632 = vpop.f32.mrf.mxu0
  %v3633 = vadd.f32 %v3451, %v3632
  %3634 = vmatmul.bf16.gmra.mxu0 %v3505
  %v3635 = vpop.f32.mrf.mxu0
  %v3636 = vadd.f32 %v3451, %v3635
  %v3637 = vpop.f32.mrf.mxu0
  %v3638 = vadd.f32 %v3451, %v3637
  %3639 = vmatmul.bf16.gmra.mxu0 %v3508
  %v3640 = vpop.f32.mrf.mxu0
  %v3641 = vadd.f32 %v3451, %v3640
  %v3642 = vpop.f32.mrf.mxu0
  %v3643 = vadd.f32 %v3451, %v3642
  %3644 = vmatmul.bf16.gmra.mxu0 %v3511
  %v3645 = vpop.f32.mrf.mxu0
  %v3646 = vadd.f32 %v3451, %v3645
  %v3647 = vpop.f32.mrf.mxu0
  %v3648 = vadd.f32 %v3451, %v3647
  %3649 = vmatmul.bf16.gmra.mxu0 %v3514
  %v3650 = vpop.f32.mrf.mxu0
  %v3651 = vadd.f32 %v3451, %v3650
  %v3652 = vpop.f32.mrf.mxu0
  %v3653 = vadd.f32 %v3451, %v3652
  %3654 = vmatmul.bf16.gmra.mxu0 %v3517
  %v3655 = vpop.f32.mrf.mxu0
  %v3656 = vadd.f32 %v3451, %v3655
  %v3657 = vpop.f32.mrf.mxu0
  %v3658 = vadd.f32 %v3451, %v3657
  %3659 = vmatmul.bf16.gmra.mxu0 %v3520
  %v3660 = vpop.f32.mrf.mxu0
  %v3661 = vadd.f32 %v3451, %v3660
  %v3662 = vpop.f32.mrf.mxu0
  %v3663 = vadd.f32 %v3451, %v3662
  %3664 = vmatmul.bf16.gmra.mxu0 %v3523
  %v3665 = vpop.f32.mrf.mxu0
  %v3666 = vadd.f32 %v3451, %v3665
  %v3667 = vpop.f32.mrf.mxu0
  %v3668 = vadd.f32 %v3451, %v3667
  %3669 = vmatmul.bf16.gmra.mxu0 %v3526
  %v3670 = vpop.f32.mrf.mxu0
  %v3671 = vadd.f32 %v3451, %v3670
  %v3672 = vpop.f32.mrf.mxu0
  %v3673 = vadd.f32 %v3451, %v3672
  %3674 = vmatmul.bf16.gmra.mxu0 %v3529
  %v3675 = vpop.f32.mrf.mxu0
  %v3676 = vadd.f32 %v3451, %v3675
  %v3677 = vpop.f32.mrf.mxu0
  %v3678 = vadd.f32 %v3451, %v3677
  %3679 = vmatmul.bf16.gmra.mxu0 %v3532
  %v3680 = vpop.f32.mrf.mxu0
  %v3681 = vadd.f32 %v3451, %v3680
  %v3682 = vpop.f32.mrf.mxu0
  %v3683 = vadd.f32 %v3451, %v3682
  %3684 = vmatmul.bf16.gmra.mxu0 %v3535
  %v3685 = vpop.f32.mrf.mxu0
  %v3686 = vadd.f32 %v3451, %v3685
  %v3687 = vpop.f32.mrf.mxu0
  %v3688 = vadd.f32 %v3451, %v3687
  %3689 = vmatmul.bf16.gmra.mxu0 %v3538
  %v3690 = vpop.f32.mrf.mxu0
  %v3691 = vadd.f32 %v3451, %v3690
  %v3692 = vpop.f32.mrf.mxu0
  %v3693 = vadd.f32 %v3451, %v3692
  %3694 = vmatmul.bf16.gmra.mxu0 %v3541
  %v3695 = vpop.f32.mrf.mxu0
  %v3696 = vadd.f32 %v3451, %v3695
  %v3697 = vpop.f32.mrf.mxu0
  %v3698 = vadd.f32 %v3451, %v3697
  %3699 = vmatmul.bf16.gmra.mxu0 %v3544
  %v3700 = vpop.f32.mrf.mxu0
  %v3701 = vadd.f32 %v3451, %v3700
  %v3702 = vpop.f32.mrf.mxu0
  %v3703 = vadd.f32 %v3451, %v3702
  %3704 = vmatmul.bf16.gmra.mxu0 %v3547
  %v3705 = vpop.f32.mrf.mxu0
  %v3706 = vadd.f32 %v3451, %v3705
  %v3707 = vpop.f32.mrf.mxu0
  %v3708 = vadd.f32 %v3451, %v3707
  %3709 = vmatmul.bf16.gmra.mxu0 %v3550
  %v3710 = vpop.f32.mrf.mxu0
  %v3711 = vadd.f32 %v3451, %v3710
  %v3712 = vpop.f32.mrf.mxu0
  %v3713 = vadd.f32 %v3451, %v3712
  %3714 = vmatmul.bf16.gmra.mxu0 %v3553
  %v3715 = vpop.f32.mrf.mxu0
  %v3716 = vadd.f32 %v3451, %v3715
  %v3717 = vpop.f32.mrf.mxu0
  %v3718 = vadd.f32 %v3451, %v3717
  %3719 = vmatmul.bf16.gmra.mxu0 %v3556
  %v3720 = vpop.f32.mrf.mxu0
  %v3721 = vadd.f32 %v3451, %v3720
  %v3722 = vpop.f32.mrf.mxu0
  %v3723 = vadd.f32 %v3451, %v3722
  %3724 = vmatmul.bf16.gmra.mxu0 %v3559
  %v3725 = vpop.f32.mrf.mxu0
  %v3726 = vadd.f32 %v3451, %v3725
  %v3727 = vpop.f32.mrf.mxu0
  %v3728 = vadd.f32 %v3451, %v3727
  %3729 = vdwg.mxu0
  %v3730 = vmul.f32 %v3571, 0.5
  %v3731 = vmul.f32 %v3573, 0.5
  %v3732 = vmul.f32 %v3576, 0.5
  %v3733 = vmul.f32 %v3578, 0.5
  %v3734 = vmul.f32 %v3581, 0.5
  %v3735 = vmul.f32 %v3583, 0.5
  %v3736 = vmul.f32 %v3586, 0.5
  %v3737 = vmul.f32 %v3588, 0.5
  %v3738 = vmul.f32 %v3591, 0.5
  %v3739 = vmul.f32 %v3593, 0.5
  %v3740 = vmul.f32 %v3596, 0.5
  %v3741 = vmul.f32 %v3598, 0.5
  %v3742 = vmul.f32 %v3601, 0.5
  %v3743 = vmul.f32 %v3603, 0.5
  %v3744 = vmul.f32 %v3606, 0.5
  %v3745 = vmul.f32 %v3608, 0.5
  %v3746 = vmul.f32 %v3611, 0.5
  %v3747 = vmul.f32 %v3613, 0.5
  %v3748 = vmul.f32 %v3616, 0.5
  %v3749 = vmul.f32 %v3618, 0.5
  %v3750 = vmul.f32 %v3621, 0.5
  %v3751 = vmul.f32 %v3623, 0.5
  %v3752 = vmul.f32 %v3626, 0.5
  %v3753 = vmul.f32 %v3628, 0.5
  %v3754 = vmul.f32 %v3631, 0.5
  %v3755 = vmul.f32 %v3633, 0.5
  %v3756 = vmul.f32 %v3636, 0.5
  %v3757 = vmul.f32 %v3638, 0.5
  %v3758 = vmul.f32 %v3641, 0.5
  %v3759 = vmul.f32 %v3643, 0.5
  %v3760 = vmul.f32 %v3646, 0.5
  %v3761 = vmul.f32 %v3648, 0.5
  %v3762 = vmul.f32 %v3651, 0.5
  %v3763 = vmul.f32 %v3653, 0.5
  %v3764 = vmul.f32 %v3656, 0.5
  %v3765 = vmul.f32 %v3658, 0.5
  %v3766 = vmul.f32 %v3661, 0.5
  %v3767 = vmul.f32 %v3663, 0.5
  %v3768 = vmul.f32 %v3666, 0.5
  %v3769 = vmul.f32 %v3668, 0.5
  %v3770 = vmul.f32 %v3671, 0.5
  %v3771 = vmul.f32 %v3673, 0.5
  %v3772 = vmul.f32 %v3676, 0.5
  %v3773 = vmul.f32 %v3678, 0.5
  %v3774 = vmul.f32 %v3681, 0.5
  %v3775 = vmul.f32 %v3683, 0.5
  %v3776 = vmul.f32 %v3686, 0.5
  %v3777 = vmul.f32 %v3688, 0.5
  %v3778 = vmul.f32 %v3691, 0.5
  %v3779 = vmul.f32 %v3693, 0.5
  %v3780 = vmul.f32 %v3696, 0.5
  %v3781 = vmul.f32 %v3698, 0.5
  %v3782 = vmul.f32 %v3701, 0.5
  %v3783 = vmul.f32 %v3703, 0.5
  %v3784 = vmul.f32 %v3706, 0.5
  %v3785 = vmul.f32 %v3708, 0.5
  %v3786 = vmul.f32 %v3711, 0.5
  %v3787 = vmul.f32 %v3713, 0.5
  %v3788 = vmul.f32 %v3716, 0.5
  %v3789 = vmul.f32 %v3718, 0.5
  %v3790 = vmul.f32 %v3721, 0.5
  %v3791 = vmul.f32 %v3723, 0.5
  %v3792 = vmul.f32 %v3726, 0.5
  %v3793 = vmul.f32 %v3728, 0.5
  %v3794 = vtanh.pop %v3730
  %v3795 = vtanh.pop %v3731
  %v3796 = vtanh.pop %v3732
  %v3797 = vtanh.pop %v3733
  %v3798 = vtanh.pop %v3734
  %v3799 = vtanh.pop %v3735
  %v3800 = vtanh.pop %v3736
  %v3801 = vtanh.pop %v3737
  %v3802 = vtanh.pop %v3738
  %v3803 = vtanh.pop %v3739
  %v3804 = vtanh.pop %v3740
  %v3805 = vtanh.pop %v3741
  %v3806 = vtanh.pop %v3742
  %v3807 = vtanh.pop %v3743
  %v3808 = vtanh.pop %v3744
  %v3809 = vtanh.pop %v3745
  %v3810 = vtanh.pop %v3746
  %v3811 = vtanh.pop %v3747
  %v3812 = vtanh.pop %v3748
  %v3813 = vtanh.pop %v3749
  %v3814 = vtanh.pop %v3750
  %v3815 = vtanh.pop %v3751
  %v3816 = vtanh.pop %v3752
  %v3817 = vtanh.pop %v3753
  %v3818 = vtanh.pop %v3754
  %v3819 = vtanh.pop %v3755
  %v3820 = vtanh.pop %v3756
  %v3821 = vtanh.pop %v3757
  %v3822 = vtanh.pop %v3758
  %v3823 = vtanh.pop %v3759
  %v3824 = vtanh.pop %v3760
  %v3825 = vtanh.pop %v3761
  %v3826 = vtanh.pop %v3762
  %v3827 = vtanh.pop %v3763
  %v3828 = vtanh.pop %v3764
  %v3829 = vtanh.pop %v3765
  %v3830 = vtanh.pop %v3766
  %v3831 = vtanh.pop %v3767
  %v3832 = vtanh.pop %v3768
  %v3833 = vtanh.pop %v3769
  %v3834 = vtanh.pop %v3770
  %v3835 = vtanh.pop %v3771
  %v3836 = vtanh.pop %v3772
  %v3837 = vtanh.pop %v3773
  %v3838 = vtanh.pop %v3774
  %v3839 = vtanh.pop %v3775
  %v3840 = vtanh.pop %v3776
  %v3841 = vtanh.pop %v3777
  %v3842 = vtanh.pop %v3778
  %v3843 = vtanh.pop %v3779
  %v3844 = vtanh.pop %v3780
  %v3845 = vtanh.pop %v3781
  %v3846 = vtanh.pop %v3782
  %v3847 = vtanh.pop %v3783
  %v3848 = vtanh.pop %v3784
  %v3849 = vtanh.pop %v3785
  %v3850 = vtanh.pop %v3786
  %v3851 = vtanh.pop %v3787
  %v3852 = vtanh.pop %v3788
  %v3853 = vtanh.pop %v3789
  %v3854 = vtanh.pop %v3790
  %v3855 = vtanh.pop %v3791
  %v3856 = vtanh.pop %v3792
  %v3857 = vtanh.pop %v3793
  %v3858 = vmul.f32 %v3794, 0.5
  %v3859 = vmul.f32 %v3795, 0.5
  %v3860 = vmul.f32 %v3796, 0.5
  %v3861 = vmul.f32 %v3797, 0.5
  %v3862 = vmul.f32 %v3798, 0.5
  %v3863 = vmul.f32 %v3799, 0.5
  %v3864 = vmul.f32 %v3800, 0.5
  %v3865 = vmul.f32 %v3801, 0.5
  %v3866 = vmul.f32 %v3802, 0.5
  %v3867 = vmul.f32 %v3803, 0.5
  %v3868 = vmul.f32 %v3804, 0.5
  %v3869 = vmul.f32 %v3805, 0.5
  %v3870 = vmul.f32 %v3806, 0.5
  %v3871 = vmul.f32 %v3807, 0.5
  %v3872 = vmul.f32 %v3808, 0.5
  %v3873 = vmul.f32 %v3809, 0.5
  %v3874 = vmul.f32 %v3810, 0.5
  %v3875 = vmul.f32 %v3811, 0.5
  %v3876 = vmul.f32 %v3812, 0.5
  %v3877 = vmul.f32 %v3813, 0.5
  %v3878 = vmul.f32 %v3814, 0.5
  %v3879 = vmul.f32 %v3815, 0.5
  %v3880 = vmul.f32 %v3816, 0.5
  %v3881 = vmul.f32 %v3817, 0.5
  %v3882 = vmul.f32 %v3818, 0.5
  %v3883 = vmul.f32 %v3819, 0.5
  %v3884 = vmul.f32 %v3820, 0.5
  %v3885 = vmul.f32 %v3821, 0.5
  %v3886 = vmul.f32 %v3822, 0.5
  %v3887 = vmul.f32 %v3823, 0.5
  %v3888 = vmul.f32 %v3824, 0.5
  %v3889 = vmul.f32 %v3825, 0.5
  %v3890 = vmul.f32 %v3826, 0.5
  %v3891 = vmul.f32 %v3827, 0.5
  %v3892 = vmul.f32 %v3828, 0.5
  %v3893 = vmul.f32 %v3829, 0.5
  %v3894 = vmul.f32 %v3830, 0.5
  %v3895 = vmul.f32 %v3831, 0.5
  %v3896 = vmul.f32 %v3832, 0.5
  %v3897 = vmul.f32 %v3833, 0.5
  %v3898 = vmul.f32 %v3834, 0.5
  %v3899 = vmul.f32 %v3835, 0.5
  %v3900 = vmul.f32 %v3836, 0.5
  %v3901 = vmul.f32 %v3837, 0.5
  %v3902 = vmul.f32 %v3838, 0.5
  %v3903 = vmul.f32 %v3839, 0.5
  %v3904 = vmul.f32 %v3840, 0.5
  %v3905 = vmul.f32 %v3841, 0.5
  %v3906 = vmul.f32 %v3842, 0.5
  %v3907 = vmul.f32 %v3843, 0.5
  %v3908 = vmul.f32 %v3844, 0.5
  %v3909 = vmul.f32 %v3845, 0.5
  %v3910 = vmul.f32 %v3846, 0.5
  %v3911 = vmul.f32 %v3847, 0.5
  %v3912 = vmul.f32 %v3848, 0.5
  %v3913 = vmul.f32 %v3849, 0.5
  %v3914 = vmul.f32 %v3850, 0.5
  %v3915 = vmul.f32 %v3851, 0.5
  %v3916 = vmul.f32 %v3852, 0.5
  %v3917 = vmul.f32 %v3853, 0.5
  %v3918 = vmul.f32 %v3854, 0.5
  %v3919 = vmul.f32 %v3855, 0.5
  %v3920 = vmul.f32 %v3856, 0.5
  %v3921 = vmul.f32 %v3857, 0.5
  %v3922 = vadd.f32 %v3858, 0.5
  %v3923 = vadd.f32 %v3859, 0.5
  %v3924 = vadd.f32 %v3860, 0.5
  %v3925 = vadd.f32 %v3861, 0.5
  %v3926 = vadd.f32 %v3862, 0.5
  %v3927 = vadd.f32 %v3863, 0.5
  %v3928 = vadd.f32 %v3864, 0.5
  %v3929 = vadd.f32 %v3865, 0.5
  %v3930 = vadd.f32 %v3866, 0.5
  %v3931 = vadd.f32 %v3867, 0.5
  %v3932 = vadd.f32 %v3868, 0.5
  %v3933 = vadd.f32 %v3869, 0.5
  %v3934 = vadd.f32 %v3870, 0.5
  %v3935 = vadd.f32 %v3871, 0.5
  %v3936 = vadd.f32 %v3872, 0.5
  %v3937 = vadd.f32 %v3873, 0.5
  %v3938 = vadd.f32 %v3874, 0.5
  %v3939 = vadd.f32 %v3875, 0.5
  %v3940 = vadd.f32 %v3876, 0.5
  %v3941 = vadd.f32 %v3877, 0.5
  %v3942 = vadd.f32 %v3878, 0.5
  %v3943 = vadd.f32 %v3879, 0.5
  %v3944 = vadd.f32 %v3880, 0.5
  %v3945 = vadd.f32 %v3881, 0.5
  %v3946 = vadd.f32 %v3882, 0.5
  %v3947 = vadd.f32 %v3883, 0.5
  %v3948 = vadd.f32 %v3884, 0.5
  %v3949 = vadd.f32 %v3885, 0.5
  %v3950 = vadd.f32 %v3886, 0.5
  %v3951 = vadd.f32 %v3887, 0.5
  %v3952 = vadd.f32 %v3888, 0.5
  %v3953 = vadd.f32 %v3889, 0.5
  %v3954 = vadd.f32 %v3890, 0.5
  %v3955 = vadd.f32 %v3891, 0.5
  %v3956 = vadd.f32 %v3892, 0.5
  %v3957 = vadd.f32 %v3893, 0.5
  %v3958 = vadd.f32 %v3894, 0.5
  %v3959 = vadd.f32 %v3895, 0.5
  %v3960 = vadd.f32 %v3896, 0.5
  %v3961 = vadd.f32 %v3897, 0.5
  %v3962 = vadd.f32 %v3898, 0.5
  %v3963 = vadd.f32 %v3899, 0.5
  %v3964 = vadd.f32 %v3900, 0.5
  %v3965 = vadd.f32 %v3901, 0.5
  %v3966 = vadd.f32 %v3902, 0.5
  %v3967 = vadd.f32 %v3903, 0.5
  %v3968 = vadd.f32 %v3904, 0.5
  %v3969 = vadd.f32 %v3905, 0.5
  %v3970 = vadd.f32 %v3906, 0.5
  %v3971 = vadd.f32 %v3907, 0.5
  %v3972 = vadd.f32 %v3908, 0.5
  %v3973 = vadd.f32 %v3909, 0.5
  %v3974 = vadd.f32 %v3910, 0.5
  %v3975 = vadd.f32 %v3911, 0.5
  %v3976 = vadd.f32 %v3912, 0.5
  %v3977 = vadd.f32 %v3913, 0.5
  %v3978 = vadd.f32 %v3914, 0.5
  %v3979 = vadd.f32 %v3915, 0.5
  %v3980 = vadd.f32 %v3916, 0.5
  %v3981 = vadd.f32 %v3917, 0.5
  %v3982 = vadd.f32 %v3918, 0.5
  %v3983 = vadd.f32 %v3919, 0.5
  %v3984 = vadd.f32 %v3920, 0.5
  %v3985 = vadd.f32 %v3921, 0.5
  %v3986 = vmul.f32 %v3571, %v3922
  %v3987 = vmul.f32 %v3573, %v3923
  %v3988 = vmul.f32 %v3576, %v3924
  %v3989 = vmul.f32 %v3578, %v3925
  %v3990 = vmul.f32 %v3581, %v3926
  %v3991 = vmul.f32 %v3583, %v3927
  %v3992 = vmul.f32 %v3586, %v3928
  %v3993 = vmul.f32 %v3588, %v3929
  %v3994 = vmul.f32 %v3591, %v3930
  %v3995 = vmul.f32 %v3593, %v3931
  %v3996 = vmul.f32 %v3596, %v3932
  %v3997 = vmul.f32 %v3598, %v3933
  %v3998 = vmul.f32 %v3601, %v3934
  %v3999 = vmul.f32 %v3603, %v3935
  %v4000 = vmul.f32 %v3606, %v3936
  %v4001 = vmul.f32 %v3608, %v3937
  %v4002 = vmul.f32 %v3611, %v3938
  %v4003 = vmul.f32 %v3613, %v3939
  %v4004 = vmul.f32 %v3616, %v3940
  %v4005 = vmul.f32 %v3618, %v3941
  %v4006 = vmul.f32 %v3621, %v3942
  %v4007 = vmul.f32 %v3623, %v3943
  %v4008 = vmul.f32 %v3626, %v3944
  %v4009 = vmul.f32 %v3628, %v3945
  %v4010 = vmul.f32 %v3631, %v3946
  %v4011 = vmul.f32 %v3633, %v3947
  %v4012 = vmul.f32 %v3636, %v3948
  %v4013 = vmul.f32 %v3638, %v3949
  %v4014 = vmul.f32 %v3641, %v3950
  %v4015 = vmul.f32 %v3643, %v3951
  %v4016 = vmul.f32 %v3646, %v3952
  %v4017 = vmul.f32 %v3648, %v3953
  %v4018 = vmul.f32 %v3651, %v3954
  %v4019 = vmul.f32 %v3653, %v3955
  %v4020 = vmul.f32 %v3656, %v3956
  %v4021 = vmul.f32 %v3658, %v3957
  %v4022 = vmul.f32 %v3661, %v3958
  %v4023 = vmul.f32 %v3663, %v3959
  %v4024 = vmul.f32 %v3666, %v3960
  %v4025 = vmul.f32 %v3668, %v3961
  %v4026 = vmul.f32 %v3671, %v3962
  %v4027 = vmul.f32 %v3673, %v3963
  %v4028 = vmul.f32 %v3676, %v3964
  %v4029 = vmul.f32 %v3678, %v3965
  %v4030 = vmul.f32 %v3681, %v3966
  %v4031 = vmul.f32 %v3683, %v3967
  %v4032 = vmul.f32 %v3686, %v3968
  %v4033 = vmul.f32 %v3688, %v3969
  %v4034 = vmul.f32 %v3691, %v3970
  %v4035 = vmul.f32 %v3693, %v3971
  %v4036 = vmul.f32 %v3696, %v3972
  %v4037 = vmul.f32 %v3698, %v3973
  %v4038 = vmul.f32 %v3701, %v3974
  %v4039 = vmul.f32 %v3703, %v3975
  %v4040 = vmul.f32 %v3706, %v3976
  %v4041 = vmul.f32 %v3708, %v3977
  %v4042 = vmul.f32 %v3711, %v3978
  %v4043 = vmul.f32 %v3713, %v3979
  %v4044 = vmul.f32 %v3716, %v3980
  %v4045 = vmul.f32 %v3718, %v3981
  %v4046 = vmul.f32 %v3721, %v3982
  %v4047 = vmul.f32 %v3723, %v3983
  %v4048 = vmul.f32 %v3726, %v3984
  %v4049 = vmul.f32 %v3728, %v3985
  %v4050 = vld [vmem:[%s13] sm:$0x1]
  %v4052 = vperm.slane %v4050, 0
  %v4054 = vmul.f32 %v3986, %v4052
  %v4055 = vmul.f32 %v3987, %v4052
  %v4056 = vmul.f32 %v3988, %v4052
  %v4057 = vmul.f32 %v3989, %v4052
  %v4058 = vmul.f32 %v3990, %v4052
  %v4059 = vmul.f32 %v3991, %v4052
  %v4060 = vmul.f32 %v3992, %v4052
  %v4061 = vmul.f32 %v3993, %v4052
  %v4062 = vmul.f32 %v3994, %v4052
  %v4063 = vmul.f32 %v3995, %v4052
  %v4064 = vmul.f32 %v3996, %v4052
  %v4065 = vmul.f32 %v3997, %v4052
  %v4066 = vmul.f32 %v3998, %v4052
  %v4067 = vmul.f32 %v3999, %v4052
  %v4068 = vmul.f32 %v4000, %v4052
  %v4069 = vmul.f32 %v4001, %v4052
  %v4070 = vmul.f32 %v4002, %v4052
  %v4071 = vmul.f32 %v4003, %v4052
  %v4072 = vmul.f32 %v4004, %v4052
  %v4073 = vmul.f32 %v4005, %v4052
  %v4074 = vmul.f32 %v4006, %v4052
  %v4075 = vmul.f32 %v4007, %v4052
  %v4076 = vmul.f32 %v4008, %v4052
  %v4077 = vmul.f32 %v4009, %v4052
  %v4078 = vmul.f32 %v4010, %v4052
  %v4079 = vmul.f32 %v4011, %v4052
  %v4080 = vmul.f32 %v4012, %v4052
  %v4081 = vmul.f32 %v4013, %v4052
  %v4082 = vmul.f32 %v4014, %v4052
  %v4083 = vmul.f32 %v4015, %v4052
  %v4084 = vmul.f32 %v4016, %v4052
  %v4085 = vmul.f32 %v4017, %v4052
  %v4086 = vmul.f32 %v4018, %v4052
  %v4087 = vmul.f32 %v4019, %v4052
  %v4088 = vmul.f32 %v4020, %v4052
  %v4089 = vmul.f32 %v4021, %v4052
  %v4090 = vmul.f32 %v4022, %v4052
  %v4091 = vmul.f32 %v4023, %v4052
  %v4092 = vmul.f32 %v4024, %v4052
  %v4093 = vmul.f32 %v4025, %v4052
  %v4094 = vmul.f32 %v4026, %v4052
  %v4095 = vmul.f32 %v4027, %v4052
  %v4096 = vmul.f32 %v4028, %v4052
  %v4097 = vmul.f32 %v4029, %v4052
  %v4098 = vmul.f32 %v4030, %v4052
  %v4099 = vmul.f32 %v4031, %v4052
  %v4100 = vmul.f32 %v4032, %v4052
  %v4101 = vmul.f32 %v4033, %v4052
  %v4102 = vmul.f32 %v4034, %v4052
  %v4103 = vmul.f32 %v4035, %v4052
  %v4104 = vmul.f32 %v4036, %v4052
  %v4105 = vmul.f32 %v4037, %v4052
  %v4106 = vmul.f32 %v4038, %v4052
  %v4107 = vmul.f32 %v4039, %v4052
  %v4108 = vmul.f32 %v4040, %v4052
  %v4109 = vmul.f32 %v4041, %v4052
  %v4110 = vmul.f32 %v4042, %v4052
  %v4111 = vmul.f32 %v4043, %v4052
  %v4112 = vmul.f32 %v4044, %v4052
  %v4113 = vmul.f32 %v4045, %v4052
  %v4114 = vmul.f32 %v4046, %v4052
  %v4115 = vmul.f32 %v4047, %v4052
  %v4116 = vmul.f32 %v4048, %v4052
  %v4117 = vmul.f32 %v4049, %v4052
  %v4118 = vsel %vm974, %v4054, 0.0
  %4119 = vadd.xlane.f32.xlu0 %v4118
  %v4120 = vpop.xlane.xlu0 %4119
  %v4121 = vsel %vm974, %v4055, 0.0
  %4122 = vadd.xlane.f32.xlu0 %v4121
  %v4123 = vpop.xlane.xlu0 %4122
  %v4124 = vsel %vm974, %v4056, 0.0
  %4125 = vadd.xlane.f32.xlu0 %v4124
  %v4126 = vpop.xlane.xlu0 %4125
  %v4127 = vsel %vm974, %v4057, 0.0
  %4128 = vadd.xlane.f32.xlu0 %v4127
  %v4129 = vpop.xlane.xlu0 %4128
  %v4130 = vsel %vm974, %v4058, 0.0
  %4131 = vadd.xlane.f32.xlu0 %v4130
  %v4132 = vpop.xlane.xlu0 %4131
  %v4133 = vsel %vm974, %v4059, 0.0
  %4134 = vadd.xlane.f32.xlu0 %v4133
  %v4135 = vpop.xlane.xlu0 %4134
  %v4136 = vsel %vm974, %v4060, 0.0
  %4137 = vadd.xlane.f32.xlu0 %v4136
  %v4138 = vpop.xlane.xlu0 %4137
  %v4139 = vsel %vm974, %v4061, 0.0
  %4140 = vadd.xlane.f32.xlu0 %v4139
  %v4141 = vpop.xlane.xlu0 %4140
  %v4142 = vsel %vm974, %v4062, 0.0
  %4143 = vadd.xlane.f32.xlu0 %v4142
  %v4144 = vpop.xlane.xlu0 %4143
  %v4145 = vsel %vm974, %v4063, 0.0
  %4146 = vadd.xlane.f32.xlu0 %v4145
  %v4147 = vpop.xlane.xlu0 %4146
  %v4148 = vsel %vm974, %v4064, 0.0
  %4149 = vadd.xlane.f32.xlu0 %v4148
  %v4150 = vpop.xlane.xlu0 %4149
  %v4151 = vsel %vm974, %v4065, 0.0
  %4152 = vadd.xlane.f32.xlu0 %v4151
  %v4153 = vpop.xlane.xlu0 %4152
  %v4154 = vsel %vm974, %v4066, 0.0
  %4155 = vadd.xlane.f32.xlu0 %v4154
  %v4156 = vpop.xlane.xlu0 %4155
  %v4157 = vsel %vm974, %v4067, 0.0
  %4158 = vadd.xlane.f32.xlu0 %v4157
  %v4159 = vpop.xlane.xlu0 %4158
  %v4160 = vsel %vm974, %v4068, 0.0
  %4161 = vadd.xlane.f32.xlu0 %v4160
  %v4162 = vpop.xlane.xlu0 %4161
  %v4163 = vsel %vm974, %v4069, 0.0
  %4164 = vadd.xlane.f32.xlu0 %v4163
  %v4165 = vpop.xlane.xlu0 %4164
  %v4166 = vsel %vm974, %v4070, 0.0
  %4167 = vadd.xlane.f32.xlu0 %v4166
  %v4168 = vpop.xlane.xlu0 %4167
  %v4169 = vsel %vm974, %v4071, 0.0
  %4170 = vadd.xlane.f32.xlu0 %v4169
  %v4171 = vpop.xlane.xlu0 %4170
  %v4172 = vsel %vm974, %v4072, 0.0
  %4173 = vadd.xlane.f32.xlu0 %v4172
  %v4174 = vpop.xlane.xlu0 %4173
  %v4175 = vsel %vm974, %v4073, 0.0
  %4176 = vadd.xlane.f32.xlu0 %v4175
  %v4177 = vpop.xlane.xlu0 %4176
  %v4178 = vsel %vm974, %v4074, 0.0
  %4179 = vadd.xlane.f32.xlu0 %v4178
  %v4180 = vpop.xlane.xlu0 %4179
  %v4181 = vsel %vm974, %v4075, 0.0
  %4182 = vadd.xlane.f32.xlu0 %v4181
  %v4183 = vpop.xlane.xlu0 %4182
  %v4184 = vsel %vm974, %v4076, 0.0
  %4185 = vadd.xlane.f32.xlu0 %v4184
  %v4186 = vpop.xlane.xlu0 %4185
  %v4187 = vsel %vm974, %v4077, 0.0
  %4188 = vadd.xlane.f32.xlu0 %v4187
  %v4189 = vpop.xlane.xlu0 %4188
  %v4190 = vsel %vm974, %v4078, 0.0
  %4191 = vadd.xlane.f32.xlu0 %v4190
  %v4192 = vpop.xlane.xlu0 %4191
  %v4193 = vsel %vm974, %v4079, 0.0
  %4194 = vadd.xlane.f32.xlu0 %v4193
  %v4195 = vpop.xlane.xlu0 %4194
  %v4196 = vsel %vm974, %v4080, 0.0
  %4197 = vadd.xlane.f32.xlu0 %v4196
  %v4198 = vpop.xlane.xlu0 %4197
  %v4199 = vsel %vm974, %v4081, 0.0
  %4200 = vadd.xlane.f32.xlu0 %v4199
  %v4201 = vpop.xlane.xlu0 %4200
  %v4202 = vsel %vm974, %v4082, 0.0
  %4203 = vadd.xlane.f32.xlu0 %v4202
  %v4204 = vpop.xlane.xlu0 %4203
  %v4205 = vsel %vm974, %v4083, 0.0
  %4206 = vadd.xlane.f32.xlu0 %v4205
  %v4207 = vpop.xlane.xlu0 %4206
  %v4208 = vsel %vm974, %v4084, 0.0
  %4209 = vadd.xlane.f32.xlu0 %v4208
  %v4210 = vpop.xlane.xlu0 %4209
  %v4211 = vsel %vm974, %v4085, 0.0
  %4212 = vadd.xlane.f32.xlu0 %v4211
  %v4213 = vpop.xlane.xlu0 %4212
  %v4214 = vsel %vm974, %v4086, 0.0
  %4215 = vadd.xlane.f32.xlu0 %v4214
  %v4216 = vpop.xlane.xlu0 %4215
  %v4217 = vsel %vm974, %v4087, 0.0
  %4218 = vadd.xlane.f32.xlu0 %v4217
  %v4219 = vpop.xlane.xlu0 %4218
  %v4220 = vsel %vm974, %v4088, 0.0
  %4221 = vadd.xlane.f32.xlu0 %v4220
  %v4222 = vpop.xlane.xlu0 %4221
  %v4223 = vsel %vm974, %v4089, 0.0
  %4224 = vadd.xlane.f32.xlu0 %v4223
  %v4225 = vpop.xlane.xlu0 %4224
  %v4226 = vsel %vm974, %v4090, 0.0
  %4227 = vadd.xlane.f32.xlu0 %v4226
  %v4228 = vpop.xlane.xlu0 %4227
  %v4229 = vsel %vm974, %v4091, 0.0
  %4230 = vadd.xlane.f32.xlu0 %v4229
  %v4231 = vpop.xlane.xlu0 %4230
  %v4232 = vsel %vm974, %v4092, 0.0
  %4233 = vadd.xlane.f32.xlu0 %v4232
  %v4234 = vpop.xlane.xlu0 %4233
  %v4235 = vsel %vm974, %v4093, 0.0
  %4236 = vadd.xlane.f32.xlu0 %v4235
  %v4237 = vpop.xlane.xlu0 %4236
  %v4238 = vsel %vm974, %v4094, 0.0
  %4239 = vadd.xlane.f32.xlu0 %v4238
  %v4240 = vpop.xlane.xlu0 %4239
  %v4241 = vsel %vm974, %v4095, 0.0
  %4242 = vadd.xlane.f32.xlu0 %v4241
  %v4243 = vpop.xlane.xlu0 %4242
  %v4244 = vsel %vm974, %v4096, 0.0
  %4245 = vadd.xlane.f32.xlu0 %v4244
  %v4246 = vpop.xlane.xlu0 %4245
  %v4247 = vsel %vm974, %v4097, 0.0
  %4248 = vadd.xlane.f32.xlu0 %v4247
  %v4249 = vpop.xlane.xlu0 %4248
  %v4250 = vsel %vm974, %v4098, 0.0
  %4251 = vadd.xlane.f32.xlu0 %v4250
  %v4252 = vpop.xlane.xlu0 %4251
  %v4253 = vsel %vm974, %v4099, 0.0
  %4254 = vadd.xlane.f32.xlu0 %v4253
  %v4255 = vpop.xlane.xlu0 %4254
  %v4256 = vsel %vm974, %v4100, 0.0
  %4257 = vadd.xlane.f32.xlu0 %v4256
  %v4258 = vpop.xlane.xlu0 %4257
  %v4259 = vsel %vm974, %v4101, 0.0
  %4260 = vadd.xlane.f32.xlu0 %v4259
  %v4261 = vpop.xlane.xlu0 %4260
  %v4262 = vsel %vm974, %v4102, 0.0
  %4263 = vadd.xlane.f32.xlu0 %v4262
  %v4264 = vpop.xlane.xlu0 %4263
  %v4265 = vsel %vm974, %v4103, 0.0
  %4266 = vadd.xlane.f32.xlu0 %v4265
  %v4267 = vpop.xlane.xlu0 %4266
  %v4268 = vsel %vm974, %v4104, 0.0
  %4269 = vadd.xlane.f32.xlu0 %v4268
  %v4270 = vpop.xlane.xlu0 %4269
  %v4271 = vsel %vm974, %v4105, 0.0
  %4272 = vadd.xlane.f32.xlu0 %v4271
  %v4273 = vpop.xlane.xlu0 %4272
  %v4274 = vsel %vm974, %v4106, 0.0
  %4275 = vadd.xlane.f32.xlu0 %v4274
  %v4276 = vpop.xlane.xlu0 %4275
  %v4277 = vsel %vm974, %v4107, 0.0
  %4278 = vadd.xlane.f32.xlu0 %v4277
  %v4279 = vpop.xlane.xlu0 %4278
  %v4280 = vsel %vm974, %v4108, 0.0
  %4281 = vadd.xlane.f32.xlu0 %v4280
  %v4282 = vpop.xlane.xlu0 %4281
  %v4283 = vsel %vm974, %v4109, 0.0
  %4284 = vadd.xlane.f32.xlu0 %v4283
  %v4285 = vpop.xlane.xlu0 %4284
  %v4286 = vsel %vm974, %v4110, 0.0
  %4287 = vadd.xlane.f32.xlu0 %v4286
  %v4288 = vpop.xlane.xlu0 %4287
  %v4289 = vsel %vm974, %v4111, 0.0
  %4290 = vadd.xlane.f32.xlu0 %v4289
  %v4291 = vpop.xlane.xlu0 %4290
  %v4292 = vsel %vm974, %v4112, 0.0
  %4293 = vadd.xlane.f32.xlu0 %v4292
  %v4294 = vpop.xlane.xlu0 %4293
  %v4295 = vsel %vm974, %v4113, 0.0
  %4296 = vadd.xlane.f32.xlu0 %v4295
  %v4297 = vpop.xlane.xlu0 %4296
  %v4298 = vsel %vm974, %v4114, 0.0
  %4299 = vadd.xlane.f32.xlu0 %v4298
  %v4300 = vpop.xlane.xlu0 %4299
  %v4301 = vsel %vm974, %v4115, 0.0
  %4302 = vadd.xlane.f32.xlu0 %v4301
  %v4303 = vpop.xlane.xlu0 %4302
  %v4304 = vsel %vm974, %v4116, 0.0
  %4305 = vadd.xlane.f32.xlu0 %v4304
  %v4306 = vpop.xlane.xlu0 %4305
  %v4307 = vsel %vm974, %v4117, 0.0
  %4308 = vadd.xlane.f32.xlu0 %v4307
  %v4309 = vpop.xlane.xlu0 %4308
  %v4310 = vmul.f32 %v1185, %v4120
  %v4311 = vmul.f32 %v1188, %v4123
  %v4312 = vmul.f32 %v1191, %v4126
  %v4313 = vmul.f32 %v1194, %v4129
  %v4314 = vmul.f32 %v1197, %v4132
  %v4315 = vmul.f32 %v1200, %v4135
  %v4316 = vmul.f32 %v1203, %v4138
  %v4317 = vmul.f32 %v1206, %v4141
  %v4318 = vmul.f32 %v1209, %v4144
  %v4319 = vmul.f32 %v1212, %v4147
  %v4320 = vmul.f32 %v1215, %v4150
  %v4321 = vmul.f32 %v1218, %v4153
  %v4322 = vmul.f32 %v1221, %v4156
  %v4323 = vmul.f32 %v1224, %v4159
  %v4324 = vmul.f32 %v1227, %v4162
  %v4325 = vmul.f32 %v1230, %v4165
  %v4326 = vmul.f32 %v1233, %v4168
  %v4327 = vmul.f32 %v1236, %v4171
  %v4328 = vmul.f32 %v1239, %v4174
  %v4329 = vmul.f32 %v1242, %v4177
  %v4330 = vmul.f32 %v1245, %v4180
  %v4331 = vmul.f32 %v1248, %v4183
  %v4332 = vmul.f32 %v1251, %v4186
  %v4333 = vmul.f32 %v1254, %v4189
  %v4334 = vmul.f32 %v1257, %v4192
  %v4335 = vmul.f32 %v1260, %v4195
  %v4336 = vmul.f32 %v1263, %v4198
  %v4337 = vmul.f32 %v1266, %v4201
  %v4338 = vmul.f32 %v1269, %v4204
  %v4339 = vmul.f32 %v1272, %v4207
  %v4340 = vmul.f32 %v1275, %v4210
  %v4341 = vmul.f32 %v1278, %v4213
  %v4342 = vmul.f32 %v1281, %v4216
  %v4343 = vmul.f32 %v1284, %v4219
  %v4344 = vmul.f32 %v1287, %v4222
  %v4345 = vmul.f32 %v1290, %v4225
  %v4346 = vmul.f32 %v1293, %v4228
  %v4347 = vmul.f32 %v1296, %v4231
  %v4348 = vmul.f32 %v1299, %v4234
  %v4349 = vmul.f32 %v1302, %v4237
  %v4350 = vmul.f32 %v1305, %v4240
  %v4351 = vmul.f32 %v1308, %v4243
  %v4352 = vmul.f32 %v1311, %v4246
  %v4353 = vmul.f32 %v1314, %v4249
  %v4354 = vmul.f32 %v1317, %v4252
  %v4355 = vmul.f32 %v1320, %v4255
  %v4356 = vmul.f32 %v1323, %v4258
  %v4357 = vmul.f32 %v1326, %v4261
  %v4358 = vmul.f32 %v1329, %v4264
  %v4359 = vmul.f32 %v1332, %v4267
  %v4360 = vmul.f32 %v1335, %v4270
  %v4361 = vmul.f32 %v1338, %v4273
  %v4362 = vmul.f32 %v1341, %v4276
  %v4363 = vmul.f32 %v1344, %v4279
  %v4364 = vmul.f32 %v1347, %v4282
  %v4365 = vmul.f32 %v1350, %v4285
  %v4366 = vmul.f32 %v1353, %v4288
  %v4367 = vmul.f32 %v1356, %v4291
  %v4368 = vmul.f32 %v1359, %v4294
  %v4369 = vmul.f32 %v1362, %v4297
  %v4370 = vmul.f32 %v1365, %v4300
  %v4371 = vmul.f32 %v1368, %v4303
  %v4372 = vmul.f32 %v1371, %v4306
  %v4373 = vmul.f32 %v1374, %v4309
  %v4374 = vsel %vm974, %v3349, %v4310
  %v4375 = vsel %vm974, %v3350, %v4311
  %v4376 = vsel %vm974, %v3351, %v4312
  %v4377 = vsel %vm974, %v3352, %v4313
  %v4378 = vsel %vm974, %v3353, %v4314
  %v4379 = vsel %vm974, %v3354, %v4315
  %v4380 = vsel %vm974, %v3355, %v4316
  %v4381 = vsel %vm974, %v3356, %v4317
  %v4382 = vsel %vm974, %v3357, %v4318
  %v4383 = vsel %vm974, %v3358, %v4319
  %v4384 = vsel %vm974, %v3359, %v4320
  %v4385 = vsel %vm974, %v3360, %v4321
  %v4386 = vsel %vm974, %v3361, %v4322
  %v4387 = vsel %vm974, %v3362, %v4323
  %v4388 = vsel %vm974, %v3363, %v4324
  %v4389 = vsel %vm974, %v3364, %v4325
  %v4390 = vsel %vm974, %v3365, %v4326
  %v4391 = vsel %vm974, %v3366, %v4327
  %v4392 = vsel %vm974, %v3367, %v4328
  %v4393 = vsel %vm974, %v3368, %v4329
  %v4394 = vsel %vm974, %v3369, %v4330
  %v4395 = vsel %vm974, %v3370, %v4331
  %v4396 = vsel %vm974, %v3371, %v4332
  %v4397 = vsel %vm974, %v3372, %v4333
  %v4398 = vsel %vm974, %v3373, %v4334
  %v4399 = vsel %vm974, %v3374, %v4335
  %v4400 = vsel %vm974, %v3375, %v4336
  %v4401 = vsel %vm974, %v3376, %v4337
  %v4402 = vsel %vm974, %v3377, %v4338
  %v4403 = vsel %vm974, %v3378, %v4339
  %v4404 = vsel %vm974, %v3379, %v4340
  %v4405 = vsel %vm974, %v3380, %v4341
  %v4406 = vsel %vm974, %v3381, %v4342
  %v4407 = vsel %vm974, %v3382, %v4343
  %v4408 = vsel %vm974, %v3383, %v4344
  %v4409 = vsel %vm974, %v3384, %v4345
  %v4410 = vsel %vm974, %v3385, %v4346
  %v4411 = vsel %vm974, %v3386, %v4347
  %v4412 = vsel %vm974, %v3387, %v4348
  %v4413 = vsel %vm974, %v3388, %v4349
  %v4414 = vsel %vm974, %v3389, %v4350
  %v4415 = vsel %vm974, %v3390, %v4351
  %v4416 = vsel %vm974, %v3391, %v4352
  %v4417 = vsel %vm974, %v3392, %v4353
  %v4418 = vsel %vm974, %v3393, %v4354
  %v4419 = vsel %vm974, %v3394, %v4355
  %v4420 = vsel %vm974, %v3395, %v4356
  %v4421 = vsel %vm974, %v3396, %v4357
  %v4422 = vsel %vm974, %v3397, %v4358
  %v4423 = vsel %vm974, %v3398, %v4359
  %v4424 = vsel %vm974, %v3399, %v4360
  %v4425 = vsel %vm974, %v3400, %v4361
  %v4426 = vsel %vm974, %v3401, %v4362
  %v4427 = vsel %vm974, %v3402, %v4363
  %v4428 = vsel %vm974, %v3403, %v4364
  %v4429 = vsel %vm974, %v3404, %v4365
  %v4430 = vsel %vm974, %v3405, %v4366
  %v4431 = vsel %vm974, %v3406, %v4367
  %v4432 = vsel %vm974, %v3407, %v4368
  %v4433 = vsel %vm974, %v3408, %v4369
  %v4434 = vsel %vm974, %v3409, %v4370
  %v4435 = vsel %vm974, %v3410, %v4371
  %v4436 = vsel %vm974, %v3411, %v4372
  %v4437 = vsel %vm974, %v3412, %v4373
  %vm4438 = vcmask 285696
  %v4439 = vsel %vm4438, %v4374, 1.0
  %v4440 = vsel %vm4438, %v4375, 1.0
  %v4441 = vsel %vm4438, %v4376, 1.0
  %v4442 = vsel %vm4438, %v4377, 1.0
  %v4443 = vsel %vm4438, %v4378, 1.0
  %v4444 = vsel %vm4438, %v4379, 1.0
  %v4445 = vsel %vm4438, %v4380, 1.0
  %v4446 = vsel %vm4438, %v4381, 1.0
  %v4447 = vsel %vm4438, %v4382, 1.0
  %v4448 = vsel %vm4438, %v4383, 1.0
  %v4449 = vsel %vm4438, %v4384, 1.0
  %v4450 = vsel %vm4438, %v4385, 1.0
  %v4451 = vsel %vm4438, %v4386, 1.0
  %v4452 = vsel %vm4438, %v4387, 1.0
  %v4453 = vsel %vm4438, %v4388, 1.0
  %v4454 = vsel %vm4438, %v4389, 1.0
  %v4455 = vsel %vm4438, %v4390, 1.0
  %v4456 = vsel %vm4438, %v4391, 1.0
  %v4457 = vsel %vm4438, %v4392, 1.0
  %v4458 = vsel %vm4438, %v4393, 1.0
  %v4459 = vsel %vm4438, %v4394, 1.0
  %v4460 = vsel %vm4438, %v4395, 1.0
  %v4461 = vsel %vm4438, %v4396, 1.0
  %v4462 = vsel %vm4438, %v4397, 1.0
  %v4463 = vsel %vm4438, %v4398, 1.0
  %v4464 = vsel %vm4438, %v4399, 1.0
  %v4465 = vsel %vm4438, %v4400, 1.0
  %v4466 = vsel %vm4438, %v4401, 1.0
  %v4467 = vsel %vm4438, %v4402, 1.0
  %v4468 = vsel %vm4438, %v4403, 1.0
  %v4469 = vsel %vm4438, %v4404, 1.0
  %v4470 = vsel %vm4438, %v4405, 1.0
  %v4471 = vsel %vm4438, %v4406, 1.0
  %v4472 = vsel %vm4438, %v4407, 1.0
  %v4473 = vsel %vm4438, %v4408, 1.0
  %v4474 = vsel %vm4438, %v4409, 1.0
  %v4475 = vsel %vm4438, %v4410, 1.0
  %v4476 = vsel %vm4438, %v4411, 1.0
  %v4477 = vsel %vm4438, %v4412, 1.0
  %v4478 = vsel %vm4438, %v4413, 1.0
  %v4479 = vsel %vm4438, %v4414, 1.0
  %v4480 = vsel %vm4438, %v4415, 1.0
  %v4481 = vsel %vm4438, %v4416, 1.0
  %v4482 = vsel %vm4438, %v4417, 1.0
  %v4483 = vsel %vm4438, %v4418, 1.0
  %v4484 = vsel %vm4438, %v4419, 1.0
  %v4485 = vsel %vm4438, %v4420, 1.0
  %v4486 = vsel %vm4438, %v4421, 1.0
  %v4487 = vsel %vm4438, %v4422, 1.0
  %v4488 = vsel %vm4438, %v4423, 1.0
  %v4489 = vsel %vm4438, %v4424, 1.0
  %v4490 = vsel %vm4438, %v4425, 1.0
  %v4491 = vsel %vm4438, %v4426, 1.0
  %v4492 = vsel %vm4438, %v4427, 1.0
  %v4493 = vsel %vm4438, %v4428, 1.0
  %v4494 = vsel %vm4438, %v4429, 1.0
  %v4495 = vsel %vm4438, %v4430, 1.0
  %v4496 = vsel %vm4438, %v4431, 1.0
  %v4497 = vsel %vm4438, %v4432, 1.0
  %v4498 = vsel %vm4438, %v4433, 1.0
  %v4499 = vsel %vm4438, %v4434, 1.0
  %v4500 = vsel %vm4438, %v4435, 1.0
  %v4501 = vsel %vm4438, %v4436, 1.0
  %v4502 = vsel %vm4438, %v4437, 1.0
  %vm4503 = vcmask 293888
  %v4504 = vsel %vm4503, %v4439, 0.0
  %v4505 = vsel %vm4503, %v4440, 0.0
  %v4506 = vsel %vm4503, %v4441, 0.0
  %v4507 = vsel %vm4503, %v4442, 0.0
  %v4508 = vsel %vm4503, %v4443, 0.0
  %v4509 = vsel %vm4503, %v4444, 0.0
  %v4510 = vsel %vm4503, %v4445, 0.0
  %v4511 = vsel %vm4503, %v4446, 0.0
  %v4512 = vsel %vm4503, %v4447, 0.0
  %v4513 = vsel %vm4503, %v4448, 0.0
  %v4514 = vsel %vm4503, %v4449, 0.0
  %v4515 = vsel %vm4503, %v4450, 0.0
  %v4516 = vsel %vm4503, %v4451, 0.0
  %v4517 = vsel %vm4503, %v4452, 0.0
  %v4518 = vsel %vm4503, %v4453, 0.0
  %v4519 = vsel %vm4503, %v4454, 0.0
  %v4520 = vsel %vm4503, %v4455, 0.0
  %v4521 = vsel %vm4503, %v4456, 0.0
  %v4522 = vsel %vm4503, %v4457, 0.0
  %v4523 = vsel %vm4503, %v4458, 0.0
  %v4524 = vsel %vm4503, %v4459, 0.0
  %v4525 = vsel %vm4503, %v4460, 0.0
  %v4526 = vsel %vm4503, %v4461, 0.0
  %v4527 = vsel %vm4503, %v4462, 0.0
  %v4528 = vsel %vm4503, %v4463, 0.0
  %v4529 = vsel %vm4503, %v4464, 0.0
  %v4530 = vsel %vm4503, %v4465, 0.0
  %v4531 = vsel %vm4503, %v4466, 0.0
  %v4532 = vsel %vm4503, %v4467, 0.0
  %v4533 = vsel %vm4503, %v4468, 0.0
  %v4534 = vsel %vm4503, %v4469, 0.0
  %v4535 = vsel %vm4503, %v4470, 0.0
  %v4536 = vsel %vm4503, %v4471, 0.0
  %v4537 = vsel %vm4503, %v4472, 0.0
  %v4538 = vsel %vm4503, %v4473, 0.0
  %v4539 = vsel %vm4503, %v4474, 0.0
  %v4540 = vsel %vm4503, %v4475, 0.0
  %v4541 = vsel %vm4503, %v4476, 0.0
  %v4542 = vsel %vm4503, %v4477, 0.0
  %v4543 = vsel %vm4503, %v4478, 0.0
  %v4544 = vsel %vm4503, %v4479, 0.0
  %v4545 = vsel %vm4503, %v4480, 0.0
  %v4546 = vsel %vm4503, %v4481, 0.0
  %v4547 = vsel %vm4503, %v4482, 0.0
  %v4548 = vsel %vm4503, %v4483, 0.0
  %v4549 = vsel %vm4503, %v4484, 0.0
  %v4550 = vsel %vm4503, %v4485, 0.0
  %v4551 = vsel %vm4503, %v4486, 0.0
  %v4552 = vsel %vm4503, %v4487, 0.0
  %v4553 = vsel %vm4503, %v4488, 0.0
  %v4554 = vsel %vm4503, %v4489, 0.0
  %v4555 = vsel %vm4503, %v4490, 0.0
  %v4556 = vsel %vm4503, %v4491, 0.0
  %v4557 = vsel %vm4503, %v4492, 0.0
  %v4558 = vsel %vm4503, %v4493, 0.0
  %v4559 = vsel %vm4503, %v4494, 0.0
  %v4560 = vsel %vm4503, %v4495, 0.0
  %v4561 = vsel %vm4503, %v4496, 0.0
  %v4562 = vsel %vm4503, %v4497, 0.0
  %v4563 = vsel %vm4503, %v4498, 0.0
  %v4564 = vsel %vm4503, %v4499, 0.0
  %v4565 = vsel %vm4503, %v4500, 0.0
  %v4566 = vsel %vm4503, %v4501, 0.0
  %v4567 = vsel %vm4503, %v4502, 0.0
  %v4568 = vlaneseq
  %v4569 = vshrl.u32 %v4568, 7
  %v4570 = vadd.s32 %v4569, 8
  %v4571 = vld [vmem:[%s1] sm:$0xf]
  %v4572 = vperm.slane %v4571, 0
  %v4573 = vperm.slane %v4571, 1
  %v4574 = vperm.slane %v4571, 2
  %v4575 = vperm.slane %v4571, 3
  %vm4576 = vcmp.eq.s32.totalorder %v4569, %v4572
  %vm4577 = vcmp.eq.s32.totalorder %v4569, %v4573
  %vm4578 = vcmp.eq.s32.totalorder %v4569, %v4574
  %vm4579 = vcmp.eq.s32.totalorder %v4569, %v4575
  %vm4580 = vcmp.eq.s32.totalorder %v4570, %v4572
  %vm4581 = vcmp.eq.s32.totalorder %v4570, %v4573
  %vm4582 = vcmp.eq.s32.totalorder %v4570, %v4574
  %vm4583 = vcmp.eq.s32.totalorder %v4570, %v4575
  %v4584 = vsel %vm4576, 1, 0
  %v4585 = vsel %vm4577, 1, 0
  %v4586 = vsel %vm4578, 1, 0
  %v4587 = vsel %vm4579, 1, 0
  %v4588 = vsel %vm4580, 1, 0
  %v4589 = vsel %vm4581, 1, 0
  %v4590 = vsel %vm4582, 1, 0
  %v4591 = vsel %vm4583, 1, 0
  %v4592 = vcvt.s32.f32 %v4584
  %v4593 = vcvt.s32.f32 %v4585
  %v4594 = vcvt.s32.f32 %v4586
  %v4595 = vcvt.s32.f32 %v4587
  %v4596 = vcvt.s32.f32 %v4588
  %v4597 = vcvt.s32.f32 %v4589
  %v4598 = vcvt.s32.f32 %v4590
  %v4599 = vcvt.s32.f32 %v4591
  %v4600 = vld [vmem:[#allocation2] sm:$0xff]
  %v4601 = vld [vmem:[#allocation2 + $0x8] sm:$0xff]
  %4602 = vmatpush.msra.mxu0 %v4519
  %4603 = vmatpush.msra.mxu0 %v4518
  %4604 = vmatpush.msra.mxu0 %v4517
  %4605 = vmatpush.msra.mxu0 %v4516
  %4606 = vmatpush.msra.mxu0 %v4515
  %4607 = vmatpush.msra.mxu0 %v4514
  %4608 = vmatpush.msra.mxu0 %v4513
  %4609 = vmatpush.msra.mxu0 %v4512
  %4610 = vmatpush.msra.mxu0 %v4511
  %4611 = vmatpush.msra.mxu0 %v4510
  %4612 = vmatpush.msra.mxu0 %v4509
  %4613 = vmatpush.msra.mxu0 %v4508
  %4614 = vmatpush.msra.mxu0 %v4507
  %4615 = vmatpush.msra.mxu0 %v4506
  %4616 = vmatpush.msra.mxu0 %v4505
  %4617 = vmatpush.msra.mxu0 %v4504
  %4618 = vmatmul.f32.gmra.mxu0 %v4592
  %v4619 = vpop.f32.mrf.mxu0
  %v4620 = vadd.f32 0.0, %v4619
  %4621 = vmatmul.f32.gmra.mxu0 %v4596
  %v4622 = vpop.f32.mrf.mxu0
  %v4623 = vadd.f32 0.0, %v4622
  %4624 = vdwg.mxu0
  %4625 = vmatpush.msra.mxu0 %v4535
  %4626 = vmatpush.msra.mxu0 %v4534
  %4627 = vmatpush.msra.mxu0 %v4533
  %4628 = vmatpush.msra.mxu0 %v4532
  %4629 = vmatpush.msra.mxu0 %v4531
  %4630 = vmatpush.msra.mxu0 %v4530
  %4631 = vmatpush.msra.mxu0 %v4529
  %4632 = vmatpush.msra.mxu0 %v4528
  %4633 = vmatpush.msra.mxu0 %v4527
  %4634 = vmatpush.msra.mxu0 %v4526
  %4635 = vmatpush.msra.mxu0 %v4525
  %4636 = vmatpush.msra.mxu0 %v4524
  %4637 = vmatpush.msra.mxu0 %v4523
  %4638 = vmatpush.msra.mxu0 %v4522
  %4639 = vmatpush.msra.mxu0 %v4521
  %4640 = vmatpush.msra.mxu0 %v4520
  %4641 = vmatmul.f32.gmra.mxu0 %v4593
  %v4642 = vpop.f32.mrf.mxu0
  %v4643 = vadd.f32 %v4620, %v4642
  %4644 = vmatmul.f32.gmra.mxu0 %v4597
  %v4645 = vpop.f32.mrf.mxu0
  %v4646 = vadd.f32 %v4623, %v4645
  %4647 = vdwg.mxu0
  %4648 = vmatpush.msra.mxu0 %v4551
  %4649 = vmatpush.msra.mxu0 %v4550
  %4650 = vmatpush.msra.mxu0 %v4549
  %4651 = vmatpush.msra.mxu0 %v4548
  %4652 = vmatpush.msra.mxu0 %v4547
  %4653 = vmatpush.msra.mxu0 %v4546
  %4654 = vmatpush.msra.mxu0 %v4545
  %4655 = vmatpush.msra.mxu0 %v4544
  %4656 = vmatpush.msra.mxu0 %v4543
  %4657 = vmatpush.msra.mxu0 %v4542
  %4658 = vmatpush.msra.mxu0 %v4541
  %4659 = vmatpush.msra.mxu0 %v4540
  %4660 = vmatpush.msra.mxu0 %v4539
  %4661 = vmatpush.msra.mxu0 %v4538
  %4662 = vmatpush.msra.mxu0 %v4537
  %4663 = vmatpush.msra.mxu0 %v4536
  %4664 = vmatmul.f32.gmra.mxu0 %v4594
  %v4665 = vpop.f32.mrf.mxu0
  %v4666 = vadd.f32 %v4643, %v4665
  %4667 = vmatmul.f32.gmra.mxu0 %v4598
  %v4668 = vpop.f32.mrf.mxu0
  %v4669 = vadd.f32 %v4646, %v4668
  %4670 = vdwg.mxu0
  %4671 = vmatpush.msra.mxu0 %v4567
  %4672 = vmatpush.msra.mxu0 %v4566
  %4673 = vmatpush.msra.mxu0 %v4565
  %4674 = vmatpush.msra.mxu0 %v4564
  %4675 = vmatpush.msra.mxu0 %v4563
  %4676 = vmatpush.msra.mxu0 %v4562
  %4677 = vmatpush.msra.mxu0 %v4561
  %4678 = vmatpush.msra.mxu0 %v4560
  %4679 = vmatpush.msra.mxu0 %v4559
  %4680 = vmatpush.msra.mxu0 %v4558
  %4681 = vmatpush.msra.mxu0 %v4557
  %4682 = vmatpush.msra.mxu0 %v4556
  %4683 = vmatpush.msra.mxu0 %v4555
  %4684 = vmatpush.msra.mxu0 %v4554
  %4685 = vmatpush.msra.mxu0 %v4553
  %4686 = vmatpush.msra.mxu0 %v4552
  %4687 = vmatmul.f32.gmra.mxu0 %v4595
  %v4688 = vpop.f32.mrf.mxu0
  %v4689 = vadd.f32 %v4666, %v4688
  %4690 = vmatmul.f32.gmra.mxu0 %v4599
  %v4691 = vpop.f32.mrf.mxu0
  %v4692 = vadd.f32 %v4669, %v4691
  %4693 = vdwg.mxu0
  %v4694 = vadd.f32 %v4600, %v4689
  %v4695 = vadd.f32 %v4601, %v4692
  %4696 = vst [vmem:[#allocation2] sm:$0xff] %v4694
  %4697 = vst [vmem:[#allocation2 + $0x8] sm:$0xff] %v4695
  // Predicated region
  $region86: #{egcl_a2a_forward.1} parent=0 // pred_check
    %p4698 = pneg %p66
  $region87: #{egcl_a2a_forward.1} parent=0 // pred_check_branch
    %4700 = sbr.rel (%p4698) target = $region89
  $region88: #{egcl_a2a_forward.1} parent=0 // pred_region
    %v4701 = vld [vmem:[#allocation2] sm:$0xff]
    %v4702 = vld [vmem:[#allocation2 + $0x8] sm:$0xff]
    %v4703 = vld [vmem:[%s4] sm:$0xff]
    %v4704 = vld [vmem:[%s4 + $0x8] sm:$0xff]
    %v4705 = vmax.f32 %v4701, 1.0
    %v4706 = vmax.f32 %v4702, 1.0
    %4708 = vset.pattern.permute.xlu0 35
    %4709 = vperm.xlu0 %4708, %v4705
    %v4710 = vpop.permute.xlu0 %4709
    %4713 = vset.pattern.permute.xlu0 35
    %4714 = vperm.xlu0 %4713, %v4706
    %v4715 = vpop.permute.xlu0 %4714
    %v4717 = vrcp.pop %v4710
    %v4718 = vmul.f32 %v4710, %v4717
    %v4719 = vsub.f32 1.0, %v4718
    %v4720 = vmul.f32 %v4717, %v4719
    %v4721 = vadd.f32 %v4717, %v4720
    %vm4722 = vweird.f32 %v4710
    %vm4723 = vweird.f32 %v4717
    %vm4724 = vmor %vm4722, %vm4723
    %v4725 = vsel %vm4724, %v4717, %v4721
    %v4726 = vand.u32 2147483647, %v4710
    %vm4727 = vcmp.eq.f32.partialorder %v4726, 8.507059e+37
    %v4728 = vand.u32 %v4710, 2147483648
    %v4729 = vor.u32 1.1754944e-38, %v4728
    %v4730 = vsel %vm4727, %v4729, %v4725
    %v4731 = vmul.f32 %v4701, %v4730
    %v4732 = vrcp.pop %v4715
    %v4733 = vmul.f32 %v4715, %v4732
    %v4734 = vsub.f32 1.0, %v4733
    %v4735 = vmul.f32 %v4732, %v4734
    %v4736 = vadd.f32 %v4732, %v4735
    %vm4737 = vweird.f32 %v4715
    %vm4738 = vweird.f32 %v4732
    %vm4739 = vmor %vm4737, %vm4738
    %v4740 = vsel %vm4739, %v4732, %v4736
    %v4741 = vand.u32 2147483647, %v4715
    %vm4742 = vcmp.eq.f32.partialorder %v4741, 8.507059e+37
    %v4743 = vand.u32 %v4715, 2147483648
    %v4744 = vor.u32 1.1754944e-38, %v4743
    %v4745 = vsel %vm4742, %v4744, %v4740
    %v4746 = vmul.f32 %v4702, %v4745
    %4749 = vrot.lane.b32.xlu0 %v4731, 96
    %v4750 = vpop.permute.xlu0 %4749
    %4751 = vrot.lane.b32.xlu0 %v4746, 96
    %v4752 = vpop.permute.xlu0 %4751
    %v4755 = vadd.f32 %v4703, %v4750
    %v4756 = vadd.f32 %v4704, %v4752
    %v4757 = vld [vmem:[%s3] sm:$0xff]
    %v4758 = vld [vmem:[%s3 + $0x8] sm:$0xff]
    %v4759 = vld [vmem:[%s14] sm:$0xff]
    %v4760 = vld [vmem:[%s14 + $0x8] sm:$0xff]
    %v4761 = vld [vmem:[%s14 + $0x10] sm:$0xff]
    %v4762 = vld [vmem:[%s14 + $0x18] sm:$0xff]
    %v4763 = vld [vmem:[%s15] sm:$0xff]
    %v4764 = vld [vmem:[%s15 + $0x8] sm:$0xff]
    %v4765 = vld [vmem:[%s15 + $0x10] sm:$0xff]
    %v4766 = vld [vmem:[%s15 + $0x18] sm:$0xff]
    %v4768 = vsel %vm974, %v4701, 0
    %v4771 = vsel %vm974, %v4702, 0
    %4773 = vmatpush.msra.mxu0 0.0
    %4774 = vmatpush.msra.mxu0 0.0
    %4775 = vmatpush.msra.mxu0 0.0
    %4776 = vmatpush.msra.mxu0 0.0
    %4777 = vmatpush.msra.mxu0 0.0
    %4778 = vmatpush.msra.mxu0 0.0
    %4779 = vmatpush.msra.mxu0 0.0
    %4780 = vmatpush.msra.mxu0 0.0
    %4781 = vmatpush.msra.mxu0 0.0
    %4782 = vmatpush.msra.mxu0 0.0
    %4783 = vmatpush.msra.mxu0 0.0
    %4784 = vmatpush.msra.mxu0 0.0
    %4785 = vmatpush.msra.mxu0 %v4766
    %4786 = vmatpush.msra.mxu0 %v4765
    %4787 = vmatpush.msra.mxu0 %v4764
    %4788 = vmatpush.msra.mxu0 %v4763
    %4789 = vmatmul.f32.gmra.mxu0 %v4768
    %v4790 = vpop.f32.mrf.mxu0
    %v4791 = vadd.f32 0.0, %v4790
    %4792 = vmatmul.f32.gmra.mxu0 %v4771
    %v4793 = vpop.f32.mrf.mxu0
    %v4794 = vadd.f32 0.0, %v4793
    %4795 = vdwg.mxu0
    %v4797 = vsel %vm974, %v4757, 0
    %v4800 = vsel %vm974, %v4758, 0
    %4802 = vmatpush.msra.mxu0 0.0
    %4803 = vmatpush.msra.mxu0 0.0
    %4804 = vmatpush.msra.mxu0 0.0
    %4805 = vmatpush.msra.mxu0 0.0
    %4806 = vmatpush.msra.mxu0 0.0
    %4807 = vmatpush.msra.mxu0 0.0
    %4808 = vmatpush.msra.mxu0 0.0
    %4809 = vmatpush.msra.mxu0 0.0
    %4810 = vmatpush.msra.mxu0 0.0
    %4811 = vmatpush.msra.mxu0 0.0
    %4812 = vmatpush.msra.mxu0 0.0
    %4813 = vmatpush.msra.mxu0 0.0
    %4814 = vmatpush.msra.mxu0 %v4762
    %4815 = vmatpush.msra.mxu0 %v4761
    %4816 = vmatpush.msra.mxu0 %v4760
    %4817 = vmatpush.msra.mxu0 %v4759
    %4818 = vmatmul.f32.gmra.mxu0 %v4797
    %v4819 = vpop.f32.mrf.mxu0
    %v4820 = vadd.f32 %v4791, %v4819
    %4821 = vmatmul.f32.gmra.mxu0 %v4800
    %v4822 = vpop.f32.mrf.mxu0
    %v4823 = vadd.f32 %v4794, %v4822
    %4824 = vdwg.mxu0
    %v4825 = vld [vmem:[%s5] sm:$0xff]
    %v4826 = vld [vmem:[%s5 + $0x8] sm:$0xff]
    %v4827 = vld [vmem:[%s16] sm:$0xff]
    %vm4828 = vcmask 64512
    %v4830 = vsel %vm4828, %v4825, 0
    %v4833 = vsel %vm4828, %v4826, 0
    %4835 = vmatpush.msra.mxu0 0.0
    %4836 = vmatpush.msra.mxu0 0.0
    %4837 = vmatpush.msra.mxu0 0.0
    %4838 = vmatpush.msra.mxu0 0.0
    %4839 = vmatpush.msra.mxu0 0.0
    %4840 = vmatpush.msra.mxu0 0.0
    %4841 = vmatpush.msra.mxu0 0.0
    %4842 = vmatpush.msra.mxu0 0.0
    %4843 = vmatpush.msra.mxu0 0.0
    %4844 = vmatpush.msra.mxu0 0.0
    %4845 = vmatpush.msra.mxu0 0.0
    %4846 = vmatpush.msra.mxu0 0.0
    %4847 = vmatpush.msra.mxu0 0.0
    %4848 = vmatpush.msra.mxu0 0.0
    %4849 = vmatpush.msra.mxu0 0.0
    %4850 = vmatpush.msra.mxu0 %v4827
    %4851 = vmatmul.f32.gmra.mxu0 %v4830
    %v4852 = vpop.f32.mrf.mxu0
    %v4853 = vadd.f32 0.0, %v4852
    %4854 = vmatmul.f32.gmra.mxu0 %v4833
    %v4855 = vpop.f32.mrf.mxu0
    %v4856 = vadd.f32 0.0, %v4855
    %4857 = vdwg.mxu0
    %v4858 = vadd.f32 %v4820, %v4853
    %v4859 = vadd.f32 %v4823, %v4856
    %v4860 = vld [vmem:[%s17] sm:$0x1]
    %v4862 = vperm.slane %v4860, 0
    %v4864 = vadd.f32 %v4858, %v4862
    %v4865 = vadd.f32 %v4859, %v4862
    %v4866 = vmul.f32 %v4864, 0.5
    %v4867 = vmul.f32 %v4865, 0.5
    %v4868 = vtanh.pop %v4866
    %v4869 = vtanh.pop %v4867
    %v4870 = vmul.f32 %v4868, 0.5
    %v4871 = vmul.f32 %v4869, 0.5
    %v4872 = vadd.f32 %v4870, 0.5
    %v4873 = vadd.f32 %v4871, 0.5
    %v4874 = vmul.f32 %v4864, %v4872
    %v4875 = vmul.f32 %v4865, %v4873
    %v4876 = vld [vmem:[%s18] sm:$0xff]
    %v4877 = vld [vmem:[%s18 + $0x8] sm:$0xff]
    %v4878 = vld [vmem:[%s18 + $0x10] sm:$0xff]
    %v4879 = vld [vmem:[%s18 + $0x18] sm:$0xff]
    %v4880 = vld [vmem:[%s19] sm:$0x1]
    %v4882 = vperm.slane %v4880, 0
    %v4885 = vsel %vm974, %v4874, 0
    %v4888 = vsel %vm974, %v4875, 0
    %4890 = vmatpush.msra.mxu0 0.0
    %4891 = vmatpush.msra.mxu0 0.0
    %4892 = vmatpush.msra.mxu0 0.0
    %4893 = vmatpush.msra.mxu0 0.0
    %4894 = vmatpush.msra.mxu0 0.0
    %4895 = vmatpush.msra.mxu0 0.0
    %4896 = vmatpush.msra.mxu0 0.0
    %4897 = vmatpush.msra.mxu0 0.0
    %4898 = vmatpush.msra.mxu0 0.0
    %4899 = vmatpush.msra.mxu0 0.0
    %4900 = vmatpush.msra.mxu0 0.0
    %4901 = vmatpush.msra.mxu0 0.0
    %4902 = vmatpush.msra.mxu0 %v4879
    %4903 = vmatpush.msra.mxu0 %v4878
    %4904 = vmatpush.msra.mxu0 %v4877
    %4905 = vmatpush.msra.mxu0 %v4876
    %4906 = vmatmul.f32.gmra.mxu0 %v4885
    %v4907 = vpop.f32.mrf.mxu0
    %v4908 = vadd.f32 %v4882, %v4907
    %4909 = vmatmul.f32.gmra.mxu0 %v4888
    %v4910 = vpop.f32.mrf.mxu0
    %v4911 = vadd.f32 %v4882, %v4910
    %4912 = vdwg.mxu0
    %v4913 = vadd.f32 %v4757, %v4908
    %v4914 = vadd.f32 %v4758, %v4911
    %4917 = vrot.lane.b32.xlu0 %v4755, 32
    %v4918 = vpop.permute.xlu0 %4917
    %4919 = vrot.lane.b32.xlu0 %v4756, 32
    %v4920 = vpop.permute.xlu0 %4919
    %v4923 = vsel %vm974, %v4913, %v4918
    %v4924 = vsel %vm974, %v4914, %v4920
    %v4925 = vsel %vm4438, %v4923, 0.0
    %v4926 = vsel %vm4438, %v4924, 0.0
    %4927 = vst [vmem:[%s20] sm:$0xff] %v4925
    %4928 = vst [vmem:[%s20 + $0x8] sm:$0xff] %v4926
  $region89: #{egcl_a2a_forward.1} parent=0 // pred_fallthru
    _
  // Predicated region
  $region90: #{egcl_a2a_forward.1} parent=0 // pred_check
    _
  $region91: #{egcl_a2a_forward.1} parent=0 // pred_check_branch
    %4930 = sbr.rel (0) target = $region93
  $region92: #{egcl_a2a_forward.1} parent=0 // pred_region
    _
  $region93: #{egcl_a2a_forward.1} parent=0 // pred_fallthru
    _
  // Predicated region
  $region94: #{egcl_a2a_forward.1} parent=0 // pred_check
    _
  $region95: #{egcl_a2a_forward.1} parent=0 // pred_check_branch
    %4932 = sbr.rel (0) target = $region97
  $region96: #{egcl_a2a_forward.1} parent=0 // pred_region
    _
  $region97: #{egcl_a2a_forward.1} parent=0 // pred_fallthru
    _

</llo_original>
